<compile_context>
chip_gen: v5e
topology: v5e:2x2
jax: 0.10.0
libtpu: 0.0.40
codegen_flags: <defaults>
</compile_context>

<pallas_src>
import jax
import jax.numpy as jnp
from jax import lax
from jax.experimental import pallas as pl
from jax.experimental.pallas import tpu as pltpu

LRELU_SLOPE = 0.2
IN_EPS = 1e-5  # torch.nn.InstanceNorm2d default eps


# ------------------------------------------------------------------ helpers
def _im2col_nhwc(x_nhwc, k, stride, pad):
    """Extract conv patches from an NHWC tensor.

    Returns (N, Ho*Wo, k*k*C) with (kh, kw, C)-minor patch ordering, matching a
    PyTorch OIHW weight reshaped via transpose(2, 3, 1, 0)."""
    N, H, W, C = x_nhwc.shape
    xp = jnp.pad(x_nhwc, ((0, 0), (pad, pad), (pad, pad), (0, 0)))
    Ho = (H + 2 * pad - k) // stride + 1
    Wo = (W + 2 * pad - k) // stride + 1
    cols = []
    for di in range(k):
        for dj in range(k):
            cols.append(
                xp[:, di:di + stride * Ho:stride, dj:dj + stride * Wo:stride, :]
            )  # (N, Ho, Wo, C)
    col = jnp.stack(cols, axis=3)                  # (N, Ho, Wo, k*k, C)
    col = col.reshape(N, Ho * Wo, k * k * C)       # kernel-major, channel-minor
    return col, Ho, Wo


def _prepare_kernel_params(params):
    """Reshape/cast PyTorch-layout params into kernel-ready matrices."""
    blocks = []
    for (w, b, g, beta) in params["blocks"]:
        Cout, Cin, kh, kw = w.shape
        # Pad Cin up to a multiple of 8 so kh*kw*Cin is a multiple of 128 (kh*kw=16)
        # -> lane-dense contraction for the MXU; the forward pads the activation
        # channels identically, so the extra rows multiply zeros (no numerical effect).
        cin_p = ((Cin + 7) // 8) * 8
        if cin_p != Cin:
            w = jnp.pad(w, ((0, 0), (0, cin_p - Cin), (0, 0), (0, 0)))
        # (Cout, Cin_p, kh, kw) -> (kh, kw, Cin_p, Cout) -> (K, Cout); matches im2col order.
        w_mat = jnp.transpose(w, (2, 3, 1, 0)).reshape(kh * kw * cin_p, Cout)
        blocks.append((
            w_mat.astype(jnp.bfloat16),
            cin_p,
            g.reshape(1, Cout).astype(jnp.float32),
            beta.reshape(1, Cout).astype(jnp.float32),
        ))
        # NOTE: conv bias `b` is intentionally dropped here — InstanceNorm's mean
        # subtraction cancels a per-channel bias exactly (zero numerical effect).

    w_out, b_out = params["out"]                   # (1, 256, 4, 4), (1,)
    Cin_head = w_out.shape[1]
    # w_head[hw, c] == w_out[0, c, hw // 4, hw % 4]  (matches block-3 row order)
    w_head = jnp.transpose(w_out[0], (1, 2, 0)).reshape(16, Cin_head).astype(jnp.float32)
    b_head = jnp.full((1, 128), b_out[0], jnp.float32)   # lane-broadcast head bias
    return {"blocks": blocks, "w_head": w_head, "b_head": b_head}


# ------------------------------------------------------- Pallas kernel bodies
def _block_kernel(p_ref, w_ref, g_ref, beta_ref, o_ref):
    # p_ref: (HW, K) bf16   w_ref: (K, Cout) bf16
    # g_ref / beta_ref: (1, Cout) f32      o_ref: (HW, Cout) bf16
    y = jnp.dot(p_ref[...], w_ref[...], preferred_element_type=jnp.float32)
    # InstanceNorm2d: per-(sample, channel) stats over spatial rows (axis 0), in f32.
    mean = jnp.mean(y, axis=0, keepdims=True)
    var = jnp.mean(jnp.square(y - mean), axis=0, keepdims=True)   # biased variance
    yn = (y - mean) * lax.rsqrt(var + IN_EPS)
    yn = yn * g_ref[...] + beta_ref[...]                          # affine
    yn = jnp.where(yn > 0, yn, LRELU_SLOPE * yn)                  # LeakyReLU(0.2)
    o_ref[...] = yn.astype(o_ref.dtype)


def _block3_head_kernel(p_ref, w_ref, g_ref, beta_ref, wh_ref, bh_ref, o_ref):
    # p_ref: (16, 2048) bf16   w_ref: (2048, 256) bf16
    # g_ref / beta_ref: (1, 256) f32
    # wh_ref: (16, 256) f32 (head conv weight)   bh_ref: (1, 128) f32 (head bias)
    # o_ref: (8, 128) f32  (lane-dense tile holding the broadcast scalar result)
    y = jnp.dot(p_ref[...], w_ref[...], preferred_element_type=jnp.float32)
    mean = jnp.mean(y, axis=0, keepdims=True)
    var = jnp.mean(jnp.square(y - mean), axis=0, keepdims=True)
    yn = (y - mean) * lax.rsqrt(var + IN_EPS)
    yn = yn * g_ref[...] + beta_ref[...]
    yn = jnp.where(yn > 0, yn, LRELU_SLOPE * yn)
    # Fused 256->1 head conv: its 4x4 receptive field is the whole block-3 map,
    # so it is just <activation, weight> over all 16*256 values, plus bias.
    contrib = yn * wh_ref[...]                      # (16, 256) f32
    r = jnp.sum(contrib, axis=1, keepdims=True)     # (16, 1)  lane reduce
    r = jnp.sum(r, axis=0, keepdims=True)           # (1, 1)   sublane reduce
    o_ref[...] = jnp.broadcast_to(r, o_ref.shape) + bh_ref[...]


# ------------------------------------------------------------ kernel wrappers
def conv_in_lrelu(patches, w_mat, gamma, beta):
    """Fused Conv(k=4,s=2,p=1) + InstanceNorm(affine) + LeakyReLU, one sample per grid step."""
    N, HW, K = patches.shape
    Cout = w_mat.shape[1]
    return pl.pallas_call(
        _block_kernel,
        out_shape=jax.ShapeDtypeStruct((N, HW, Cout), jnp.bfloat16),
        grid=(N,),
        in_specs=[
            pl.BlockSpec((pl.Squeezed(), HW, K), lambda n: (n, 0, 0)),
            pl.BlockSpec((K, Cout), lambda n: (0, 0)),
            pl.BlockSpec((1, Cout), lambda n: (0, 0)),
            pl.BlockSpec((1, Cout), lambda n: (0, 0)),
        ],
        out_specs=pl.BlockSpec((pl.Squeezed(), HW, Cout), lambda n: (n, 0, 0)),
        compiler_params=pltpu.CompilerParams(dimension_semantics=("parallel",)),
    )(patches, w_mat, gamma, beta)


def conv_block3_head(patches, w_mat, gamma, beta, w_head, b_head):
    """Block 3 (conv+IN+LeakyReLU) with the 256->1 head conv fused into the epilogue."""
    N, HW, K = patches.shape                       # (N, 16, 2048)
    Cout = w_mat.shape[1]                          # 256
    out = pl.pallas_call(
        _block3_head_kernel,
        out_shape=jax.ShapeDtypeStruct((N, 8, 128), jnp.float32),
        grid=(N,),
        in_specs=[
            pl.BlockSpec((pl.Squeezed(), HW, K), lambda n: (n, 0, 0)),
            pl.BlockSpec((K, Cout), lambda n: (0, 0)),
            pl.BlockSpec((1, Cout), lambda n: (0, 0)),
            pl.BlockSpec((1, Cout), lambda n: (0, 0)),
            pl.BlockSpec((HW, Cout), lambda n: (0, 0)),
            pl.BlockSpec((1, 128), lambda n: (0, 0)),
        ],
        out_specs=pl.BlockSpec((pl.Squeezed(), 8, 128), lambda n: (n, 0, 0)),
        compiler_params=pltpu.CompilerParams(dimension_semantics=("parallel",)),
    )(patches, w_mat, gamma, beta, w_head, b_head)
    return out[:, 0, 0]                            # (N,)


# --------------------------------------------------------------- full forward
def discriminator_forward(x, params):
    """x: (N, C, 32, 32) float32 NCHW (PyTorch layout). Returns (N, 1, 1, 1) float32."""
    N = x.shape[0]
    kp = _prepare_kernel_params(params)

    # Single layout change at the boundary; flat NHWC + bf16 from here on.
    h = jnp.transpose(x, (0, 2, 3, 1)).astype(jnp.bfloat16)

    # Blocks 1 & 2: fused conv + InstanceNorm + LeakyReLU kernels.
    for (w_mat, cin_p, gamma, beta) in kp["blocks"][:2]:
        if h.shape[-1] != cin_p:                               # lane-dense contraction
            h = jnp.pad(h, ((0, 0), (0, 0), (0, 0), (0, cin_p - h.shape[-1])))
        patches, Ho, Wo = _im2col_nhwc(h, 4, 2, 1)             # (N, Ho*Wo, 16*cin_p) bf16
        out = conv_in_lrelu(patches, w_mat, gamma, beta)       # (N, Ho*Wo, Cout) bf16
        h = out.reshape(N, Ho, Wo, w_mat.shape[1])             # stays NHWC, no transpose

    # Block 3 + fused 256->1 head.
    w_mat3, _, gamma3, beta3 = kp["blocks"][2]
    patches, Ho, Wo = _im2col_nhwc(h, 4, 2, 1)                 # (N, 16, 2048)
    assert Ho == 4 and Wo == 4, "fused head assumes a 4x4 block-3 output (32x32 input)"
    y = conv_block3_head(patches, w_mat3, gamma3, beta3, kp["w_head"], kp["b_head"])
    return y.reshape(N, 1, 1, 1)


# -------------------------------------------------------- reference (lax.conv)
def reference_forward(x, params):
    h = x
    for (w, b, g, beta) in params["blocks"]:
        h = lax.conv_general_dilated(
            h, w, (2, 2), [(1, 1), (1, 1)],
            dimension_numbers=("NCHW", "OIHW", "NCHW"),
            precision=lax.Precision.HIGHEST,
        ) + b[None, :, None, None]
        mean = h.mean(axis=(2, 3), keepdims=True)
        var = ((h - mean) ** 2).mean(axis=(2, 3), keepdims=True)
        h = (h - mean) * lax.rsqrt(var + IN_EPS)
        h = h * g[None, :, None, None] + beta[None, :, None, None]
        h = jnp.where(h > 0, h, LRELU_SLOPE * h)
    w, b = params["out"]
    h = lax.conv_general_dilated(
        h, w, (1, 1), [(0, 0), (0, 0)],
        dimension_numbers=("NCHW", "OIHW", "NCHW"),
        precision=lax.Precision.HIGHEST,
    ) + b[None, :, None, None]
    return h


# -------------------------------------------------------------- param init
def init_params(key, channels, dim=64):
    keys = jax.random.split(key, 14)
    ki = iter(range(14))

    def conv_w(k, cout, cin, ksz):
        fan_in = cin * ksz * ksz
        return jax.random.normal(k, (cout, cin, ksz, ksz), jnp.float32) / jnp.sqrt(fan_in)

    blocks = []
    cins = [channels, dim, dim * 2]
    couts = [dim, dim * 2, dim * 4]
    for cin, cout in zip(cins, couts):
        w = conv_w(keys[next(ki)], cout, cin, 4)
        b = 0.01 * jax.random.normal(keys[next(ki)], (cout,), jnp.float32)
        g = 1.0 + 0.1 * jax.random.normal(keys[next(ki)], (cout,), jnp.float32)
        beta = 0.1 * jax.random.normal(keys[next(ki)], (cout,), jnp.float32)
        blocks.append((w, b, g, beta))

    w_out = conv_w(keys[next(ki)], 1, dim * 4, 4)
    b_out = 0.01 * jax.random.normal(keys[next(ki)], (1,), jnp.float32)
    return {"blocks": blocks, "out": (w_out, b_out)}


if __name__ == "__main__":
    key = jax.random.PRNGKey(0)
    k_params, k_x = jax.random.split(key)

    N, C, H, W = 2, 3, 32, 32          # 32x32 -> 16 -> 8 -> 4 -> fused head -> 1x1
    x = jax.random.normal(k_x, (N, C, H, W), jnp.float32)
    params = init_params(k_params, channels=C, dim=64)

    fwd = jax.jit(discriminator_forward)
    out = jax.block_until_ready(fwd(x, params))
    ref = jax.block_until_ready(reference_forward(x, params))

    assert out.shape == (N, 1, 1, 1), out.shape
    assert bool(jnp.all(jnp.isfinite(out)))
    # bf16 MXU inputs vs f32 HIGHEST-precision reference.
    assert jnp.allclose(out, ref, atol=5e-2, rtol=5e-2), (out, ref)

    print("KERNEL_OK")
</pallas_src>

<mosaic_0001>
module attributes {stable_mosaic.version = 11 : i64} {
  func.func @_block_kernel(%arg0: i32, %arg1: memref<1x256x128xbf16, #tpu.memory_space<vmem>>, %arg2: memref<128x64xbf16, #tpu.memory_space<vmem>>, %arg3: memref<1x64xf32, #tpu.memory_space<vmem>>, %arg4: memref<1x64xf32, #tpu.memory_space<vmem>>, %arg5: memref<1x256x64xbf16, #tpu.memory_space<vmem>>) attributes {dimension_semantics = [#tpu.dimension_semantics<parallel>], iteration_bounds = array<i64: 2>, scalar_prefetch = 0 : i64, scratch_operands = 0 : i64, tpu.core_type = #tpu.core_type<tc>, window_params = [{transform_indices = @transform_0, window_bounds = array<i64: 1, 256, 128>}, {pipeline_mode = #tpu.pipeline_mode<synchronous>, transform_indices = @transform_1, window_bounds = array<i64: 128, 64>}, {pipeline_mode = #tpu.pipeline_mode<synchronous>, transform_indices = @transform_2, window_bounds = array<i64: 1, 64>}, {pipeline_mode = #tpu.pipeline_mode<synchronous>, transform_indices = @transform_3, window_bounds = array<i64: 1, 64>}, {transform_indices = @transform_4, window_bounds = array<i64: 1, 256, 64>}]} {
    %c0 = arith.constant 0 : index
    %c0_0 = arith.constant 0 : index
    %c0_1 = arith.constant 0 : index
    %0 = vector.load %arg1[%c0, %c0_0, %c0_1] : memref<1x256x128xbf16, #tpu.memory_space<vmem>>, vector<1x256x128xbf16>
    %1 = vector.shape_cast %0 : vector<1x256x128xbf16> to vector<256x128xbf16>
    %c0_2 = arith.constant 0 : index
    %c0_3 = arith.constant 0 : index
    %2 = vector.load %arg2[%c0_2, %c0_3] : memref<128x64xbf16, #tpu.memory_space<vmem>>, vector<128x64xbf16>
    %cst = arith.constant dense<0.000000e+00> : vector<256x64xf32>
    %3 = tpu.matmul %1, %2, %cst {dimension_numbers = #tpu.dot_dimension_numbers<[1], [0], [0], [1], [0, 0, 1, 1], [], []>} : vector<256x128xbf16>, vector<128x64xbf16>, vector<256x64xf32> -> vector<256x64xf32>
    %cst_4 = arith.constant dense<0.000000e+00> : vector<64xf32>
    %4 = vector.multi_reduction <add>, %3, %cst_4 [0] : vector<256x64xf32> to vector<64xf32>
    %5 = vector.shape_cast %4 : vector<64xf32> to vector<1x64xf32>
    %cst_5 = arith.constant 2.560000e+02 : f32
    %6 = vector.broadcast %cst_5 : f32 to vector<1x64xf32>
    %7 = arith.divf %5, %6 : vector<1x64xf32>
    %8 = vector.broadcast %7 : vector<1x64xf32> to vector<256x64xf32>
    %9 = arith.subf %3, %8 : vector<256x64xf32>
    %10 = arith.mulf %9, %9 : vector<256x64xf32>
    %cst_6 = arith.constant dense<0.000000e+00> : vector<64xf32>
    %11 = vector.multi_reduction <add>, %10, %cst_6 [0] : vector<256x64xf32> to vector<64xf32>
    %12 = vector.shape_cast %11 : vector<64xf32> to vector<1x64xf32>
    %cst_7 = arith.constant 2.560000e+02 : f32
    %13 = vector.broadcast %cst_7 : f32 to vector<1x64xf32>
    %14 = arith.divf %12, %13 : vector<1x64xf32>
    %15 = vector.broadcast %7 : vector<1x64xf32> to vector<256x64xf32>
    %16 = arith.subf %3, %15 : vector<256x64xf32>
    %cst_8 = arith.constant 9.99999974E-6 : f32
    %17 = vector.broadcast %cst_8 : f32 to vector<1x64xf32>
    %18 = arith.addf %14, %17 : vector<1x64xf32>
    %19 = math.rsqrt %18 : vector<1x64xf32>
    %20 = vector.broadcast %19 : vector<1x64xf32> to vector<256x64xf32>
    %21 = arith.mulf %16, %20 : vector<256x64xf32>
    %c0_9 = arith.constant 0 : index
    %c0_10 = arith.constant 0 : index
    %22 = vector.load %arg3[%c0_9, %c0_10] : memref<1x64xf32, #tpu.memory_space<vmem>>, vector<1x64xf32>
    %23 = vector.broadcast %22 : vector<1x64xf32> to vector<256x64xf32>
    %24 = arith.mulf %21, %23 : vector<256x64xf32>
    %c0_11 = arith.constant 0 : index
    %c0_12 = arith.constant 0 : index
    %25 = vector.load %arg4[%c0_11, %c0_12] : memref<1x64xf32, #tpu.memory_space<vmem>>, vector<1x64xf32>
    %26 = vector.broadcast %25 : vector<1x64xf32> to vector<256x64xf32>
    %27 = arith.addf %24, %26 : vector<256x64xf32>
    %cst_13 = arith.constant 0.000000e+00 : f32
    %28 = vector.broadcast %cst_13 : f32 to vector<256x64xf32>
    %29 = arith.cmpf ogt, %27, %28 : vector<256x64xf32>
    %cst_14 = arith.constant 2.000000e-01 : f32
    %30 = vector.broadcast %cst_14 : f32 to vector<256x64xf32>
    %31 = arith.mulf %30, %27 : vector<256x64xf32>
    %32 = arith.select %29, %27, %31 : vector<256x64xi1>, vector<256x64xf32>
    %33 = arith.truncf %32 : vector<256x64xf32> to vector<256x64xbf16>
    %c0_15 = arith.constant 0 : index
    %c0_16 = arith.constant 0 : index
    %c0_17 = arith.constant 0 : index
    %34 = vector.load %arg5[%c0_15, %c0_16, %c0_17] : memref<1x256x64xbf16, #tpu.memory_space<vmem>>, vector<1x256x64xbf16>
    %35 = vector.shape_cast %34 : vector<1x256x64xbf16> to vector<256x64xbf16>
    %36 = vector.shape_cast %33 : vector<256x64xbf16> to vector<1x256x64xbf16>
    tpu.vector_store %arg5[%c0_15, %c0_16, %c0_17], %36 {strides = array<i32>} : memref<1x256x64xbf16, #tpu.memory_space<vmem>>, vector<1x256x64xbf16>,
    return
  }
  func.func @transform_0(%arg0: i32) -> (i32, i32, i32) {
    %c0_i32 = arith.constant 0 : i32
    %c0_i32_0 = arith.constant 0 : i32
    %c0_i32_1 = arith.constant 0 : i32
    return %arg0, %c0_i32, %c0_i32_0 : i32, i32, i32
  }
  func.func @transform_1(%arg0: i32) -> (i32, i32) {
    %c0_i32 = arith.constant 0 : i32
    %c0_i32_0 = arith.constant 0 : i32
    %c0_i32_1 = arith.constant 0 : i32
    return %c0_i32, %c0_i32_0 : i32, i32
  }
  func.func @transform_2(%arg0: i32) -> (i32, i32) {
    %c0_i32 = arith.constant 0 : i32
    %c0_i32_0 = arith.constant 0 : i32
    %c0_i32_1 = arith.constant 0 : i32
    return %c0_i32, %c0_i32_0 : i32, i32
  }
  func.func @transform_3(%arg0: i32) -> (i32, i32) {
    %c0_i32 = arith.constant 0 : i32
    %c0_i32_0 = arith.constant 0 : i32
    %c0_i32_1 = arith.constant 0 : i32
    return %c0_i32, %c0_i32_0 : i32, i32
  }
  func.func @transform_4(%arg0: i32) -> (i32, i32, i32) {
    %c0_i32 = arith.constant 0 : i32
    %c0_i32_0 = arith.constant 0 : i32
    %c0_i32_1 = arith.constant 0 : i32
    return %arg0, %c0_i32, %c0_i32_0 : i32, i32, i32
  }
}

module attributes {stable_mosaic.version = 11 : i64} {
  func.func @_block_kernel(%arg0: i32, %arg1: memref<1x64x1024xbf16, #tpu.memory_space<vmem>>, %arg2: memref<1024x128xbf16, #tpu.memory_space<vmem>>, %arg3: memref<1x128xf32, #tpu.memory_space<vmem>>, %arg4: memref<1x128xf32, #tpu.memory_space<vmem>>, %arg5: memref<1x64x128xbf16, #tpu.memory_space<vmem>>) attributes {dimension_semantics = [#tpu.dimension_semantics<parallel>], iteration_bounds = array<i64: 2>, scalar_prefetch = 0 : i64, scratch_operands = 0 : i64, tpu.core_type = #tpu.core_type<tc>, window_params = [{transform_indices = @transform_0, window_bounds = array<i64: 1, 64, 1024>}, {pipeline_mode = #tpu.pipeline_mode<synchronous>, transform_indices = @transform_1, window_bounds = array<i64: 1024, 128>}, {pipeline_mode = #tpu.pipeline_mode<synchronous>, transform_indices = @transform_2, window_bounds = array<i64: 1, 128>}, {pipeline_mode = #tpu.pipeline_mode<synchronous>, transform_indices = @transform_3, window_bounds = array<i64: 1, 128>}, {transform_indices = @transform_4, window_bounds = array<i64: 1, 64, 128>}]} {
    %c0 = arith.constant 0 : index
    %c0_0 = arith.constant 0 : index
    %c0_1 = arith.constant 0 : index
    %0 = vector.load %arg1[%c0, %c0_0, %c0_1] : memref<1x64x1024xbf16, #tpu.memory_space<vmem>>, vector<1x64x1024xbf16>
    %1 = vector.shape_cast %0 : vector<1x64x1024xbf16> to vector<64x1024xbf16>
    %c0_2 = arith.constant 0 : index
    %c0_3 = arith.constant 0 : index
    %2 = vector.load %arg2[%c0_2, %c0_3] : memref<1024x128xbf16, #tpu.memory_space<vmem>>, vector<1024x128xbf16>
    %cst = arith.constant dense<0.000000e+00> : vector<64x128xf32>
    %3 = tpu.matmul %1, %2, %cst {dimension_numbers = #tpu.dot_dimension_numbers<[1], [0], [0], [1], [0, 0, 1, 1], [], []>} : vector<64x1024xbf16>, vector<1024x128xbf16>, vector<64x128xf32> -> vector<64x128xf32>
    %cst_4 = arith.constant dense<0.000000e+00> : vector<128xf32>
    %4 = vector.multi_reduction <add>, %3, %cst_4 [0] : vector<64x128xf32> to vector<128xf32>
    %5 = vector.shape_cast %4 : vector<128xf32> to vector<1x128xf32>
    %cst_5 = arith.constant 6.400000e+01 : f32
    %6 = vector.broadcast %cst_5 : f32 to vector<1x128xf32>
    %7 = arith.divf %5, %6 : vector<1x128xf32>
    %8 = vector.broadcast %7 : vector<1x128xf32> to vector<64x128xf32>
    %9 = arith.subf %3, %8 : vector<64x128xf32>
    %10 = arith.mulf %9, %9 : vector<64x128xf32>
    %cst_6 = arith.constant dense<0.000000e+00> : vector<128xf32>
    %11 = vector.multi_reduction <add>, %10, %cst_6 [0] : vector<64x128xf32> to vector<128xf32>
    %12 = vector.shape_cast %11 : vector<128xf32> to vector<1x128xf32>
    %cst_7 = arith.constant 6.400000e+01 : f32
    %13 = vector.broadcast %cst_7 : f32 to vector<1x128xf32>
    %14 = arith.divf %12, %13 : vector<1x128xf32>
    %15 = vector.broadcast %7 : vector<1x128xf32> to vector<64x128xf32>
    %16 = arith.subf %3, %15 : vector<64x128xf32>
    %cst_8 = arith.constant 9.99999974E-6 : f32
    %17 = vector.broadcast %cst_8 : f32 to vector<1x128xf32>
    %18 = arith.addf %14, %17 : vector<1x128xf32>
    %19 = math.rsqrt %18 : vector<1x128xf32>
    %20 = vector.broadcast %19 : vector<1x128xf32> to vector<64x128xf32>
    %21 = arith.mulf %16, %20 : vector<64x128xf32>
    %c0_9 = arith.constant 0 : index
    %c0_10 = arith.constant 0 : index
    %22 = vector.load %arg3[%c0_9, %c0_10] : memref<1x128xf32, #tpu.memory_space<vmem>>, vector<1x128xf32>
    %23 = vector.broadcast %22 : vector<1x128xf32> to vector<64x128xf32>
    %24 = arith.mulf %21, %23 : vector<64x128xf32>
    %c0_11 = arith.constant 0 : index
    %c0_12 = arith.constant 0 : index
    %25 = vector.load %arg4[%c0_11, %c0_12] : memref<1x128xf32, #tpu.memory_space<vmem>>, vector<1x128xf32>
    %26 = vector.broadcast %25 : vector<1x128xf32> to vector<64x128xf32>
    %27 = arith.addf %24, %26 : vector<64x128xf32>
    %cst_13 = arith.constant 0.000000e+00 : f32
    %28 = vector.broadcast %cst_13 : f32 to vector<64x128xf32>
    %29 = arith.cmpf ogt, %27, %28 : vector<64x128xf32>
    %cst_14 = arith.constant 2.000000e-01 : f32
    %30 = vector.broadcast %cst_14 : f32 to vector<64x128xf32>
    %31 = arith.mulf %30, %27 : vector<64x128xf32>
    %32 = arith.select %29, %27, %31 : vector<64x128xi1>, vector<64x128xf32>
    %33 = arith.truncf %32 : vector<64x128xf32> to vector<64x128xbf16>
    %c0_15 = arith.constant 0 : index
    %c0_16 = arith.constant 0 : index
    %c0_17 = arith.constant 0 : index
    %34 = vector.load %arg5[%c0_15, %c0_16, %c0_17] : memref<1x64x128xbf16, #tpu.memory_space<vmem>>, vector<1x64x128xbf16>
    %35 = vector.shape_cast %34 : vector<1x64x128xbf16> to vector<64x128xbf16>
    %36 = vector.shape_cast %33 : vector<64x128xbf16> to vector<1x64x128xbf16>
    tpu.vector_store %arg5[%c0_15, %c0_16, %c0_17], %36 {strides = array<i32>} : memref<1x64x128xbf16, #tpu.memory_space<vmem>>, vector<1x64x128xbf16>,
    return
  }
  func.func @transform_0(%arg0: i32) -> (i32, i32, i32) {
    %c0_i32 = arith.constant 0 : i32
    %c0_i32_0 = arith.constant 0 : i32
    %c0_i32_1 = arith.constant 0 : i32
    return %arg0, %c0_i32, %c0_i32_0 : i32, i32, i32
  }
  func.func @transform_1(%arg0: i32) -> (i32, i32) {
    %c0_i32 = arith.constant 0 : i32
    %c0_i32_0 = arith.constant 0 : i32
    %c0_i32_1 = arith.constant 0 : i32
    return %c0_i32, %c0_i32_0 : i32, i32
  }
  func.func @transform_2(%arg0: i32) -> (i32, i32) {
    %c0_i32 = arith.constant 0 : i32
    %c0_i32_0 = arith.constant 0 : i32
    %c0_i32_1 = arith.constant 0 : i32
    return %c0_i32, %c0_i32_0 : i32, i32
  }
  func.func @transform_3(%arg0: i32) -> (i32, i32) {
    %c0_i32 = arith.constant 0 : i32
    %c0_i32_0 = arith.constant 0 : i32
    %c0_i32_1 = arith.constant 0 : i32
    return %c0_i32, %c0_i32_0 : i32, i32
  }
  func.func @transform_4(%arg0: i32) -> (i32, i32, i32) {
    %c0_i32 = arith.constant 0 : i32
    %c0_i32_0 = arith.constant 0 : i32
    %c0_i32_1 = arith.constant 0 : i32
    return %arg0, %c0_i32, %c0_i32_0 : i32, i32, i32
  }
}

module attributes {stable_mosaic.version = 11 : i64} {
  func.func @_block3_head_kernel(%arg0: i32, %arg1: memref<1x16x2048xbf16, #tpu.memory_space<vmem>>, %arg2: memref<2048x256xbf16, #tpu.memory_space<vmem>>, %arg3: memref<1x256xf32, #tpu.memory_space<vmem>>, %arg4: memref<1x256xf32, #tpu.memory_space<vmem>>, %arg5: memref<16x256xf32, #tpu.memory_space<vmem>>, %arg6: memref<1x128xf32, #tpu.memory_space<vmem>>, %arg7: memref<1x8x128xf32, #tpu.memory_space<vmem>>) attributes {dimension_semantics = [#tpu.dimension_semantics<parallel>], iteration_bounds = array<i64: 2>, scalar_prefetch = 0 : i64, scratch_operands = 0 : i64, tpu.core_type = #tpu.core_type<tc>, window_params = [{transform_indices = @transform_0, window_bounds = array<i64: 1, 16, 2048>}, {pipeline_mode = #tpu.pipeline_mode<synchronous>, transform_indices = @transform_1, window_bounds = array<i64: 2048, 256>}, {pipeline_mode = #tpu.pipeline_mode<synchronous>, transform_indices = @transform_2, window_bounds = array<i64: 1, 256>}, {pipeline_mode = #tpu.pipeline_mode<synchronous>, transform_indices = @transform_3, window_bounds = array<i64: 1, 256>}, {pipeline_mode = #tpu.pipeline_mode<synchronous>, transform_indices = @transform_4, window_bounds = array<i64: 16, 256>}, {pipeline_mode = #tpu.pipeline_mode<synchronous>, transform_indices = @transform_5, window_bounds = array<i64: 1, 128>}, {transform_indices = @transform_6, window_bounds = array<i64: 1, 8, 128>}]} {
    %c0 = arith.constant 0 : index
    %c0_0 = arith.constant 0 : index
    %c0_1 = arith.constant 0 : index
    %0 = vector.load %arg1[%c0, %c0_0, %c0_1] : memref<1x16x2048xbf16, #tpu.memory_space<vmem>>, vector<1x16x2048xbf16>
    %1 = vector.shape_cast %0 : vector<1x16x2048xbf16> to vector<16x2048xbf16>
    %c0_2 = arith.constant 0 : index
    %c0_3 = arith.constant 0 : index
    %2 = vector.load %arg2[%c0_2, %c0_3] : memref<2048x256xbf16, #tpu.memory_space<vmem>>, vector<2048x256xbf16>
    %cst = arith.constant dense<0.000000e+00> : vector<16x256xf32>
    %3 = tpu.matmul %1, %2, %cst {dimension_numbers = #tpu.dot_dimension_numbers<[1], [0], [0], [1], [0, 0, 1, 1], [], []>} : vector<16x2048xbf16>, vector<2048x256xbf16>, vector<16x256xf32> -> vector<16x256xf32>
    %cst_4 = arith.constant dense<0.000000e+00> : vector<256xf32>
    %4 = vector.multi_reduction <add>, %3, %cst_4 [0] : vector<16x256xf32> to vector<256xf32>
    %5 = vector.shape_cast %4 : vector<256xf32> to vector<1x256xf32>
    %cst_5 = arith.constant 1.600000e+01 : f32
    %6 = vector.broadcast %cst_5 : f32 to vector<1x256xf32>
    %7 = arith.divf %5, %6 : vector<1x256xf32>
    %8 = vector.broadcast %7 : vector<1x256xf32> to vector<16x256xf32>
    %9 = arith.subf %3, %8 : vector<16x256xf32>
    %10 = arith.mulf %9, %9 : vector<16x256xf32>
    %cst_6 = arith.constant dense<0.000000e+00> : vector<256xf32>
    %11 = vector.multi_reduction <add>, %10, %cst_6 [0] : vector<16x256xf32> to vector<256xf32>
    %12 = vector.shape_cast %11 : vector<256xf32> to vector<1x256xf32>
    %cst_7 = arith.constant 1.600000e+01 : f32
    %13 = vector.broadcast %cst_7 : f32 to vector<1x256xf32>
    %14 = arith.divf %12, %13 : vector<1x256xf32>
    %15 = vector.broadcast %7 : vector<1x256xf32> to vector<16x256xf32>
    %16 = arith.subf %3, %15 : vector<16x256xf32>
    %cst_8 = arith.constant 9.99999974E-6 : f32
    %17 = vector.broadcast %cst_8 : f32 to vector<1x256xf32>
    %18 = arith.addf %14, %17 : vector<1x256xf32>
    %19 = math.rsqrt %18 : vector<1x256xf32>
    %20 = vector.broadcast %19 : vector<1x256xf32> to vector<16x256xf32>
    %21 = arith.mulf %16, %20 : vector<16x256xf32>
    %c0_9 = arith.constant 0 : index
    %c0_10 = arith.constant 0 : index
    %22 = vector.load %arg3[%c0_9, %c0_10] : memref<1x256xf32, #tpu.memory_space<vmem>>, vector<1x256xf32>
    %23 = vector.broadcast %22 : vector<1x256xf32> to vector<16x256xf32>
    %24 = arith.mulf %21, %23 : vector<16x256xf32>
    %c0_11 = arith.constant 0 : index
    %c0_12 = arith.constant 0 : index
    %25 = vector.load %arg4[%c0_11, %c0_12] : memref<1x256xf32, #tpu.memory_space<vmem>>, vector<1x256xf32>
    %26 = vector.broadcast %25 : vector<1x256xf32> to vector<16x256xf32>
    %27 = arith.addf %24, %26 : vector<16x256xf32>
    %cst_13 = arith.constant 0.000000e+00 : f32
    %28 = vector.broadcast %cst_13 : f32 to vector<16x256xf32>
    %29 = arith.cmpf ogt, %27, %28 : vector<16x256xf32>
    %cst_14 = arith.constant 2.000000e-01 : f32
    %30 = vector.broadcast %cst_14 : f32 to vector<16x256xf32>
    %31 = arith.mulf %30, %27 : vector<16x256xf32>
    %32 = arith.select %29, %27, %31 : vector<16x256xi1>, vector<16x256xf32>
    %c0_15 = arith.constant 0 : index
    %c0_16 = arith.constant 0 : index
    %33 = vector.load %arg5[%c0_15, %c0_16] : memref<16x256xf32, #tpu.memory_space<vmem>>, vector<16x256xf32>
    %34 = arith.mulf %32, %33 : vector<16x256xf32>
    %cst_17 = arith.constant dense<0.000000e+00> : vector<16xf32>
    %35 = vector.multi_reduction <add>, %34, %cst_17 [1] : vector<16x256xf32> to vector<16xf32>
    %36 = vector.shape_cast %35 : vector<16xf32> to vector<16x1xf32>
    %cst_18 = arith.constant dense<0.000000e+00> : vector<1xf32>
    %37 = vector.multi_reduction <add>, %36, %cst_18 [0] : vector<16x1xf32> to vector<1xf32>
    %38 = vector.shape_cast %37 : vector<1xf32> to vector<1x1xf32>
    %39 = vector.shape_cast %38 : vector<1x1xf32> to vector<1x1xf32>
    %40 = vector.broadcast %39 : vector<1x1xf32> to vector<8x128xf32>
    %c0_19 = arith.constant 0 : index
    %c0_20 = arith.constant 0 : index
    %41 = vector.load %arg6[%c0_19, %c0_20] : memref<1x128xf32, #tpu.memory_space<vmem>>, vector<1x128xf32>
    %42 = vector.broadcast %41 : vector<1x128xf32> to vector<8x128xf32>
    %43 = arith.addf %40, %42 : vector<8x128xf32>
    %c0_21 = arith.constant 0 : index
    %c0_22 = arith.constant 0 : index
    %c0_23 = arith.constant 0 : index
    %44 = vector.load %arg7[%c0_21, %c0_22, %c0_23] : memref<1x8x128xf32, #tpu.memory_space<vmem>>, vector<1x8x128xf32>
    %45 = vector.shape_cast %44 : vector<1x8x128xf32> to vector<8x128xf32>
    %46 = vector.shape_cast %43 : vector<8x128xf32> to vector<1x8x128xf32>
    tpu.vector_store %arg7[%c0_21, %c0_22, %c0_23], %46 {strides = array<i32>} : memref<1x8x128xf32, #tpu.memory_space<vmem>>, vector<1x8x128xf32>,
    return
  }
  func.func @transform_0(%arg0: i32) -> (i32, i32, i32) {
    %c0_i32 = arith.constant 0 : i32
    %c0_i32_0 = arith.constant 0 : i32
    %c0_i32_1 = arith.constant 0 : i32
    return %arg0, %c0_i32, %c0_i32_0 : i32, i32, i32
  }
  func.func @transform_1(%arg0: i32) -> (i32, i32) {
    %c0_i32 = arith.constant 0 : i32
    %c0_i32_0 = arith.constant 0 : i32
    %c0_i32_1 = arith.constant 0 : i32
    return %c0_i32, %c0_i32_0 : i32, i32
  }
  func.func @transform_2(%arg0: i32) -> (i32, i32) {
    %c0_i32 = arith.constant 0 : i32
    %c0_i32_0 = arith.constant 0 : i32
    %c0_i32_1 = arith.constant 0 : i32
    return %c0_i32, %c0_i32_0 : i32, i32
  }
  func.func @transform_3(%arg0: i32) -> (i32, i32) {
    %c0_i32 = arith.constant 0 : i32
    %c0_i32_0 = arith.constant 0 : i32
    %c0_i32_1 = arith.constant 0 : i32
    return %c0_i32, %c0_i32_0 : i32, i32
  }
  func.func @transform_4(%arg0: i32) -> (i32, i32) {
    %c0_i32 = arith.constant 0 : i32
    %c0_i32_0 = arith.constant 0 : i32
    %c0_i32_1 = arith.constant 0 : i32
    return %c0_i32, %c0_i32_0 : i32, i32
  }
  func.func @transform_5(%arg0: i32) -> (i32, i32) {
    %c0_i32 = arith.constant 0 : i32
    %c0_i32_0 = arith.constant 0 : i32
    %c0_i32_1 = arith.constant 0 : i32
    return %c0_i32, %c0_i32_0 : i32, i32
  }
  func.func @transform_6(%arg0: i32) -> (i32, i32, i32) {
    %c0_i32 = arith.constant 0 : i32
    %c0_i32_0 = arith.constant 0 : i32
    %c0_i32_1 = arith.constant 0 : i32
    return %arg0, %c0_i32, %c0_i32_0 : i32, i32, i32
  }
}

</mosaic_0001>

<llo_original>
// kernel: discriminator_forward.3
$region0: #{discriminator_forward.3}
  #allocation0 [shape = 'u32[]', space=smem, size = 0x4, offset = 0x4, fixed_abs, tag = 'smem constant byte address 0x4 - core index']
  #allocation1 [shape = 'u32[72,128]{1,0:T(1,128)}', space=vmem, size = 0x9000, scoped, tag = 'internal scratch']
  %s0 = inlined_call_operand.vmem [shape: bf16[2,256,128], index: 0, kind: input, shape index: {}]
  %s1 = inlined_call_operand.vmem [shape: bf16[128,64], index: 1, kind: input, shape index: {}]
  %s2 = inlined_call_operand.vmem [shape: f32[1,64], index: 2, kind: input, shape index: {}]
  %s3 = inlined_call_operand.vmem [shape: f32[1,64], index: 3, kind: input, shape index: {}]
  %s4 = inlined_call_operand.vmem [shape: bf16[2,256,64], index: 4, kind: output, shape index: {}]
  %s5 = sld [smem:[#allocation0]]
  $region49: #{discriminator_forward.3} parent=0
    _
  %s7 = ssub.s32 1, %s5
  %s8 = scalar_select 0, %s7, %s5
  loop: start=0, step=1, limit=4
  $region2: #{discriminator_forward.3} parent=0 // loop_pre_header
    _
  $region3: #{discriminator_forward.3} parent=0 // loop_header
    %s10 = sphi 0, %s14
    %p11 = scmp.ge.s32.totalorder %s10, 4
    %s20 = sphi 0, %s22
    %s23 = sphi 0, %s20
    %s24 = sphi 0, %s23
    %s40 = sphi 0, %s24
    %s44 = sphi 0, %s44
    %s46 = sphi 0, %s44
    %s47 = sphi 0, %s46
    %s61 = sphi 0, %s47
    %s65 = sphi 0, %s65
    %s67 = sphi 0, %s65
    %s68 = sphi 0, %s67
    %s82 = sphi 0, %s68
    %s86 = sphi 0, %s86
    %s88 = sphi 0, %s86
    %s89 = sphi 0, %s88
    %s103 = sphi 0, %s89
    %s109 = sphi 0, %s111
    %s112 = sphi 0, %s109
    %s113 = sphi 0, %s112
    %s129 = sphi 0, %s113
  $region4: #{discriminator_forward.3} parent=0 // loop_header_branch
    %13 = sbr.rel (%p11) target = $region8
  $region5: #{discriminator_forward.3} parent=0 // loop_body
    %s15 = ssub.s32 %s10, 1
    %s16 = ssub.s32 %s10, 2
    %s17 = sadd.s32 %s10, 1
    %s18 = ssub.s32 %s10, %s17
    %p19 = scmp.eq.s32.totalorder %s18, 0
    %s21 = sadd.s32 %s20, 1
    %s22 = scalar_select %p19, %s20, %s21
    %p25 = pneg %p19
    %p26 = scmp.eq.s32.totalorder %s10, 1
    %p27 = por %p25, %p26
    %p28 = scmp.ne.s32.totalorder %s20, %s23
    %p29 = scmp.eq.s32.totalorder %s10, 0
    %p30 = por %p28, %p29
    %p31 = scmp.ne.s32.totalorder %s20, %s23
    %p32 = scmp.eq.s32.totalorder %s15, 1
    %p33 = por %p31, %p32
    %p34 = scmp.ne.s32.totalorder %s23, %s24
    %p35 = scmp.eq.s32.totalorder %s15, 0
    %p36 = por %p34, %p35
    %p37 = scmp.ne.s32.totalorder %s23, %s24
    %p38 = scmp.eq.s32.totalorder %s16, 1
    %p39 = por %p37, %p38
    %p41 = scmp.ne.s32.totalorder %s24, %s40
    %p42 = scmp.eq.s32.totalorder %s16, 0
    %p43 = por %p41, %p42
    %s45 = sadd.s32 %s44, 1
    %p48 = scmp.eq.s32.totalorder %s10, 1
    %p49 = scmp.ne.s32.totalorder %s44, %s46
    %p50 = scmp.eq.s32.totalorder %s10, 0
    %p51 = por %p49, %p50
    %p52 = scmp.ne.s32.totalorder %s44, %s46
    %p53 = scmp.eq.s32.totalorder %s15, 1
    %p54 = por %p52, %p53
    %p55 = scmp.ne.s32.totalorder %s46, %s47
    %p56 = scmp.eq.s32.totalorder %s15, 0
    %p57 = por %p55, %p56
    %p58 = scmp.ne.s32.totalorder %s46, %s47
    %p59 = scmp.eq.s32.totalorder %s16, 1
    %p60 = por %p58, %p59
    %p62 = scmp.ne.s32.totalorder %s47, %s61
    %p63 = scmp.eq.s32.totalorder %s16, 0
    %p64 = por %p62, %p63
    %s66 = sadd.s32 %s65, 1
    %p69 = scmp.eq.s32.totalorder %s10, 1
    %p70 = scmp.ne.s32.totalorder %s65, %s67
    %p71 = scmp.eq.s32.totalorder %s10, 0
    %p72 = por %p70, %p71
    %p73 = scmp.ne.s32.totalorder %s65, %s67
    %p74 = scmp.eq.s32.totalorder %s15, 1
    %p75 = por %p73, %p74
    %p76 = scmp.ne.s32.totalorder %s67, %s68
    %p77 = scmp.eq.s32.totalorder %s15, 0
    %p78 = por %p76, %p77
    %p79 = scmp.ne.s32.totalorder %s67, %s68
    %p80 = scmp.eq.s32.totalorder %s16, 1
    %p81 = por %p79, %p80
    %p83 = scmp.ne.s32.totalorder %s68, %s82
    %p84 = scmp.eq.s32.totalorder %s16, 0
    %p85 = por %p83, %p84
    %s87 = sadd.s32 %s86, 1
    %p90 = scmp.eq.s32.totalorder %s10, 1
    %p91 = scmp.ne.s32.totalorder %s86, %s88
    %p92 = scmp.eq.s32.totalorder %s10, 0
    %p93 = por %p91, %p92
    %p94 = scmp.ne.s32.totalorder %s86, %s88
    %p95 = scmp.eq.s32.totalorder %s15, 1
    %p96 = por %p94, %p95
    %p97 = scmp.ne.s32.totalorder %s88, %s89
    %p98 = scmp.eq.s32.totalorder %s15, 0
    %p99 = por %p97, %p98
    %p100 = scmp.ne.s32.totalorder %s88, %s89
    %p101 = scmp.eq.s32.totalorder %s16, 1
    %p102 = por %p100, %p101
    %p104 = scmp.ne.s32.totalorder %s89, %s103
    %p105 = scmp.eq.s32.totalorder %s16, 0
    %p106 = por %p104, %p105
    %s107 = ssub.s32 %s10, %s17
    %p108 = scmp.eq.s32.totalorder %s107, 0
    %s110 = sadd.s32 %s109, 1
    %s111 = scalar_select %p108, %s109, %s110
    %p114 = pneg %p108
    %p115 = scmp.eq.s32.totalorder %s10, 1
    %p116 = por %p114, %p115
    %p117 = scmp.ne.s32.totalorder %s109, %s112
    %p118 = scmp.eq.s32.totalorder %s10, 0
    %p119 = por %p117, %p118
    %p120 = scmp.ne.s32.totalorder %s109, %s112
    %p121 = scmp.eq.s32.totalorder %s15, 1
    %p122 = por %p120, %p121
    %p123 = scmp.ne.s32.totalorder %s112, %s113
    %p124 = scmp.eq.s32.totalorder %s15, 0
    %p125 = por %p123, %p124
    %p126 = scmp.ne.s32.totalorder %s112, %s113
    %p127 = scmp.eq.s32.totalorder %s16, 1
    %p128 = por %p126, %p127
    %p130 = scmp.ne.s32.totalorder %s113, %s129
    %p131 = scmp.eq.s32.totalorder %s16, 0
    %p132 = por %p130, %p131
    %p133 = scmp.le.s32.totalorder 1, %s10
    %p134 = scmp.lt.s32.totalorder %s10, 3
    %p135 = pnand %p133, %p134
    %p136 = pneg %p135
    // Predicated region
    $region9: #{discriminator_forward.3} parent=5 // pred_check
      _
    $region10: #{discriminator_forward.3} parent=5 // pred_check_branch
      %138 = sbr.rel (%p135) target = $region12
    $region11: #{discriminator_forward.3} parent=5 // pred_region
      %s139 = ssub.s32 %s10, 1
      // Predicated region
      $region13: #{discriminator_forward.3} parent=11 // pred_check
        %p140 = pneg %p57
      $region14: #{discriminator_forward.3} parent=11 // pred_check_branch
        %142 = sbr.rel (%p140) target = $region16
      $region15: #{discriminator_forward.3} parent=11 // pred_region
        _
      $region16: #{discriminator_forward.3} parent=11 // pred_fallthru
        _
      // Predicated region
      $region17: #{discriminator_forward.3} parent=11 // pred_check
        %p143 = pneg %p78
      $region18: #{discriminator_forward.3} parent=11 // pred_check_branch
        %145 = sbr.rel (%p143) target = $region20
      $region19: #{discriminator_forward.3} parent=11 // pred_region
        _
      $region20: #{discriminator_forward.3} parent=11 // pred_fallthru
        _
      // Predicated region
      $region21: #{discriminator_forward.3} parent=11 // pred_check
        %p146 = pneg %p99
      $region22: #{discriminator_forward.3} parent=11 // pred_check_branch
        %148 = sbr.rel (%p146) target = $region24
      $region23: #{discriminator_forward.3} parent=11 // pred_region
        _
      $region24: #{discriminator_forward.3} parent=11 // pred_fallthru
        _
    $region12: #{discriminator_forward.3} parent=5 // pred_fallthru
      _
    %p149 = scmp.lt.s32.totalorder %s10, 2
    // Predicated region
    $region25: #{discriminator_forward.3} parent=5 // pred_check
      %p150 = pneg %p149
    $region26: #{discriminator_forward.3} parent=5 // pred_check_branch
      %152 = sbr.rel (%p150) target = $region28
    $region27: #{discriminator_forward.3} parent=5 // pred_region
      // Predicated region
      $region29: #{discriminator_forward.3} parent=27 // pred_check
        %p153 = pneg %p30
      $region30: #{discriminator_forward.3} parent=27 // pred_check_branch
        %155 = sbr.rel (%p153) target = $region32
      $region31: #{discriminator_forward.3} parent=27 // pred_region
        %p156 = scmp.lt.s32.totalorder %s10, 1
        %s157 = scalar_select %p156, %s10, 1
        %s158 = smul.addr %s157, 32
        %s159 = smul.addr %s158, 4
        %s160 = scalar_lea.vmem %s0, %s159
      $region32: #{discriminator_forward.3} parent=27 // pred_fallthru
        _
    $region28: #{discriminator_forward.3} parent=5 // pred_fallthru
      _
    %p161 = scmp.le.s32.totalorder 1, %s10
    %p162 = scmp.lt.s32.totalorder %s10, 3
    %p163 = pnand %p161, %p162
    %p164 = pneg %p163
    // Predicated region
    $region33: #{discriminator_forward.3} parent=5 // pred_check
      _
    $region34: #{discriminator_forward.3} parent=5 // pred_check_branch
      %166 = sbr.rel (%p163) target = $region36
    $region35: #{discriminator_forward.3} parent=5 // pred_region
      %s167 = ssub.s32 %s10, 1
      %p168 = scmp.lt.s32.totalorder %s15, 1
      %s169 = scalar_select %p168, %s15, 1
      %s170 = smul.addr %s169, 32
      %s171 = smul.addr %s170, 4
      %s172 = scalar_lea.vmem %s0, %s171
      %p173 = pneg %p36
      %p174 = pneg %p33
      %p175 = pneg %p57
      %p176 = pneg %p54
      %p177 = pneg %p78
      %p178 = pneg %p75
      %p179 = pneg %p99
      %p180 = pneg %p96
      %p181 = pneg %p125
      %p182 = pneg %p122
      %p183 = scmp.lt.s32.totalorder %s15, 1
      %s184 = scalar_select %p183, %s15, 1
      %s185 = smul.addr %s184, 32
      %s186 = smul.addr %s185, 4
      %s187 = scalar_lea.vmem %s4, %s186
      %p188 = scmp.lt.s32.totalorder %s15, 1
      %s189 = scalar_select %p188, %s15, 1
      %s190 = smul.addr %s189, 32
      %s191 = smul.addr %s190, 4
      %s192 = scalar_lea.vmem %s0, %s191
      %p193 = scmp.lt.s32.totalorder %s15, 1
      %s194 = scalar_select %p193, %s15, 1
      %s195 = smul.addr %s194, 32
      %s196 = smul.addr %s195, 4
      %s197 = scalar_lea.vmem %s4, %s196
      %v198 = vld [vmem:[%s192] sm:$0xf]
      %v199 = vld [vmem:[%s192 + $0x4] sm:$0xf]
      %v200 = vld [vmem:[%s192 + $0x8] sm:$0xf]
      %v201 = vld [vmem:[%s192 + $0xc] sm:$0xf]
      %v202 = vld [vmem:[%s192 + $0x10] sm:$0xf]
      %v203 = vld [vmem:[%s192 + $0x14] sm:$0xf]
      %v204 = vld [vmem:[%s192 + $0x18] sm:$0xf]
      %v205 = vld [vmem:[%s192 + $0x1c] sm:$0xf]
      %v206 = vld [vmem:[%s192 + $0x20] sm:$0xf]
      %v207 = vld [vmem:[%s192 + $0x24] sm:$0xf]
      %v208 = vld [vmem:[%s192 + $0x28] sm:$0xf]
      %v209 = vld [vmem:[%s192 + $0x2c] sm:$0xf]
      %v210 = vld [vmem:[%s192 + $0x30] sm:$0xf]
      %v211 = vld [vmem:[%s192 + $0x34] sm:$0xf]
      %v212 = vld [vmem:[%s192 + $0x38] sm:$0xf]
      %v213 = vld [vmem:[%s192 + $0x3c] sm:$0xf]
      %v214 = vld [vmem:[%s192 + $0x40] sm:$0xf]
      %v215 = vld [vmem:[%s192 + $0x44] sm:$0xf]
      %v216 = vld [vmem:[%s192 + $0x48] sm:$0xf]
      %v217 = vld [vmem:[%s192 + $0x4c] sm:$0xf]
      %v218 = vld [vmem:[%s192 + $0x50] sm:$0xf]
      %v219 = vld [vmem:[%s192 + $0x54] sm:$0xf]
      %v220 = vld [vmem:[%s192 + $0x58] sm:$0xf]
      %v221 = vld [vmem:[%s192 + $0x5c] sm:$0xf]
      %v222 = vld [vmem:[%s192 + $0x60] sm:$0xf]
      %v223 = vld [vmem:[%s192 + $0x64] sm:$0xf]
      %v224 = vld [vmem:[%s192 + $0x68] sm:$0xf]
      %v225 = vld [vmem:[%s192 + $0x6c] sm:$0xf]
      %v226 = vld [vmem:[%s192 + $0x70] sm:$0xf]
      %v227 = vld [vmem:[%s192 + $0x74] sm:$0xf]
      %v228 = vld [vmem:[%s192 + $0x78] sm:$0xf]
      %v229 = vld [vmem:[%s192 + $0x7c] sm:$0xf]
      %v230 = vld [vmem:[%s1] sm:$0xf]
      %v231 = vld [vmem:[%s1 + $0x4] sm:$0xf]
      %v232 = vld [vmem:[%s1 + $0x8] sm:$0xf]
      %v233 = vld [vmem:[%s1 + $0xc] sm:$0xf]
      %v234 = vld [vmem:[%s1 + $0x10] sm:$0xf]
      %v235 = vld [vmem:[%s1 + $0x14] sm:$0xf]
      %v236 = vld [vmem:[%s1 + $0x18] sm:$0xf]
      %v237 = vld [vmem:[%s1 + $0x1c] sm:$0xf]
      %v238 = vld [vmem:[%s1 + $0x20] sm:$0xf]
      %v239 = vld [vmem:[%s1 + $0x24] sm:$0xf]
      %v240 = vld [vmem:[%s1 + $0x28] sm:$0xf]
      %v241 = vld [vmem:[%s1 + $0x2c] sm:$0xf]
      %v242 = vld [vmem:[%s1 + $0x30] sm:$0xf]
      %v243 = vld [vmem:[%s1 + $0x34] sm:$0xf]
      %v244 = vld [vmem:[%s1 + $0x38] sm:$0xf]
      %v245 = vld [vmem:[%s1 + $0x3c] sm:$0xf]
      %v278 = vunpack.c.l.b16 %v198
      %v279 = vunpack.c.l.b16 %v199
      %v280 = vunpack.c.l.b16 %v200
      %v281 = vunpack.c.l.b16 %v201
      %v282 = vunpack.c.l.b16 %v202
      %v283 = vunpack.c.l.b16 %v203
      %v284 = vunpack.c.l.b16 %v204
      %v285 = vunpack.c.l.b16 %v205
      %v286 = vunpack.c.l.b16 %v206
      %v287 = vunpack.c.l.b16 %v207
      %v288 = vunpack.c.l.b16 %v208
      %v289 = vunpack.c.l.b16 %v209
      %v290 = vunpack.c.l.b16 %v210
      %v291 = vunpack.c.l.b16 %v211
      %v292 = vunpack.c.l.b16 %v212
      %v293 = vunpack.c.l.b16 %v213
      %v294 = vunpack.c.l.b16 %v214
      %v295 = vunpack.c.l.b16 %v215
      %v296 = vunpack.c.l.b16 %v216
      %v297 = vunpack.c.l.b16 %v217
      %v298 = vunpack.c.l.b16 %v218
      %v299 = vunpack.c.l.b16 %v219
      %v300 = vunpack.c.l.b16 %v220
      %v301 = vunpack.c.l.b16 %v221
      %v302 = vunpack.c.l.b16 %v222
      %v303 = vunpack.c.l.b16 %v223
      %v304 = vunpack.c.l.b16 %v224
      %v305 = vunpack.c.l.b16 %v225
      %v306 = vunpack.c.l.b16 %v226
      %v307 = vunpack.c.l.b16 %v227
      %v308 = vunpack.c.l.b16 %v228
      %v309 = vunpack.c.l.b16 %v229
      %v310 = vpack.c.b16 %v279, %v278
      %v311 = vpack.c.b16 %v281, %v280
      %v312 = vpack.c.b16 %v283, %v282
      %v313 = vpack.c.b16 %v285, %v284
      %v314 = vpack.c.b16 %v287, %v286
      %v315 = vpack.c.b16 %v289, %v288
      %v316 = vpack.c.b16 %v291, %v290
      %v317 = vpack.c.b16 %v293, %v292
      %v318 = vpack.c.b16 %v295, %v294
      %v319 = vpack.c.b16 %v297, %v296
      %v320 = vpack.c.b16 %v299, %v298
      %v321 = vpack.c.b16 %v301, %v300
      %v322 = vpack.c.b16 %v303, %v302
      %v323 = vpack.c.b16 %v305, %v304
      %v324 = vpack.c.b16 %v307, %v306
      %v325 = vpack.c.b16 %v309, %v308
      %v358 = vunpack.c.l.b16 %v230
      %v359 = vunpack.c.l.b16 %v231
      %v360 = vunpack.c.l.b16 %v232
      %v361 = vunpack.c.l.b16 %v233
      %v362 = vunpack.c.l.b16 %v234
      %v363 = vunpack.c.l.b16 %v235
      %v364 = vunpack.c.l.b16 %v236
      %v365 = vunpack.c.l.b16 %v237
      %v366 = vunpack.c.l.b16 %v238
      %v367 = vunpack.c.l.b16 %v239
      %v368 = vunpack.c.l.b16 %v240
      %v369 = vunpack.c.l.b16 %v241
      %v370 = vunpack.c.l.b16 %v242
      %v371 = vunpack.c.l.b16 %v243
      %v372 = vunpack.c.l.b16 %v244
      %v373 = vunpack.c.l.b16 %v245
      %v374 = vpack.c.b16 %v359, %v358
      %v375 = vpack.c.b16 %v361, %v360
      %v376 = vpack.c.b16 %v363, %v362
      %v377 = vpack.c.b16 %v365, %v364
      %v378 = vpack.c.b16 %v367, %v366
      %v379 = vpack.c.b16 %v369, %v368
      %v380 = vpack.c.b16 %v371, %v370
      %v381 = vpack.c.b16 %v373, %v372
      %390 = vmatpush.bf16.msra.mxu0 %v381
      %391 = vmatpush.bf16.msra.mxu0 %v380
      %392 = vmatpush.bf16.msra.mxu0 %v379
      %393 = vmatpush.bf16.msra.mxu0 %v378
      %394 = vmatpush.bf16.msra.mxu0 %v377
      %395 = vmatpush.bf16.msra.mxu0 %v376
      %396 = vmatpush.bf16.msra.mxu0 %v375
      %397 = vmatpush.bf16.msra.mxu0 %v374
      %398 = vmatmul.bf16.gmra.mxu0 %v310
      %v399 = vpop.f32.mrf.mxu0
      %v400 = vadd.f32 0.0, %v399
      %v401 = vpop.f32.mrf.mxu0
      %v402 = vadd.f32 0.0, %v401
      %403 = vmatmul.bf16.gmra.mxu0 %v311
      %v404 = vpop.f32.mrf.mxu0
      %v405 = vadd.f32 0.0, %v404
      %v406 = vpop.f32.mrf.mxu0
      %v407 = vadd.f32 0.0, %v406
      %408 = vmatmul.bf16.gmra.mxu0 %v312
      %v409 = vpop.f32.mrf.mxu0
      %v410 = vadd.f32 0.0, %v409
      %v411 = vpop.f32.mrf.mxu0
      %v412 = vadd.f32 0.0, %v411
      %413 = vmatmul.bf16.gmra.mxu0 %v313
      %v414 = vpop.f32.mrf.mxu0
      %v415 = vadd.f32 0.0, %v414
      %v416 = vpop.f32.mrf.mxu0
      %v417 = vadd.f32 0.0, %v416
      %418 = vmatmul.bf16.gmra.mxu0 %v314
      %v419 = vpop.f32.mrf.mxu0
      %v420 = vadd.f32 0.0, %v419
      %v421 = vpop.f32.mrf.mxu0
      %v422 = vadd.f32 0.0, %v421
      %423 = vmatmul.bf16.gmra.mxu0 %v315
      %v424 = vpop.f32.mrf.mxu0
      %v425 = vadd.f32 0.0, %v424
      %v426 = vpop.f32.mrf.mxu0
      %v427 = vadd.f32 0.0, %v426
      %428 = vmatmul.bf16.gmra.mxu0 %v316
      %v429 = vpop.f32.mrf.mxu0
      %v430 = vadd.f32 0.0, %v429
      %v431 = vpop.f32.mrf.mxu0
      %v432 = vadd.f32 0.0, %v431
      %433 = vmatmul.bf16.gmra.mxu0 %v317
      %v434 = vpop.f32.mrf.mxu0
      %v435 = vadd.f32 0.0, %v434
      %v436 = vpop.f32.mrf.mxu0
      %v437 = vadd.f32 0.0, %v436
      %438 = vmatmul.bf16.gmra.mxu0 %v318
      %v439 = vpop.f32.mrf.mxu0
      %v440 = vadd.f32 0.0, %v439
      %v441 = vpop.f32.mrf.mxu0
      %v442 = vadd.f32 0.0, %v441
      %443 = vmatmul.bf16.gmra.mxu0 %v319
      %v444 = vpop.f32.mrf.mxu0
      %v445 = vadd.f32 0.0, %v444
      %v446 = vpop.f32.mrf.mxu0
      %v447 = vadd.f32 0.0, %v446
      %448 = vmatmul.bf16.gmra.mxu0 %v320
      %v449 = vpop.f32.mrf.mxu0
      %v450 = vadd.f32 0.0, %v449
      %v451 = vpop.f32.mrf.mxu0
      %v452 = vadd.f32 0.0, %v451
      %453 = vmatmul.bf16.gmra.mxu0 %v321
      %v454 = vpop.f32.mrf.mxu0
      %v455 = vadd.f32 0.0, %v454
      %v456 = vpop.f32.mrf.mxu0
      %v457 = vadd.f32 0.0, %v456
      %458 = vmatmul.bf16.gmra.mxu0 %v322
      %v459 = vpop.f32.mrf.mxu0
      %v460 = vadd.f32 0.0, %v459
      %v461 = vpop.f32.mrf.mxu0
      %v462 = vadd.f32 0.0, %v461
      %463 = vmatmul.bf16.gmra.mxu0 %v323
      %v464 = vpop.f32.mrf.mxu0
      %v465 = vadd.f32 0.0, %v464
      %v466 = vpop.f32.mrf.mxu0
      %v467 = vadd.f32 0.0, %v466
      %468 = vmatmul.bf16.gmra.mxu0 %v324
      %v469 = vpop.f32.mrf.mxu0
      %v470 = vadd.f32 0.0, %v469
      %v471 = vpop.f32.mrf.mxu0
      %v472 = vadd.f32 0.0, %v471
      %473 = vmatmul.bf16.gmra.mxu0 %v325
      %v474 = vpop.f32.mrf.mxu0
      %v475 = vadd.f32 0.0, %v474
      %v476 = vpop.f32.mrf.mxu0
      %v477 = vadd.f32 0.0, %v476
      %478 = vdwg.mxu0
      %vm479 = vcmask 523264
      %v480 = vsel %vm479, %v400, 0.0
      %v481 = vsel %vm479, %v402, 0.0
      %v482 = vadd.f32 %v480, %v481
      %v483 = vsel %vm479, %v405, 0.0
      %v484 = vadd.f32 %v482, %v483
      %v485 = vsel %vm479, %v407, 0.0
      %v486 = vadd.f32 %v484, %v485
      %v487 = vsel %vm479, %v410, 0.0
      %v488 = vadd.f32 %v486, %v487
      %v489 = vsel %vm479, %v412, 0.0
      %v490 = vadd.f32 %v488, %v489
      %v491 = vsel %vm479, %v415, 0.0
      %v492 = vadd.f32 %v490, %v491
      %v493 = vsel %vm479, %v417, 0.0
      %v494 = vadd.f32 %v492, %v493
      %v495 = vsel %vm479, %v420, 0.0
      %v496 = vadd.f32 %v494, %v495
      %v497 = vsel %vm479, %v422, 0.0
      %v498 = vadd.f32 %v496, %v497
      %v499 = vsel %vm479, %v425, 0.0
      %v500 = vadd.f32 %v498, %v499
      %v501 = vsel %vm479, %v427, 0.0
      %v502 = vadd.f32 %v500, %v501
      %v503 = vsel %vm479, %v430, 0.0
      %v504 = vadd.f32 %v502, %v503
      %v505 = vsel %vm479, %v432, 0.0
      %v506 = vadd.f32 %v504, %v505
      %v507 = vsel %vm479, %v435, 0.0
      %v508 = vadd.f32 %v506, %v507
      %v509 = vsel %vm479, %v437, 0.0
      %v510 = vadd.f32 %v508, %v509
      %v511 = vsel %vm479, %v440, 0.0
      %v512 = vadd.f32 %v510, %v511
      %v513 = vsel %vm479, %v442, 0.0
      %v514 = vadd.f32 %v512, %v513
      %v515 = vsel %vm479, %v445, 0.0
      %v516 = vadd.f32 %v514, %v515
      %v517 = vsel %vm479, %v447, 0.0
      %v518 = vadd.f32 %v516, %v517
      %v519 = vsel %vm479, %v450, 0.0
      %v520 = vadd.f32 %v518, %v519
      %v521 = vsel %vm479, %v452, 0.0
      %v522 = vadd.f32 %v520, %v521
      %v523 = vsel %vm479, %v455, 0.0
      %v524 = vadd.f32 %v522, %v523
      %v525 = vsel %vm479, %v457, 0.0
      %v526 = vadd.f32 %v524, %v525
      %v527 = vsel %vm479, %v460, 0.0
      %v528 = vadd.f32 %v526, %v527
      %v529 = vsel %vm479, %v462, 0.0
      %v530 = vadd.f32 %v528, %v529
      %v531 = vsel %vm479, %v465, 0.0
      %v532 = vadd.f32 %v530, %v531
      %v533 = vsel %vm479, %v467, 0.0
      %v534 = vadd.f32 %v532, %v533
      %v535 = vsel %vm479, %v470, 0.0
      %v536 = vadd.f32 %v534, %v535
      %v537 = vsel %vm479, %v472, 0.0
      %v538 = vadd.f32 %v536, %v537
      %v539 = vsel %vm479, %v475, 0.0
      %v540 = vadd.f32 %v538, %v539
      %v541 = vsel %vm479, %v477, 0.0
      %v542 = vadd.f32 %v540, %v541
      %v543 = vrot.slane %v542, 4
      %v544 = vadd.f32 %v542, %v543
      %v545 = vrot.slane %v544, 2
      %v546 = vadd.f32 %v544, %v545
      %v547 = vrot.slane %v546, 1
      %v548 = vadd.f32 %v546, %v547
      %v549 = vrcp.pop 256.0
      %v550 = vmul.f32 256.0, %v549
      %v551 = vsub.f32 1.0, %v550
      %v552 = vmul.f32 %v549, %v551
      %v553 = vadd.f32 %v549, %v552
      %vm554 = vweird.f32 %v549
      %v555 = vsel %vm554, %v549, %v553
      %v556 = vmul.f32 %v548, %v555
      %v557 = vsub.f32 %v400, %v556
      %v558 = vsub.f32 %v402, %v556
      %v559 = vsub.f32 %v405, %v556
      %v560 = vsub.f32 %v407, %v556
      %v561 = vsub.f32 %v410, %v556
      %v562 = vsub.f32 %v412, %v556
      %v563 = vsub.f32 %v415, %v556
      %v564 = vsub.f32 %v417, %v556
      %v565 = vsub.f32 %v420, %v556
      %v566 = vsub.f32 %v422, %v556
      %v567 = vsub.f32 %v425, %v556
      %v568 = vsub.f32 %v427, %v556
      %v569 = vsub.f32 %v430, %v556
      %v570 = vsub.f32 %v432, %v556
      %v571 = vsub.f32 %v435, %v556
      %v572 = vsub.f32 %v437, %v556
      %v573 = vsub.f32 %v440, %v556
      %v574 = vsub.f32 %v442, %v556
      %v575 = vsub.f32 %v445, %v556
      %v576 = vsub.f32 %v447, %v556
      %v577 = vsub.f32 %v450, %v556
      %v578 = vsub.f32 %v452, %v556
      %v579 = vsub.f32 %v455, %v556
      %v580 = vsub.f32 %v457, %v556
      %v581 = vsub.f32 %v460, %v556
      %v582 = vsub.f32 %v462, %v556
      %v583 = vsub.f32 %v465, %v556
      %v584 = vsub.f32 %v467, %v556
      %v585 = vsub.f32 %v470, %v556
      %v586 = vsub.f32 %v472, %v556
      %v587 = vsub.f32 %v475, %v556
      %v588 = vsub.f32 %v477, %v556
      %v589 = vmul.f32 %v557, %v557
      %v590 = vmul.f32 %v558, %v558
      %v591 = vmul.f32 %v559, %v559
      %v592 = vmul.f32 %v560, %v560
      %v593 = vmul.f32 %v561, %v561
      %v594 = vmul.f32 %v562, %v562
      %v595 = vmul.f32 %v563, %v563
      %v596 = vmul.f32 %v564, %v564
      %v597 = vmul.f32 %v565, %v565
      %v598 = vmul.f32 %v566, %v566
      %v599 = vmul.f32 %v567, %v567
      %v600 = vmul.f32 %v568, %v568
      %v601 = vmul.f32 %v569, %v569
      %v602 = vmul.f32 %v570, %v570
      %v603 = vmul.f32 %v571, %v571
      %v604 = vmul.f32 %v572, %v572
      %v605 = vmul.f32 %v573, %v573
      %v606 = vmul.f32 %v574, %v574
      %v607 = vmul.f32 %v575, %v575
      %v608 = vmul.f32 %v576, %v576
      %v609 = vmul.f32 %v577, %v577
      %v610 = vmul.f32 %v578, %v578
      %v611 = vmul.f32 %v579, %v579
      %v612 = vmul.f32 %v580, %v580
      %v613 = vmul.f32 %v581, %v581
      %v614 = vmul.f32 %v582, %v582
      %v615 = vmul.f32 %v583, %v583
      %v616 = vmul.f32 %v584, %v584
      %v617 = vmul.f32 %v585, %v585
      %v618 = vmul.f32 %v586, %v586
      %v619 = vmul.f32 %v587, %v587
      %v620 = vmul.f32 %v588, %v588
      %v621 = vsel %vm479, %v589, 0.0
      %v622 = vsel %vm479, %v590, 0.0
      %v623 = vadd.f32 %v621, %v622
      %v624 = vsel %vm479, %v591, 0.0
      %v625 = vadd.f32 %v623, %v624
      %v626 = vsel %vm479, %v592, 0.0
      %v627 = vadd.f32 %v625, %v626
      %v628 = vsel %vm479, %v593, 0.0
      %v629 = vadd.f32 %v627, %v628
      %v630 = vsel %vm479, %v594, 0.0
      %v631 = vadd.f32 %v629, %v630
      %v632 = vsel %vm479, %v595, 0.0
      %v633 = vadd.f32 %v631, %v632
      %v634 = vsel %vm479, %v596, 0.0
      %v635 = vadd.f32 %v633, %v634
      %v636 = vsel %vm479, %v597, 0.0
      %v637 = vadd.f32 %v635, %v636
      %v638 = vsel %vm479, %v598, 0.0
      %v639 = vadd.f32 %v637, %v638
      %v640 = vsel %vm479, %v599, 0.0
      %v641 = vadd.f32 %v639, %v640
      %v642 = vsel %vm479, %v600, 0.0
      %v643 = vadd.f32 %v641, %v642
      %v644 = vsel %vm479, %v601, 0.0
      %v645 = vadd.f32 %v643, %v644
      %v646 = vsel %vm479, %v602, 0.0
      %v647 = vadd.f32 %v645, %v646
      %v648 = vsel %vm479, %v603, 0.0
      %v649 = vadd.f32 %v647, %v648
      %v650 = vsel %vm479, %v604, 0.0
      %v651 = vadd.f32 %v649, %v650
      %v652 = vsel %vm479, %v605, 0.0
      %v653 = vadd.f32 %v651, %v652
      %v654 = vsel %vm479, %v606, 0.0
      %v655 = vadd.f32 %v653, %v654
      %v656 = vsel %vm479, %v607, 0.0
      %v657 = vadd.f32 %v655, %v656
      %v658 = vsel %vm479, %v608, 0.0
      %v659 = vadd.f32 %v657, %v658
      %v660 = vsel %vm479, %v609, 0.0
      %v661 = vadd.f32 %v659, %v660
      %v662 = vsel %vm479, %v610, 0.0
      %v663 = vadd.f32 %v661, %v662
      %v664 = vsel %vm479, %v611, 0.0
      %v665 = vadd.f32 %v663, %v664
      %v666 = vsel %vm479, %v612, 0.0
      %v667 = vadd.f32 %v665, %v666
      %v668 = vsel %vm479, %v613, 0.0
      %v669 = vadd.f32 %v667, %v668
      %v670 = vsel %vm479, %v614, 0.0
      %v671 = vadd.f32 %v669, %v670
      %v672 = vsel %vm479, %v615, 0.0
      %v673 = vadd.f32 %v671, %v672
      %v674 = vsel %vm479, %v616, 0.0
      %v675 = vadd.f32 %v673, %v674
      %v676 = vsel %vm479, %v617, 0.0
      %v677 = vadd.f32 %v675, %v676
      %v678 = vsel %vm479, %v618, 0.0
      %v679 = vadd.f32 %v677, %v678
      %v680 = vsel %vm479, %v619, 0.0
      %v681 = vadd.f32 %v679, %v680
      %v682 = vsel %vm479, %v620, 0.0
      %v683 = vadd.f32 %v681, %v682
      %v684 = vrot.slane %v683, 4
      %v685 = vadd.f32 %v683, %v684
      %v686 = vrot.slane %v685, 2
      %v687 = vadd.f32 %v685, %v686
      %v688 = vrot.slane %v687, 1
      %v689 = vadd.f32 %v687, %v688
      %v690 = vmul.f32 %v689, %v555
      %v691 = vadd.f32 %v690, 1e-05
      %v692 = vrsqrt.pop %v691
      %v693 = vmul.f32 %v692, %v691
      %v694 = vmul.f32 %v693, %v692
      %v695 = vmul.f32 0.5, %v694
      %v696 = vsub.f32 1.5, %v695
      %v697 = vmul.f32 %v692, %v696
      %vm698 = vweird.f32 %v691
      %vm699 = vweird.f32 %v692
      %vm700 = vmor %vm698, %vm699
      %v701 = vsel %vm700, %v692, %v697
      %v702 = vmul.f32 %v557, %v701
      %v703 = vmul.f32 %v558, %v701
      %v704 = vmul.f32 %v559, %v701
      %v705 = vmul.f32 %v560, %v701
      %v706 = vmul.f32 %v561, %v701
      %v707 = vmul.f32 %v562, %v701
      %v708 = vmul.f32 %v563, %v701
      %v709 = vmul.f32 %v564, %v701
      %v710 = vmul.f32 %v565, %v701
      %v711 = vmul.f32 %v566, %v701
      %v712 = vmul.f32 %v567, %v701
      %v713 = vmul.f32 %v568, %v701
      %v714 = vmul.f32 %v569, %v701
      %v715 = vmul.f32 %v570, %v701
      %v716 = vmul.f32 %v571, %v701
      %v717 = vmul.f32 %v572, %v701
      %v718 = vmul.f32 %v573, %v701
      %v719 = vmul.f32 %v574, %v701
      %v720 = vmul.f32 %v575, %v701
      %v721 = vmul.f32 %v576, %v701
      %v722 = vmul.f32 %v577, %v701
      %v723 = vmul.f32 %v578, %v701
      %v724 = vmul.f32 %v579, %v701
      %v725 = vmul.f32 %v580, %v701
      %v726 = vmul.f32 %v581, %v701
      %v727 = vmul.f32 %v582, %v701
      %v728 = vmul.f32 %v583, %v701
      %v729 = vmul.f32 %v584, %v701
      %v730 = vmul.f32 %v585, %v701
      %v731 = vmul.f32 %v586, %v701
      %v732 = vmul.f32 %v587, %v701
      %v733 = vmul.f32 %v588, %v701
      %v734 = vld [vmem:[%s2] sm:$0x1]
      %v736 = vperm.slane %v734, 0
      %v738 = vmul.f32 %v702, %v736
      %v739 = vmul.f32 %v703, %v736
      %v740 = vmul.f32 %v704, %v736
      %v741 = vmul.f32 %v705, %v736
      %v742 = vmul.f32 %v706, %v736
      %v743 = vmul.f32 %v707, %v736
      %v744 = vmul.f32 %v708, %v736
      %v745 = vmul.f32 %v709, %v736
      %v746 = vmul.f32 %v710, %v736
      %v747 = vmul.f32 %v711, %v736
      %v748 = vmul.f32 %v712, %v736
      %v749 = vmul.f32 %v713, %v736
      %v750 = vmul.f32 %v714, %v736
      %v751 = vmul.f32 %v715, %v736
      %v752 = vmul.f32 %v716, %v736
      %v753 = vmul.f32 %v717, %v736
      %v754 = vmul.f32 %v718, %v736
      %v755 = vmul.f32 %v719, %v736
      %v756 = vmul.f32 %v720, %v736
      %v757 = vmul.f32 %v721, %v736
      %v758 = vmul.f32 %v722, %v736
      %v759 = vmul.f32 %v723, %v736
      %v760 = vmul.f32 %v724, %v736
      %v761 = vmul.f32 %v725, %v736
      %v762 = vmul.f32 %v726, %v736
      %v763 = vmul.f32 %v727, %v736
      %v764 = vmul.f32 %v728, %v736
      %v765 = vmul.f32 %v729, %v736
      %v766 = vmul.f32 %v730, %v736
      %v767 = vmul.f32 %v731, %v736
      %v768 = vmul.f32 %v732, %v736
      %v769 = vmul.f32 %v733, %v736
      %v770 = vld [vmem:[%s3] sm:$0x1]
      %v772 = vperm.slane %v770, 0
      %v774 = vadd.f32 %v738, %v772
      %v775 = vadd.f32 %v739, %v772
      %v776 = vadd.f32 %v740, %v772
      %v777 = vadd.f32 %v741, %v772
      %v778 = vadd.f32 %v742, %v772
      %v779 = vadd.f32 %v743, %v772
      %v780 = vadd.f32 %v744, %v772
      %v781 = vadd.f32 %v745, %v772
      %v782 = vadd.f32 %v746, %v772
      %v783 = vadd.f32 %v747, %v772
      %v784 = vadd.f32 %v748, %v772
      %v785 = vadd.f32 %v749, %v772
      %v786 = vadd.f32 %v750, %v772
      %v787 = vadd.f32 %v751, %v772
      %v788 = vadd.f32 %v752, %v772
      %v789 = vadd.f32 %v753, %v772
      %v790 = vadd.f32 %v754, %v772
      %v791 = vadd.f32 %v755, %v772
      %v792 = vadd.f32 %v756, %v772
      %v793 = vadd.f32 %v757, %v772
      %v794 = vadd.f32 %v758, %v772
      %v795 = vadd.f32 %v759, %v772
      %v796 = vadd.f32 %v760, %v772
      %v797 = vadd.f32 %v761, %v772
      %v798 = vadd.f32 %v762, %v772
      %v799 = vadd.f32 %v763, %v772
      %v800 = vadd.f32 %v764, %v772
      %v801 = vadd.f32 %v765, %v772
      %v802 = vadd.f32 %v766, %v772
      %v803 = vadd.f32 %v767, %v772
      %v804 = vadd.f32 %v768, %v772
      %v805 = vadd.f32 %v769, %v772
      %vm806 = vcmp.gt.f32.partialorder %v774, 0.0
      %vm807 = vcmp.gt.f32.partialorder %v775, 0.0
      %vm808 = vcmp.gt.f32.partialorder %v776, 0.0
      %vm809 = vcmp.gt.f32.partialorder %v777, 0.0
      %vm810 = vcmp.gt.f32.partialorder %v778, 0.0
      %vm811 = vcmp.gt.f32.partialorder %v779, 0.0
      %vm812 = vcmp.gt.f32.partialorder %v780, 0.0
      %vm813 = vcmp.gt.f32.partialorder %v781, 0.0
      %vm814 = vcmp.gt.f32.partialorder %v782, 0.0
      %vm815 = vcmp.gt.f32.partialorder %v783, 0.0
      %vm816 = vcmp.gt.f32.partialorder %v784, 0.0
      %vm817 = vcmp.gt.f32.partialorder %v785, 0.0
      %vm818 = vcmp.gt.f32.partialorder %v786, 0.0
      %vm819 = vcmp.gt.f32.partialorder %v787, 0.0
      %vm820 = vcmp.gt.f32.partialorder %v788, 0.0
      %vm821 = vcmp.gt.f32.partialorder %v789, 0.0
      %vm822 = vcmp.gt.f32.partialorder %v790, 0.0
      %vm823 = vcmp.gt.f32.partialorder %v791, 0.0
      %vm824 = vcmp.gt.f32.partialorder %v792, 0.0
      %vm825 = vcmp.gt.f32.partialorder %v793, 0.0
      %vm826 = vcmp.gt.f32.partialorder %v794, 0.0
      %vm827 = vcmp.gt.f32.partialorder %v795, 0.0
      %vm828 = vcmp.gt.f32.partialorder %v796, 0.0
      %vm829 = vcmp.gt.f32.partialorder %v797, 0.0
      %vm830 = vcmp.gt.f32.partialorder %v798, 0.0
      %vm831 = vcmp.gt.f32.partialorder %v799, 0.0
      %vm832 = vcmp.gt.f32.partialorder %v800, 0.0
      %vm833 = vcmp.gt.f32.partialorder %v801, 0.0
      %vm834 = vcmp.gt.f32.partialorder %v802, 0.0
      %vm835 = vcmp.gt.f32.partialorder %v803, 0.0
      %vm836 = vcmp.gt.f32.partialorder %v804, 0.0
      %vm837 = vcmp.gt.f32.partialorder %v805, 0.0
      %v838 = vmul.f32 %v774, 0.2
      %v839 = vmul.f32 %v775, 0.2
      %v840 = vmul.f32 %v776, 0.2
      %v841 = vmul.f32 %v777, 0.2
      %v842 = vmul.f32 %v778, 0.2
      %v843 = vmul.f32 %v779, 0.2
      %v844 = vmul.f32 %v780, 0.2
      %v845 = vmul.f32 %v781, 0.2
      %v846 = vmul.f32 %v782, 0.2
      %v847 = vmul.f32 %v783, 0.2
      %v848 = vmul.f32 %v784, 0.2
      %v849 = vmul.f32 %v785, 0.2
      %v850 = vmul.f32 %v786, 0.2
      %v851 = vmul.f32 %v787, 0.2
      %v852 = vmul.f32 %v788, 0.2
      %v853 = vmul.f32 %v789, 0.2
      %v854 = vmul.f32 %v790, 0.2
      %v855 = vmul.f32 %v791, 0.2
      %v856 = vmul.f32 %v792, 0.2
      %v857 = vmul.f32 %v793, 0.2
      %v858 = vmul.f32 %v794, 0.2
      %v859 = vmul.f32 %v795, 0.2
      %v860 = vmul.f32 %v796, 0.2
      %v861 = vmul.f32 %v797, 0.2
      %v862 = vmul.f32 %v798, 0.2
      %v863 = vmul.f32 %v799, 0.2
      %v864 = vmul.f32 %v800, 0.2
      %v865 = vmul.f32 %v801, 0.2
      %v866 = vmul.f32 %v802, 0.2
      %v867 = vmul.f32 %v803, 0.2
      %v868 = vmul.f32 %v804, 0.2
      %v869 = vmul.f32 %v805, 0.2
      %v870 = vsel %vm806, %v774, %v838
      %v871 = vsel %vm807, %v775, %v839
      %v872 = vsel %vm808, %v776, %v840
      %v873 = vsel %vm809, %v777, %v841
      %v874 = vsel %vm810, %v778, %v842
      %v875 = vsel %vm811, %v779, %v843
      %v876 = vsel %vm812, %v780, %v844
      %v877 = vsel %vm813, %v781, %v845
      %v878 = vsel %vm814, %v782, %v846
      %v879 = vsel %vm815, %v783, %v847
      %v880 = vsel %vm816, %v784, %v848
      %v881 = vsel %vm817, %v785, %v849
      %v882 = vsel %vm818, %v786, %v850
      %v883 = vsel %vm819, %v787, %v851
      %v884 = vsel %vm820, %v788, %v852
      %v885 = vsel %vm821, %v789, %v853
      %v886 = vsel %vm822, %v790, %v854
      %v887 = vsel %vm823, %v791, %v855
      %v888 = vsel %vm824, %v792, %v856
      %v889 = vsel %vm825, %v793, %v857
      %v890 = vsel %vm826, %v794, %v858
      %v891 = vsel %vm827, %v795, %v859
      %v892 = vsel %vm828, %v796, %v860
      %v893 = vsel %vm829, %v797, %v861
      %v894 = vsel %vm830, %v798, %v862
      %v895 = vsel %vm831, %v799, %v863
      %v896 = vsel %vm832, %v800, %v864
      %v897 = vsel %vm833, %v801, %v865
      %v898 = vsel %vm834, %v802, %v866
      %v899 = vsel %vm835, %v803, %v867
      %v900 = vsel %vm836, %v804, %v868
      %v901 = vsel %vm837, %v805, %v869
      %v902 = vpack.c.bf16 %v870, %v870
      %v903 = vpack.c.bf16 %v871, %v871
      %v904 = vpack.c.bf16 %v872, %v872
      %v905 = vpack.c.bf16 %v873, %v873
      %v906 = vpack.c.bf16 %v874, %v874
      %v907 = vpack.c.bf16 %v875, %v875
      %v908 = vpack.c.bf16 %v876, %v876
      %v909 = vpack.c.bf16 %v877, %v877
      %v910 = vpack.c.bf16 %v878, %v878
      %v911 = vpack.c.bf16 %v879, %v879
      %v912 = vpack.c.bf16 %v880, %v880
      %v913 = vpack.c.bf16 %v881, %v881
      %v914 = vpack.c.bf16 %v882, %v882
      %v915 = vpack.c.bf16 %v883, %v883
      %v916 = vpack.c.bf16 %v884, %v884
      %v917 = vpack.c.bf16 %v885, %v885
      %v918 = vpack.c.bf16 %v886, %v886
      %v919 = vpack.c.bf16 %v887, %v887
      %v920 = vpack.c.bf16 %v888, %v888
      %v921 = vpack.c.bf16 %v889, %v889
      %v922 = vpack.c.bf16 %v890, %v890
      %v923 = vpack.c.bf16 %v891, %v891
      %v924 = vpack.c.bf16 %v892, %v892
      %v925 = vpack.c.bf16 %v893, %v893
      %v926 = vpack.c.bf16 %v894, %v894
      %v927 = vpack.c.bf16 %v895, %v895
      %v928 = vpack.c.bf16 %v896, %v896
      %v929 = vpack.c.bf16 %v897, %v897
      %v930 = vpack.c.bf16 %v898, %v898
      %v931 = vpack.c.bf16 %v899, %v899
      %v932 = vpack.c.bf16 %v900, %v900
      %v933 = vpack.c.bf16 %v901, %v901
      %vm934 = vcmask 519168
      %935 = vst.msk [vmem:[%s197] sm:$0xf] %vm934, %v902
      %936 = vst.msk [vmem:[%s197 + $0x4] sm:$0xf] %vm934, %v903
      %937 = vst.msk [vmem:[%s197 + $0x8] sm:$0xf] %vm934, %v904
      %938 = vst.msk [vmem:[%s197 + $0xc] sm:$0xf] %vm934, %v905
      %939 = vst.msk [vmem:[%s197 + $0x10] sm:$0xf] %vm934, %v906
      %940 = vst.msk [vmem:[%s197 + $0x14] sm:$0xf] %vm934, %v907
      %941 = vst.msk [vmem:[%s197 + $0x18] sm:$0xf] %vm934, %v908
      %942 = vst.msk [vmem:[%s197 + $0x1c] sm:$0xf] %vm934, %v909
      %943 = vst.msk [vmem:[%s197 + $0x20] sm:$0xf] %vm934, %v910
      %944 = vst.msk [vmem:[%s197 + $0x24] sm:$0xf] %vm934, %v911
      %945 = vst.msk [vmem:[%s197 + $0x28] sm:$0xf] %vm934, %v912
      %946 = vst.msk [vmem:[%s197 + $0x2c] sm:$0xf] %vm934, %v913
      %947 = vst.msk [vmem:[%s197 + $0x30] sm:$0xf] %vm934, %v914
      %948 = vst.msk [vmem:[%s197 + $0x34] sm:$0xf] %vm934, %v915
      %949 = vst.msk [vmem:[%s197 + $0x38] sm:$0xf] %vm934, %v916
      %950 = vst.msk [vmem:[%s197 + $0x3c] sm:$0xf] %vm934, %v917
      %951 = vst.msk [vmem:[%s197 + $0x40] sm:$0xf] %vm934, %v918
      %952 = vst.msk [vmem:[%s197 + $0x44] sm:$0xf] %vm934, %v919
      %953 = vst.msk [vmem:[%s197 + $0x48] sm:$0xf] %vm934, %v920
      %954 = vst.msk [vmem:[%s197 + $0x4c] sm:$0xf] %vm934, %v921
      %955 = vst.msk [vmem:[%s197 + $0x50] sm:$0xf] %vm934, %v922
      %956 = vst.msk [vmem:[%s197 + $0x54] sm:$0xf] %vm934, %v923
      %957 = vst.msk [vmem:[%s197 + $0x58] sm:$0xf] %vm934, %v924
      %958 = vst.msk [vmem:[%s197 + $0x5c] sm:$0xf] %vm934, %v925
      %959 = vst.msk [vmem:[%s197 + $0x60] sm:$0xf] %vm934, %v926
      %960 = vst.msk [vmem:[%s197 + $0x64] sm:$0xf] %vm934, %v927
      %961 = vst.msk [vmem:[%s197 + $0x68] sm:$0xf] %vm934, %v928
      %962 = vst.msk [vmem:[%s197 + $0x6c] sm:$0xf] %vm934, %v929
      %963 = vst.msk [vmem:[%s197 + $0x70] sm:$0xf] %vm934, %v930
      %964 = vst.msk [vmem:[%s197 + $0x74] sm:$0xf] %vm934, %v931
      %965 = vst.msk [vmem:[%s197 + $0x78] sm:$0xf] %vm934, %v932
      %966 = vst.msk [vmem:[%s197 + $0x7c] sm:$0xf] %vm934, %v933
      %p967 = scmp.lt.s32.totalorder %s15, 1
      %s968 = scalar_select %p967, %s15, 1
      %s969 = smul.addr %s968, 32
      %s970 = smul.addr %s969, 4
      %s971 = scalar_lea.vmem %s4, %s970
      // Predicated region
      $region37: #{discriminator_forward.3} parent=35 // pred_check
        %p972 = pneg %p122
      $region38: #{discriminator_forward.3} parent=35 // pred_check_branch
        %974 = sbr.rel (%p972) target = $region40
      $region39: #{discriminator_forward.3} parent=35 // pred_region
        _
      $region40: #{discriminator_forward.3} parent=35 // pred_fallthru
        _
    $region36: #{discriminator_forward.3} parent=5 // pred_fallthru
      _
    %p975 = scmp.le.s32.totalorder 2, %s10
    // Predicated region
    $region41: #{discriminator_forward.3} parent=5 // pred_check
      %p976 = pneg %p975
    $region42: #{discriminator_forward.3} parent=5 // pred_check_branch
      %978 = sbr.rel (%p976) target = $region44
    $region43: #{discriminator_forward.3} parent=5 // pred_region
      %s979 = ssub.s32 %s10, 2
      // Predicated region
      $region45: #{discriminator_forward.3} parent=43 // pred_check
        %p980 = pneg %p128
      $region46: #{discriminator_forward.3} parent=43 // pred_check_branch
        %982 = sbr.rel (%p980) target = $region48
      $region47: #{discriminator_forward.3} parent=43 // pred_region
        %p983 = scmp.lt.s32.totalorder %s16, 1
        %s984 = scalar_select %p983, %s16, 1
        %s985 = smul.addr %s984, 32
        %s986 = smul.addr %s985, 4
        %s987 = scalar_lea.vmem %s4, %s986
      $region48: #{discriminator_forward.3} parent=43 // pred_fallthru
        _
    $region44: #{discriminator_forward.3} parent=5 // pred_fallthru
      _
  $region6: #{discriminator_forward.3} parent=0 // loop_footer
    %s14 = sadd.s32 1, %s10
  $region7: #{discriminator_forward.3} parent=0 // loop_footer_branch
    %9 = sbr.rel target = $region3
  $region8: #{discriminator_forward.3} parent=0 // loop_exit
    _

// kernel: discriminator_forward.4
$region0: #{discriminator_forward.4}
  #allocation0 [shape = 'u32[]', space=smem, size = 0x4, offset = 0x4, fixed_abs, tag = 'smem constant byte address 0x4 - core index']
  #allocation1 [shape = 'u32[72,128]{1,0:T(1,128)}', space=vmem, size = 0x9000, scoped, tag = 'internal scratch']
  %s0 = inlined_call_operand.vmem [shape: bf16[2,64,1024], index: 0, kind: input, shape index: {}]
  %s1 = inlined_call_operand.vmem [shape: bf16[1024,128], index: 1, kind: input, shape index: {}]
  %s2 = inlined_call_operand.vmem [shape: f32[1,128], index: 2, kind: input, shape index: {}]
  %s3 = inlined_call_operand.vmem [shape: f32[1,128], index: 3, kind: input, shape index: {}]
  %s4 = inlined_call_operand.vmem [shape: bf16[2,64,128], index: 4, kind: output, shape index: {}]
  %s5 = sld [smem:[#allocation0]]
  $region49: #{discriminator_forward.4} parent=0
    _
  %s7 = ssub.s32 1, %s5
  %s8 = scalar_select 0, %s7, %s5
  loop: start=0, step=1, limit=4
  $region2: #{discriminator_forward.4} parent=0 // loop_pre_header
    _
  $region3: #{discriminator_forward.4} parent=0 // loop_header
    %s10 = sphi 0, %s14
    %p11 = scmp.ge.s32.totalorder %s10, 4
    %s20 = sphi 0, %s22
    %s23 = sphi 0, %s20
    %s24 = sphi 0, %s23
    %s40 = sphi 0, %s24
    %s44 = sphi 0, %s44
    %s46 = sphi 0, %s44
    %s47 = sphi 0, %s46
    %s61 = sphi 0, %s47
    %s65 = sphi 0, %s65
    %s67 = sphi 0, %s65
    %s68 = sphi 0, %s67
    %s82 = sphi 0, %s68
    %s86 = sphi 0, %s86
    %s88 = sphi 0, %s86
    %s89 = sphi 0, %s88
    %s103 = sphi 0, %s89
    %s109 = sphi 0, %s111
    %s112 = sphi 0, %s109
    %s113 = sphi 0, %s112
    %s129 = sphi 0, %s113
  $region4: #{discriminator_forward.4} parent=0 // loop_header_branch
    %13 = sbr.rel (%p11) target = $region8
  $region5: #{discriminator_forward.4} parent=0 // loop_body
    %s15 = ssub.s32 %s10, 1
    %s16 = ssub.s32 %s10, 2
    %s17 = sadd.s32 %s10, 1
    %s18 = ssub.s32 %s10, %s17
    %p19 = scmp.eq.s32.totalorder %s18, 0
    %s21 = sadd.s32 %s20, 1
    %s22 = scalar_select %p19, %s20, %s21
    %p25 = pneg %p19
    %p26 = scmp.eq.s32.totalorder %s10, 1
    %p27 = por %p25, %p26
    %p28 = scmp.ne.s32.totalorder %s20, %s23
    %p29 = scmp.eq.s32.totalorder %s10, 0
    %p30 = por %p28, %p29
    %p31 = scmp.ne.s32.totalorder %s20, %s23
    %p32 = scmp.eq.s32.totalorder %s15, 1
    %p33 = por %p31, %p32
    %p34 = scmp.ne.s32.totalorder %s23, %s24
    %p35 = scmp.eq.s32.totalorder %s15, 0
    %p36 = por %p34, %p35
    %p37 = scmp.ne.s32.totalorder %s23, %s24
    %p38 = scmp.eq.s32.totalorder %s16, 1
    %p39 = por %p37, %p38
    %p41 = scmp.ne.s32.totalorder %s24, %s40
    %p42 = scmp.eq.s32.totalorder %s16, 0
    %p43 = por %p41, %p42
    %s45 = sadd.s32 %s44, 1
    %p48 = scmp.eq.s32.totalorder %s10, 1
    %p49 = scmp.ne.s32.totalorder %s44, %s46
    %p50 = scmp.eq.s32.totalorder %s10, 0
    %p51 = por %p49, %p50
    %p52 = scmp.ne.s32.totalorder %s44, %s46
    %p53 = scmp.eq.s32.totalorder %s15, 1
    %p54 = por %p52, %p53
    %p55 = scmp.ne.s32.totalorder %s46, %s47
    %p56 = scmp.eq.s32.totalorder %s15, 0
    %p57 = por %p55, %p56
    %p58 = scmp.ne.s32.totalorder %s46, %s47
    %p59 = scmp.eq.s32.totalorder %s16, 1
    %p60 = por %p58, %p59
    %p62 = scmp.ne.s32.totalorder %s47, %s61
    %p63 = scmp.eq.s32.totalorder %s16, 0
    %p64 = por %p62, %p63
    %s66 = sadd.s32 %s65, 1
    %p69 = scmp.eq.s32.totalorder %s10, 1
    %p70 = scmp.ne.s32.totalorder %s65, %s67
    %p71 = scmp.eq.s32.totalorder %s10, 0
    %p72 = por %p70, %p71
    %p73 = scmp.ne.s32.totalorder %s65, %s67
    %p74 = scmp.eq.s32.totalorder %s15, 1
    %p75 = por %p73, %p74
    %p76 = scmp.ne.s32.totalorder %s67, %s68
    %p77 = scmp.eq.s32.totalorder %s15, 0
    %p78 = por %p76, %p77
    %p79 = scmp.ne.s32.totalorder %s67, %s68
    %p80 = scmp.eq.s32.totalorder %s16, 1
    %p81 = por %p79, %p80
    %p83 = scmp.ne.s32.totalorder %s68, %s82
    %p84 = scmp.eq.s32.totalorder %s16, 0
    %p85 = por %p83, %p84
    %s87 = sadd.s32 %s86, 1
    %p90 = scmp.eq.s32.totalorder %s10, 1
    %p91 = scmp.ne.s32.totalorder %s86, %s88
    %p92 = scmp.eq.s32.totalorder %s10, 0
    %p93 = por %p91, %p92
    %p94 = scmp.ne.s32.totalorder %s86, %s88
    %p95 = scmp.eq.s32.totalorder %s15, 1
    %p96 = por %p94, %p95
    %p97 = scmp.ne.s32.totalorder %s88, %s89
    %p98 = scmp.eq.s32.totalorder %s15, 0
    %p99 = por %p97, %p98
    %p100 = scmp.ne.s32.totalorder %s88, %s89
    %p101 = scmp.eq.s32.totalorder %s16, 1
    %p102 = por %p100, %p101
    %p104 = scmp.ne.s32.totalorder %s89, %s103
    %p105 = scmp.eq.s32.totalorder %s16, 0
    %p106 = por %p104, %p105
    %s107 = ssub.s32 %s10, %s17
    %p108 = scmp.eq.s32.totalorder %s107, 0
    %s110 = sadd.s32 %s109, 1
    %s111 = scalar_select %p108, %s109, %s110
    %p114 = pneg %p108
    %p115 = scmp.eq.s32.totalorder %s10, 1
    %p116 = por %p114, %p115
    %p117 = scmp.ne.s32.totalorder %s109, %s112
    %p118 = scmp.eq.s32.totalorder %s10, 0
    %p119 = por %p117, %p118
    %p120 = scmp.ne.s32.totalorder %s109, %s112
    %p121 = scmp.eq.s32.totalorder %s15, 1
    %p122 = por %p120, %p121
    %p123 = scmp.ne.s32.totalorder %s112, %s113
    %p124 = scmp.eq.s32.totalorder %s15, 0
    %p125 = por %p123, %p124
    %p126 = scmp.ne.s32.totalorder %s112, %s113
    %p127 = scmp.eq.s32.totalorder %s16, 1
    %p128 = por %p126, %p127
    %p130 = scmp.ne.s32.totalorder %s113, %s129
    %p131 = scmp.eq.s32.totalorder %s16, 0
    %p132 = por %p130, %p131
    %p133 = scmp.le.s32.totalorder 1, %s10
    %p134 = scmp.lt.s32.totalorder %s10, 3
    %p135 = pnand %p133, %p134
    %p136 = pneg %p135
    // Predicated region
    $region9: #{discriminator_forward.4} parent=5 // pred_check
      _
    $region10: #{discriminator_forward.4} parent=5 // pred_check_branch
      %138 = sbr.rel (%p135) target = $region12
    $region11: #{discriminator_forward.4} parent=5 // pred_region
      %s139 = ssub.s32 %s10, 1
      // Predicated region
      $region13: #{discriminator_forward.4} parent=11 // pred_check
        %p140 = pneg %p57
      $region14: #{discriminator_forward.4} parent=11 // pred_check_branch
        %142 = sbr.rel (%p140) target = $region16
      $region15: #{discriminator_forward.4} parent=11 // pred_region
        _
      $region16: #{discriminator_forward.4} parent=11 // pred_fallthru
        _
      // Predicated region
      $region17: #{discriminator_forward.4} parent=11 // pred_check
        %p143 = pneg %p78
      $region18: #{discriminator_forward.4} parent=11 // pred_check_branch
        %145 = sbr.rel (%p143) target = $region20
      $region19: #{discriminator_forward.4} parent=11 // pred_region
        _
      $region20: #{discriminator_forward.4} parent=11 // pred_fallthru
        _
      // Predicated region
      $region21: #{discriminator_forward.4} parent=11 // pred_check
        %p146 = pneg %p99
      $region22: #{discriminator_forward.4} parent=11 // pred_check_branch
        %148 = sbr.rel (%p146) target = $region24
      $region23: #{discriminator_forward.4} parent=11 // pred_region
        _
      $region24: #{discriminator_forward.4} parent=11 // pred_fallthru
        _
    $region12: #{discriminator_forward.4} parent=5 // pred_fallthru
      _
    %p149 = scmp.lt.s32.totalorder %s10, 2
    // Predicated region
    $region25: #{discriminator_forward.4} parent=5 // pred_check
      %p150 = pneg %p149
    $region26: #{discriminator_forward.4} parent=5 // pred_check_branch
      %152 = sbr.rel (%p150) target = $region28
    $region27: #{discriminator_forward.4} parent=5 // pred_region
      // Predicated region
      $region29: #{discriminator_forward.4} parent=27 // pred_check
        %p153 = pneg %p30
      $region30: #{discriminator_forward.4} parent=27 // pred_check_branch
        %155 = sbr.rel (%p153) target = $region32
      $region31: #{discriminator_forward.4} parent=27 // pred_region
        %p156 = scmp.lt.s32.totalorder %s10, 1
        %s157 = scalar_select %p156, %s10, 1
        %s158 = smul.addr %s157, 64
        %s159 = smul.addr %s158, 4
        %s160 = scalar_lea.vmem %s0, %s159
      $region32: #{discriminator_forward.4} parent=27 // pred_fallthru
        _
    $region28: #{discriminator_forward.4} parent=5 // pred_fallthru
      _
    %p161 = scmp.le.s32.totalorder 1, %s10
    %p162 = scmp.lt.s32.totalorder %s10, 3
    %p163 = pnand %p161, %p162
    %p164 = pneg %p163
    // Predicated region
    $region33: #{discriminator_forward.4} parent=5 // pred_check
      _
    $region34: #{discriminator_forward.4} parent=5 // pred_check_branch
      %166 = sbr.rel (%p163) target = $region36
    $region35: #{discriminator_forward.4} parent=5 // pred_region
      %s167 = ssub.s32 %s10, 1
      %p168 = scmp.lt.s32.totalorder %s15, 1
      %s169 = scalar_select %p168, %s15, 1
      %s170 = smul.addr %s169, 64
      %s171 = smul.addr %s170, 4
      %s172 = scalar_lea.vmem %s0, %s171
      %p173 = pneg %p36
      %p174 = pneg %p33
      %p175 = pneg %p57
      %p176 = pneg %p54
      %p177 = pneg %p78
      %p178 = pneg %p75
      %p179 = pneg %p99
      %p180 = pneg %p96
      %p181 = pneg %p125
      %p182 = pneg %p122
      %p183 = scmp.lt.s32.totalorder %s15, 1
      %s184 = scalar_select %p183, %s15, 1
      %s185 = smul.addr %s184, 8
      %s186 = smul.addr %s185, 4
      %s187 = scalar_lea.vmem %s4, %s186
      %p188 = scmp.lt.s32.totalorder %s15, 1
      %s189 = scalar_select %p188, %s15, 1
      %s190 = smul.addr %s189, 64
      %s191 = smul.addr %s190, 4
      %s192 = scalar_lea.vmem %s0, %s191
      %p193 = scmp.lt.s32.totalorder %s15, 1
      %s194 = scalar_select %p193, %s15, 1
      %s195 = smul.addr %s194, 8
      %s196 = smul.addr %s195, 4
      %s197 = scalar_lea.vmem %s4, %s196
      %v198 = vld [vmem:[%s192] sm:$0xff]
      %v199 = vld [vmem:[%s192 + $0x8] sm:$0xff]
      %v200 = vld [vmem:[%s192 + $0x10] sm:$0xff]
      %v201 = vld [vmem:[%s192 + $0x18] sm:$0xff]
      %v202 = vld [vmem:[%s192 + $0x20] sm:$0xff]
      %v203 = vld [vmem:[%s192 + $0x28] sm:$0xff]
      %v204 = vld [vmem:[%s192 + $0x30] sm:$0xff]
      %v205 = vld [vmem:[%s192 + $0x38] sm:$0xff]
      %v206 = vld [vmem:[%s192 + $0x40] sm:$0xff]
      %v207 = vld [vmem:[%s192 + $0x48] sm:$0xff]
      %v208 = vld [vmem:[%s192 + $0x50] sm:$0xff]
      %v209 = vld [vmem:[%s192 + $0x58] sm:$0xff]
      %v210 = vld [vmem:[%s192 + $0x60] sm:$0xff]
      %v211 = vld [vmem:[%s192 + $0x68] sm:$0xff]
      %v212 = vld [vmem:[%s192 + $0x70] sm:$0xff]
      %v213 = vld [vmem:[%s192 + $0x78] sm:$0xff]
      %v214 = vld [vmem:[%s192 + $0x80] sm:$0xff]
      %v215 = vld [vmem:[%s192 + $0x88] sm:$0xff]
      %v216 = vld [vmem:[%s192 + $0x90] sm:$0xff]
      %v217 = vld [vmem:[%s192 + $0x98] sm:$0xff]
      %v218 = vld [vmem:[%s192 + $0xa0] sm:$0xff]
      %v219 = vld [vmem:[%s192 + $0xa8] sm:$0xff]
      %v220 = vld [vmem:[%s192 + $0xb0] sm:$0xff]
      %v221 = vld [vmem:[%s192 + $0xb8] sm:$0xff]
      %v222 = vld [vmem:[%s192 + $0xc0] sm:$0xff]
      %v223 = vld [vmem:[%s192 + $0xc8] sm:$0xff]
      %v224 = vld [vmem:[%s192 + $0xd0] sm:$0xff]
      %v225 = vld [vmem:[%s192 + $0xd8] sm:$0xff]
      %v226 = vld [vmem:[%s192 + $0xe0] sm:$0xff]
      %v227 = vld [vmem:[%s192 + $0xe8] sm:$0xff]
      %v228 = vld [vmem:[%s192 + $0xf0] sm:$0xff]
      %v229 = vld [vmem:[%s192 + $0xf8] sm:$0xff]
      %v230 = vld [vmem:[%s1] sm:$0xf]
      %v231 = vld [vmem:[%s1 + $0x4] sm:$0xf]
      %v232 = vld [vmem:[%s1 + $0x8] sm:$0xf]
      %v233 = vld [vmem:[%s1 + $0xc] sm:$0xf]
      %v234 = vld [vmem:[%s1 + $0x10] sm:$0xf]
      %v235 = vld [vmem:[%s1 + $0x14] sm:$0xf]
      %v236 = vld [vmem:[%s1 + $0x18] sm:$0xf]
      %v237 = vld [vmem:[%s1 + $0x1c] sm:$0xf]
      %v238 = vld [vmem:[%s1 + $0x20] sm:$0xf]
      %v239 = vld [vmem:[%s1 + $0x24] sm:$0xf]
      %v240 = vld [vmem:[%s1 + $0x28] sm:$0xf]
      %v241 = vld [vmem:[%s1 + $0x2c] sm:$0xf]
      %v242 = vld [vmem:[%s1 + $0x30] sm:$0xf]
      %v243 = vld [vmem:[%s1 + $0x34] sm:$0xf]
      %v244 = vld [vmem:[%s1 + $0x38] sm:$0xf]
      %v245 = vld [vmem:[%s1 + $0x3c] sm:$0xf]
      %v246 = vld [vmem:[%s1 + $0x40] sm:$0xf]
      %v247 = vld [vmem:[%s1 + $0x44] sm:$0xf]
      %v248 = vld [vmem:[%s1 + $0x48] sm:$0xf]
      %v249 = vld [vmem:[%s1 + $0x4c] sm:$0xf]
      %v250 = vld [vmem:[%s1 + $0x50] sm:$0xf]
      %v251 = vld [vmem:[%s1 + $0x54] sm:$0xf]
      %v252 = vld [vmem:[%s1 + $0x58] sm:$0xf]
      %v253 = vld [vmem:[%s1 + $0x5c] sm:$0xf]
      %v254 = vld [vmem:[%s1 + $0x60] sm:$0xf]
      %v255 = vld [vmem:[%s1 + $0x64] sm:$0xf]
      %v256 = vld [vmem:[%s1 + $0x68] sm:$0xf]
      %v257 = vld [vmem:[%s1 + $0x6c] sm:$0xf]
      %v258 = vld [vmem:[%s1 + $0x70] sm:$0xf]
      %v259 = vld [vmem:[%s1 + $0x74] sm:$0xf]
      %v260 = vld [vmem:[%s1 + $0x78] sm:$0xf]
      %v261 = vld [vmem:[%s1 + $0x7c] sm:$0xf]
      %v262 = vld [vmem:[%s1 + $0x80] sm:$0xf]
      %v263 = vld [vmem:[%s1 + $0x84] sm:$0xf]
      %v264 = vld [vmem:[%s1 + $0x88] sm:$0xf]
      %v265 = vld [vmem:[%s1 + $0x8c] sm:$0xf]
      %v266 = vld [vmem:[%s1 + $0x90] sm:$0xf]
      %v267 = vld [vmem:[%s1 + $0x94] sm:$0xf]
      %v268 = vld [vmem:[%s1 + $0x98] sm:$0xf]
      %v269 = vld [vmem:[%s1 + $0x9c] sm:$0xf]
      %v270 = vld [vmem:[%s1 + $0xa0] sm:$0xf]
      %v271 = vld [vmem:[%s1 + $0xa4] sm:$0xf]
      %v272 = vld [vmem:[%s1 + $0xa8] sm:$0xf]
      %v273 = vld [vmem:[%s1 + $0xac] sm:$0xf]
      %v274 = vld [vmem:[%s1 + $0xb0] sm:$0xf]
      %v275 = vld [vmem:[%s1 + $0xb4] sm:$0xf]
      %v276 = vld [vmem:[%s1 + $0xb8] sm:$0xf]
      %v277 = vld [vmem:[%s1 + $0xbc] sm:$0xf]
      %v278 = vld [vmem:[%s1 + $0xc0] sm:$0xf]
      %v279 = vld [vmem:[%s1 + $0xc4] sm:$0xf]
      %v280 = vld [vmem:[%s1 + $0xc8] sm:$0xf]
      %v281 = vld [vmem:[%s1 + $0xcc] sm:$0xf]
      %v282 = vld [vmem:[%s1 + $0xd0] sm:$0xf]
      %v283 = vld [vmem:[%s1 + $0xd4] sm:$0xf]
      %v284 = vld [vmem:[%s1 + $0xd8] sm:$0xf]
      %v285 = vld [vmem:[%s1 + $0xdc] sm:$0xf]
      %v286 = vld [vmem:[%s1 + $0xe0] sm:$0xf]
      %v287 = vld [vmem:[%s1 + $0xe4] sm:$0xf]
      %v288 = vld [vmem:[%s1 + $0xe8] sm:$0xf]
      %v289 = vld [vmem:[%s1 + $0xec] sm:$0xf]
      %v290 = vld [vmem:[%s1 + $0xf0] sm:$0xf]
      %v291 = vld [vmem:[%s1 + $0xf4] sm:$0xf]
      %v292 = vld [vmem:[%s1 + $0xf8] sm:$0xf]
      %v293 = vld [vmem:[%s1 + $0xfc] sm:$0xf]
      %v294 = vld [vmem:[%s1 + $0x100] sm:$0xf]
      %v295 = vld [vmem:[%s1 + $0x104] sm:$0xf]
      %v296 = vld [vmem:[%s1 + $0x108] sm:$0xf]
      %v297 = vld [vmem:[%s1 + $0x10c] sm:$0xf]
      %v298 = vld [vmem:[%s1 + $0x110] sm:$0xf]
      %v299 = vld [vmem:[%s1 + $0x114] sm:$0xf]
      %v300 = vld [vmem:[%s1 + $0x118] sm:$0xf]
      %v301 = vld [vmem:[%s1 + $0x11c] sm:$0xf]
      %v302 = vld [vmem:[%s1 + $0x120] sm:$0xf]
      %v303 = vld [vmem:[%s1 + $0x124] sm:$0xf]
      %v304 = vld [vmem:[%s1 + $0x128] sm:$0xf]
      %v305 = vld [vmem:[%s1 + $0x12c] sm:$0xf]
      %v306 = vld [vmem:[%s1 + $0x130] sm:$0xf]
      %v307 = vld [vmem:[%s1 + $0x134] sm:$0xf]
      %v308 = vld [vmem:[%s1 + $0x138] sm:$0xf]
      %v309 = vld [vmem:[%s1 + $0x13c] sm:$0xf]
      %v310 = vld [vmem:[%s1 + $0x140] sm:$0xf]
      %v311 = vld [vmem:[%s1 + $0x144] sm:$0xf]
      %v312 = vld [vmem:[%s1 + $0x148] sm:$0xf]
      %v313 = vld [vmem:[%s1 + $0x14c] sm:$0xf]
      %v314 = vld [vmem:[%s1 + $0x150] sm:$0xf]
      %v315 = vld [vmem:[%s1 + $0x154] sm:$0xf]
      %v316 = vld [vmem:[%s1 + $0x158] sm:$0xf]
      %v317 = vld [vmem:[%s1 + $0x15c] sm:$0xf]
      %v318 = vld [vmem:[%s1 + $0x160] sm:$0xf]
      %v319 = vld [vmem:[%s1 + $0x164] sm:$0xf]
      %v320 = vld [vmem:[%s1 + $0x168] sm:$0xf]
      %v321 = vld [vmem:[%s1 + $0x16c] sm:$0xf]
      %v322 = vld [vmem:[%s1 + $0x170] sm:$0xf]
      %v323 = vld [vmem:[%s1 + $0x174] sm:$0xf]
      %v324 = vld [vmem:[%s1 + $0x178] sm:$0xf]
      %v325 = vld [vmem:[%s1 + $0x17c] sm:$0xf]
      %v326 = vld [vmem:[%s1 + $0x180] sm:$0xf]
      %v327 = vld [vmem:[%s1 + $0x184] sm:$0xf]
      %v328 = vld [vmem:[%s1 + $0x188] sm:$0xf]
      %v329 = vld [vmem:[%s1 + $0x18c] sm:$0xf]
      %v330 = vld [vmem:[%s1 + $0x190] sm:$0xf]
      %v331 = vld [vmem:[%s1 + $0x194] sm:$0xf]
      %v332 = vld [vmem:[%s1 + $0x198] sm:$0xf]
      %v333 = vld [vmem:[%s1 + $0x19c] sm:$0xf]
      %v334 = vld [vmem:[%s1 + $0x1a0] sm:$0xf]
      %v335 = vld [vmem:[%s1 + $0x1a4] sm:$0xf]
      %v336 = vld [vmem:[%s1 + $0x1a8] sm:$0xf]
      %v337 = vld [vmem:[%s1 + $0x1ac] sm:$0xf]
      %v338 = vld [vmem:[%s1 + $0x1b0] sm:$0xf]
      %v339 = vld [vmem:[%s1 + $0x1b4] sm:$0xf]
      %v340 = vld [vmem:[%s1 + $0x1b8] sm:$0xf]
      %v341 = vld [vmem:[%s1 + $0x1bc] sm:$0xf]
      %v342 = vld [vmem:[%s1 + $0x1c0] sm:$0xf]
      %v343 = vld [vmem:[%s1 + $0x1c4] sm:$0xf]
      %v344 = vld [vmem:[%s1 + $0x1c8] sm:$0xf]
      %v345 = vld [vmem:[%s1 + $0x1cc] sm:$0xf]
      %v346 = vld [vmem:[%s1 + $0x1d0] sm:$0xf]
      %v347 = vld [vmem:[%s1 + $0x1d4] sm:$0xf]
      %v348 = vld [vmem:[%s1 + $0x1d8] sm:$0xf]
      %v349 = vld [vmem:[%s1 + $0x1dc] sm:$0xf]
      %v350 = vld [vmem:[%s1 + $0x1e0] sm:$0xf]
      %v351 = vld [vmem:[%s1 + $0x1e4] sm:$0xf]
      %v352 = vld [vmem:[%s1 + $0x1e8] sm:$0xf]
      %v353 = vld [vmem:[%s1 + $0x1ec] sm:$0xf]
      %v354 = vld [vmem:[%s1 + $0x1f0] sm:$0xf]
      %v355 = vld [vmem:[%s1 + $0x1f4] sm:$0xf]
      %v356 = vld [vmem:[%s1 + $0x1f8] sm:$0xf]
      %v357 = vld [vmem:[%s1 + $0x1fc] sm:$0xf]
      %v390 = vunpack.c.l.b16 %v198
      %v391 = vunpack.c.h.b16 %v198
      %v392 = vunpack.c.l.b16 %v199
      %v393 = vunpack.c.h.b16 %v199
      %v394 = vunpack.c.l.b16 %v200
      %v395 = vunpack.c.h.b16 %v200
      %v396 = vunpack.c.l.b16 %v201
      %v397 = vunpack.c.h.b16 %v201
      %v398 = vunpack.c.l.b16 %v202
      %v399 = vunpack.c.h.b16 %v202
      %v400 = vunpack.c.l.b16 %v203
      %v401 = vunpack.c.h.b16 %v203
      %v402 = vunpack.c.l.b16 %v204
      %v403 = vunpack.c.h.b16 %v204
      %v404 = vunpack.c.l.b16 %v205
      %v405 = vunpack.c.h.b16 %v205
      %v406 = vunpack.c.l.b16 %v206
      %v407 = vunpack.c.h.b16 %v206
      %v408 = vunpack.c.l.b16 %v207
      %v409 = vunpack.c.h.b16 %v207
      %v410 = vunpack.c.l.b16 %v208
      %v411 = vunpack.c.h.b16 %v208
      %v412 = vunpack.c.l.b16 %v209
      %v413 = vunpack.c.h.b16 %v209
      %v414 = vunpack.c.l.b16 %v210
      %v415 = vunpack.c.h.b16 %v210
      %v416 = vunpack.c.l.b16 %v211
      %v417 = vunpack.c.h.b16 %v211
      %v418 = vunpack.c.l.b16 %v212
      %v419 = vunpack.c.h.b16 %v212
      %v420 = vunpack.c.l.b16 %v213
      %v421 = vunpack.c.h.b16 %v213
      %v422 = vunpack.c.l.b16 %v214
      %v423 = vunpack.c.h.b16 %v214
      %v424 = vunpack.c.l.b16 %v215
      %v425 = vunpack.c.h.b16 %v215
      %v426 = vunpack.c.l.b16 %v216
      %v427 = vunpack.c.h.b16 %v216
      %v428 = vunpack.c.l.b16 %v217
      %v429 = vunpack.c.h.b16 %v217
      %v430 = vunpack.c.l.b16 %v218
      %v431 = vunpack.c.h.b16 %v218
      %v432 = vunpack.c.l.b16 %v219
      %v433 = vunpack.c.h.b16 %v219
      %v434 = vunpack.c.l.b16 %v220
      %v435 = vunpack.c.h.b16 %v220
      %v436 = vunpack.c.l.b16 %v221
      %v437 = vunpack.c.h.b16 %v221
      %v438 = vunpack.c.l.b16 %v222
      %v439 = vunpack.c.h.b16 %v222
      %v440 = vunpack.c.l.b16 %v223
      %v441 = vunpack.c.h.b16 %v223
      %v442 = vunpack.c.l.b16 %v224
      %v443 = vunpack.c.h.b16 %v224
      %v444 = vunpack.c.l.b16 %v225
      %v445 = vunpack.c.h.b16 %v225
      %v446 = vunpack.c.l.b16 %v226
      %v447 = vunpack.c.h.b16 %v226
      %v448 = vunpack.c.l.b16 %v227
      %v449 = vunpack.c.h.b16 %v227
      %v450 = vunpack.c.l.b16 %v228
      %v451 = vunpack.c.h.b16 %v228
      %v452 = vunpack.c.l.b16 %v229
      %v453 = vunpack.c.h.b16 %v229
      %v454 = vpack.c.b16 %v398, %v390
      %v455 = vpack.c.b16 %v399, %v391
      %v456 = vpack.c.b16 %v400, %v392
      %v457 = vpack.c.b16 %v401, %v393
      %v458 = vpack.c.b16 %v402, %v394
      %v459 = vpack.c.b16 %v403, %v395
      %v460 = vpack.c.b16 %v404, %v396
      %v461 = vpack.c.b16 %v405, %v397
      %v462 = vpack.c.b16 %v414, %v406
      %v463 = vpack.c.b16 %v415, %v407
      %v464 = vpack.c.b16 %v416, %v408
      %v465 = vpack.c.b16 %v417, %v409
      %v466 = vpack.c.b16 %v418, %v410
      %v467 = vpack.c.b16 %v419, %v411
      %v468 = vpack.c.b16 %v420, %v412
      %v469 = vpack.c.b16 %v421, %v413
      %v470 = vpack.c.b16 %v430, %v422
      %v471 = vpack.c.b16 %v431, %v423
      %v472 = vpack.c.b16 %v432, %v424
      %v473 = vpack.c.b16 %v433, %v425
      %v474 = vpack.c.b16 %v434, %v426
      %v475 = vpack.c.b16 %v435, %v427
      %v476 = vpack.c.b16 %v436, %v428
      %v477 = vpack.c.b16 %v437, %v429
      %v478 = vpack.c.b16 %v446, %v438
      %v479 = vpack.c.b16 %v447, %v439
      %v480 = vpack.c.b16 %v448, %v440
      %v481 = vpack.c.b16 %v449, %v441
      %v482 = vpack.c.b16 %v450, %v442
      %v483 = vpack.c.b16 %v451, %v443
      %v484 = vpack.c.b16 %v452, %v444
      %v485 = vpack.c.b16 %v453, %v445
      %v646 = vunpack.c.l.b16 %v230
      %v647 = vunpack.c.l.b16 %v231
      %v648 = vunpack.c.l.b16 %v232
      %v649 = vunpack.c.l.b16 %v233
      %v650 = vunpack.c.l.b16 %v234
      %v651 = vunpack.c.l.b16 %v235
      %v652 = vunpack.c.l.b16 %v236
      %v653 = vunpack.c.l.b16 %v237
      %v654 = vunpack.c.l.b16 %v238
      %v655 = vunpack.c.l.b16 %v239
      %v656 = vunpack.c.l.b16 %v240
      %v657 = vunpack.c.l.b16 %v241
      %v658 = vunpack.c.l.b16 %v242
      %v659 = vunpack.c.l.b16 %v243
      %v660 = vunpack.c.l.b16 %v244
      %v661 = vunpack.c.l.b16 %v245
      %v662 = vunpack.c.l.b16 %v246
      %v663 = vunpack.c.l.b16 %v247
      %v664 = vunpack.c.l.b16 %v248
      %v665 = vunpack.c.l.b16 %v249
      %v666 = vunpack.c.l.b16 %v250
      %v667 = vunpack.c.l.b16 %v251
      %v668 = vunpack.c.l.b16 %v252
      %v669 = vunpack.c.l.b16 %v253
      %v670 = vunpack.c.l.b16 %v254
      %v671 = vunpack.c.l.b16 %v255
      %v672 = vunpack.c.l.b16 %v256
      %v673 = vunpack.c.l.b16 %v257
      %v674 = vunpack.c.l.b16 %v258
      %v675 = vunpack.c.l.b16 %v259
      %v676 = vunpack.c.l.b16 %v260
      %v677 = vunpack.c.l.b16 %v261
      %v678 = vunpack.c.l.b16 %v262
      %v679 = vunpack.c.l.b16 %v263
      %v680 = vunpack.c.l.b16 %v264
      %v681 = vunpack.c.l.b16 %v265
      %v682 = vunpack.c.l.b16 %v266
      %v683 = vunpack.c.l.b16 %v267
      %v684 = vunpack.c.l.b16 %v268
      %v685 = vunpack.c.l.b16 %v269
      %v686 = vunpack.c.l.b16 %v270
      %v687 = vunpack.c.l.b16 %v271
      %v688 = vunpack.c.l.b16 %v272
      %v689 = vunpack.c.l.b16 %v273
      %v690 = vunpack.c.l.b16 %v274
      %v691 = vunpack.c.l.b16 %v275
      %v692 = vunpack.c.l.b16 %v276
      %v693 = vunpack.c.l.b16 %v277
      %v694 = vunpack.c.l.b16 %v278
      %v695 = vunpack.c.l.b16 %v279
      %v696 = vunpack.c.l.b16 %v280
      %v697 = vunpack.c.l.b16 %v281
      %v698 = vunpack.c.l.b16 %v282
      %v699 = vunpack.c.l.b16 %v283
      %v700 = vunpack.c.l.b16 %v284
      %v701 = vunpack.c.l.b16 %v285
      %v702 = vunpack.c.l.b16 %v286
      %v703 = vunpack.c.l.b16 %v287
      %v704 = vunpack.c.l.b16 %v288
      %v705 = vunpack.c.l.b16 %v289
      %v706 = vunpack.c.l.b16 %v290
      %v707 = vunpack.c.l.b16 %v291
      %v708 = vunpack.c.l.b16 %v292
      %v709 = vunpack.c.l.b16 %v293
      %v710 = vunpack.c.l.b16 %v294
      %v711 = vunpack.c.l.b16 %v295
      %v712 = vunpack.c.l.b16 %v296
      %v713 = vunpack.c.l.b16 %v297
      %v714 = vunpack.c.l.b16 %v298
      %v715 = vunpack.c.l.b16 %v299
      %v716 = vunpack.c.l.b16 %v300
      %v717 = vunpack.c.l.b16 %v301
      %v718 = vunpack.c.l.b16 %v302
      %v719 = vunpack.c.l.b16 %v303
      %v720 = vunpack.c.l.b16 %v304
      %v721 = vunpack.c.l.b16 %v305
      %v722 = vunpack.c.l.b16 %v306
      %v723 = vunpack.c.l.b16 %v307
      %v724 = vunpack.c.l.b16 %v308
      %v725 = vunpack.c.l.b16 %v309
      %v726 = vunpack.c.l.b16 %v310
      %v727 = vunpack.c.l.b16 %v311
      %v728 = vunpack.c.l.b16 %v312
      %v729 = vunpack.c.l.b16 %v313
      %v730 = vunpack.c.l.b16 %v314
      %v731 = vunpack.c.l.b16 %v315
      %v732 = vunpack.c.l.b16 %v316
      %v733 = vunpack.c.l.b16 %v317
      %v734 = vunpack.c.l.b16 %v318
      %v735 = vunpack.c.l.b16 %v319
      %v736 = vunpack.c.l.b16 %v320
      %v737 = vunpack.c.l.b16 %v321
      %v738 = vunpack.c.l.b16 %v322
      %v739 = vunpack.c.l.b16 %v323
      %v740 = vunpack.c.l.b16 %v324
      %v741 = vunpack.c.l.b16 %v325
      %v742 = vunpack.c.l.b16 %v326
      %v743 = vunpack.c.l.b16 %v327
      %v744 = vunpack.c.l.b16 %v328
      %v745 = vunpack.c.l.b16 %v329
      %v746 = vunpack.c.l.b16 %v330
      %v747 = vunpack.c.l.b16 %v331
      %v748 = vunpack.c.l.b16 %v332
      %v749 = vunpack.c.l.b16 %v333
      %v750 = vunpack.c.l.b16 %v334
      %v751 = vunpack.c.l.b16 %v335
      %v752 = vunpack.c.l.b16 %v336
      %v753 = vunpack.c.l.b16 %v337
      %v754 = vunpack.c.l.b16 %v338
      %v755 = vunpack.c.l.b16 %v339
      %v756 = vunpack.c.l.b16 %v340
      %v757 = vunpack.c.l.b16 %v341
      %v758 = vunpack.c.l.b16 %v342
      %v759 = vunpack.c.l.b16 %v343
      %v760 = vunpack.c.l.b16 %v344
      %v761 = vunpack.c.l.b16 %v345
      %v762 = vunpack.c.l.b16 %v346
      %v763 = vunpack.c.l.b16 %v347
      %v764 = vunpack.c.l.b16 %v348
      %v765 = vunpack.c.l.b16 %v349
      %v766 = vunpack.c.l.b16 %v350
      %v767 = vunpack.c.l.b16 %v351
      %v768 = vunpack.c.l.b16 %v352
      %v769 = vunpack.c.l.b16 %v353
      %v770 = vunpack.c.l.b16 %v354
      %v771 = vunpack.c.l.b16 %v355
      %v772 = vunpack.c.l.b16 %v356
      %v773 = vunpack.c.l.b16 %v357
      %v774 = vpack.c.b16 %v647, %v646
      %v775 = vpack.c.b16 %v649, %v648
      %v776 = vpack.c.b16 %v651, %v650
      %v777 = vpack.c.b16 %v653, %v652
      %v778 = vpack.c.b16 %v655, %v654
      %v779 = vpack.c.b16 %v657, %v656
      %v780 = vpack.c.b16 %v659, %v658
      %v781 = vpack.c.b16 %v661, %v660
      %v782 = vpack.c.b16 %v663, %v662
      %v783 = vpack.c.b16 %v665, %v664
      %v784 = vpack.c.b16 %v667, %v666
      %v785 = vpack.c.b16 %v669, %v668
      %v786 = vpack.c.b16 %v671, %v670
      %v787 = vpack.c.b16 %v673, %v672
      %v788 = vpack.c.b16 %v675, %v674
      %v789 = vpack.c.b16 %v677, %v676
      %v790 = vpack.c.b16 %v679, %v678
      %v791 = vpack.c.b16 %v681, %v680
      %v792 = vpack.c.b16 %v683, %v682
      %v793 = vpack.c.b16 %v685, %v684
      %v794 = vpack.c.b16 %v687, %v686
      %v795 = vpack.c.b16 %v689, %v688
      %v796 = vpack.c.b16 %v691, %v690
      %v797 = vpack.c.b16 %v693, %v692
      %v798 = vpack.c.b16 %v695, %v694
      %v799 = vpack.c.b16 %v697, %v696
      %v800 = vpack.c.b16 %v699, %v698
      %v801 = vpack.c.b16 %v701, %v700
      %v802 = vpack.c.b16 %v703, %v702
      %v803 = vpack.c.b16 %v705, %v704
      %v804 = vpack.c.b16 %v707, %v706
      %v805 = vpack.c.b16 %v709, %v708
      %v806 = vpack.c.b16 %v711, %v710
      %v807 = vpack.c.b16 %v713, %v712
      %v808 = vpack.c.b16 %v715, %v714
      %v809 = vpack.c.b16 %v717, %v716
      %v810 = vpack.c.b16 %v719, %v718
      %v811 = vpack.c.b16 %v721, %v720
      %v812 = vpack.c.b16 %v723, %v722
      %v813 = vpack.c.b16 %v725, %v724
      %v814 = vpack.c.b16 %v727, %v726
      %v815 = vpack.c.b16 %v729, %v728
      %v816 = vpack.c.b16 %v731, %v730
      %v817 = vpack.c.b16 %v733, %v732
      %v818 = vpack.c.b16 %v735, %v734
      %v819 = vpack.c.b16 %v737, %v736
      %v820 = vpack.c.b16 %v739, %v738
      %v821 = vpack.c.b16 %v741, %v740
      %v822 = vpack.c.b16 %v743, %v742
      %v823 = vpack.c.b16 %v745, %v744
      %v824 = vpack.c.b16 %v747, %v746
      %v825 = vpack.c.b16 %v749, %v748
      %v826 = vpack.c.b16 %v751, %v750
      %v827 = vpack.c.b16 %v753, %v752
      %v828 = vpack.c.b16 %v755, %v754
      %v829 = vpack.c.b16 %v757, %v756
      %v830 = vpack.c.b16 %v759, %v758
      %v831 = vpack.c.b16 %v761, %v760
      %v832 = vpack.c.b16 %v763, %v762
      %v833 = vpack.c.b16 %v765, %v764
      %v834 = vpack.c.b16 %v767, %v766
      %v835 = vpack.c.b16 %v769, %v768
      %v836 = vpack.c.b16 %v771, %v770
      %v837 = vpack.c.b16 %v773, %v772
      %902 = vmatpush.bf16.msra.mxu0 %v781
      %903 = vmatpush.bf16.msra.mxu0 %v780
      %904 = vmatpush.bf16.msra.mxu0 %v779
      %905 = vmatpush.bf16.msra.mxu0 %v778
      %906 = vmatpush.bf16.msra.mxu0 %v777
      %907 = vmatpush.bf16.msra.mxu0 %v776
      %908 = vmatpush.bf16.msra.mxu0 %v775
      %909 = vmatpush.bf16.msra.mxu0 %v774
      %910 = vmatmul.bf16.gmra.mxu0 %v454
      %v911 = vpop.f32.mrf.mxu0
      %v912 = vadd.f32 0.0, %v911
      %v913 = vpop.f32.mrf.mxu0
      %v914 = vadd.f32 0.0, %v913
      %915 = vmatmul.bf16.gmra.mxu0 %v462
      %v916 = vpop.f32.mrf.mxu0
      %v917 = vadd.f32 0.0, %v916
      %v918 = vpop.f32.mrf.mxu0
      %v919 = vadd.f32 0.0, %v918
      %920 = vmatmul.bf16.gmra.mxu0 %v470
      %v921 = vpop.f32.mrf.mxu0
      %v922 = vadd.f32 0.0, %v921
      %v923 = vpop.f32.mrf.mxu0
      %v924 = vadd.f32 0.0, %v923
      %925 = vmatmul.bf16.gmra.mxu0 %v478
      %v926 = vpop.f32.mrf.mxu0
      %v927 = vadd.f32 0.0, %v926
      %v928 = vpop.f32.mrf.mxu0
      %v929 = vadd.f32 0.0, %v928
      %930 = vdwg.mxu0
      %931 = vmatpush.bf16.msra.mxu0 %v789
      %932 = vmatpush.bf16.msra.mxu0 %v788
      %933 = vmatpush.bf16.msra.mxu0 %v787
      %934 = vmatpush.bf16.msra.mxu0 %v786
      %935 = vmatpush.bf16.msra.mxu0 %v785
      %936 = vmatpush.bf16.msra.mxu0 %v784
      %937 = vmatpush.bf16.msra.mxu0 %v783
      %938 = vmatpush.bf16.msra.mxu0 %v782
      %939 = vmatmul.bf16.gmra.mxu0 %v455
      %v940 = vpop.f32.mrf.mxu0
      %v941 = vadd.f32 %v912, %v940
      %v942 = vpop.f32.mrf.mxu0
      %v943 = vadd.f32 %v914, %v942
      %944 = vmatmul.bf16.gmra.mxu0 %v463
      %v945 = vpop.f32.mrf.mxu0
      %v946 = vadd.f32 %v917, %v945
      %v947 = vpop.f32.mrf.mxu0
      %v948 = vadd.f32 %v919, %v947
      %949 = vmatmul.bf16.gmra.mxu0 %v471
      %v950 = vpop.f32.mrf.mxu0
      %v951 = vadd.f32 %v922, %v950
      %v952 = vpop.f32.mrf.mxu0
      %v953 = vadd.f32 %v924, %v952
      %954 = vmatmul.bf16.gmra.mxu0 %v479
      %v955 = vpop.f32.mrf.mxu0
      %v956 = vadd.f32 %v927, %v955
      %v957 = vpop.f32.mrf.mxu0
      %v958 = vadd.f32 %v929, %v957
      %959 = vdwg.mxu0
      %960 = vmatpush.bf16.msra.mxu0 %v797
      %961 = vmatpush.bf16.msra.mxu0 %v796
      %962 = vmatpush.bf16.msra.mxu0 %v795
      %963 = vmatpush.bf16.msra.mxu0 %v794
      %964 = vmatpush.bf16.msra.mxu0 %v793
      %965 = vmatpush.bf16.msra.mxu0 %v792
      %966 = vmatpush.bf16.msra.mxu0 %v791
      %967 = vmatpush.bf16.msra.mxu0 %v790
      %968 = vmatmul.bf16.gmra.mxu0 %v456
      %v969 = vpop.f32.mrf.mxu0
      %v970 = vadd.f32 %v941, %v969
      %v971 = vpop.f32.mrf.mxu0
      %v972 = vadd.f32 %v943, %v971
      %973 = vmatmul.bf16.gmra.mxu0 %v464
      %v974 = vpop.f32.mrf.mxu0
      %v975 = vadd.f32 %v946, %v974
      %v976 = vpop.f32.mrf.mxu0
      %v977 = vadd.f32 %v948, %v976
      %978 = vmatmul.bf16.gmra.mxu0 %v472
      %v979 = vpop.f32.mrf.mxu0
      %v980 = vadd.f32 %v951, %v979
      %v981 = vpop.f32.mrf.mxu0
      %v982 = vadd.f32 %v953, %v981
      %983 = vmatmul.bf16.gmra.mxu0 %v480
      %v984 = vpop.f32.mrf.mxu0
      %v985 = vadd.f32 %v956, %v984
      %v986 = vpop.f32.mrf.mxu0
      %v987 = vadd.f32 %v958, %v986
      %988 = vdwg.mxu0
      %989 = vmatpush.bf16.msra.mxu0 %v805
      %990 = vmatpush.bf16.msra.mxu0 %v804
      %991 = vmatpush.bf16.msra.mxu0 %v803
      %992 = vmatpush.bf16.msra.mxu0 %v802
      %993 = vmatpush.bf16.msra.mxu0 %v801
      %994 = vmatpush.bf16.msra.mxu0 %v800
      %995 = vmatpush.bf16.msra.mxu0 %v799
      %996 = vmatpush.bf16.msra.mxu0 %v798
      %997 = vmatmul.bf16.gmra.mxu0 %v457
      %v998 = vpop.f32.mrf.mxu0
      %v999 = vadd.f32 %v970, %v998
      %v1000 = vpop.f32.mrf.mxu0
      %v1001 = vadd.f32 %v972, %v1000
      %1002 = vmatmul.bf16.gmra.mxu0 %v465
      %v1003 = vpop.f32.mrf.mxu0
      %v1004 = vadd.f32 %v975, %v1003
      %v1005 = vpop.f32.mrf.mxu0
      %v1006 = vadd.f32 %v977, %v1005
      %1007 = vmatmul.bf16.gmra.mxu0 %v473
      %v1008 = vpop.f32.mrf.mxu0
      %v1009 = vadd.f32 %v980, %v1008
      %v1010 = vpop.f32.mrf.mxu0
      %v1011 = vadd.f32 %v982, %v1010
      %1012 = vmatmul.bf16.gmra.mxu0 %v481
      %v1013 = vpop.f32.mrf.mxu0
      %v1014 = vadd.f32 %v985, %v1013
      %v1015 = vpop.f32.mrf.mxu0
      %v1016 = vadd.f32 %v987, %v1015
      %1017 = vdwg.mxu0
      %1018 = vmatpush.bf16.msra.mxu0 %v813
      %1019 = vmatpush.bf16.msra.mxu0 %v812
      %1020 = vmatpush.bf16.msra.mxu0 %v811
      %1021 = vmatpush.bf16.msra.mxu0 %v810
      %1022 = vmatpush.bf16.msra.mxu0 %v809
      %1023 = vmatpush.bf16.msra.mxu0 %v808
      %1024 = vmatpush.bf16.msra.mxu0 %v807
      %1025 = vmatpush.bf16.msra.mxu0 %v806
      %1026 = vmatmul.bf16.gmra.mxu0 %v458
      %v1027 = vpop.f32.mrf.mxu0
      %v1028 = vadd.f32 %v999, %v1027
      %v1029 = vpop.f32.mrf.mxu0
      %v1030 = vadd.f32 %v1001, %v1029
      %1031 = vmatmul.bf16.gmra.mxu0 %v466
      %v1032 = vpop.f32.mrf.mxu0
      %v1033 = vadd.f32 %v1004, %v1032
      %v1034 = vpop.f32.mrf.mxu0
      %v1035 = vadd.f32 %v1006, %v1034
      %1036 = vmatmul.bf16.gmra.mxu0 %v474
      %v1037 = vpop.f32.mrf.mxu0
      %v1038 = vadd.f32 %v1009, %v1037
      %v1039 = vpop.f32.mrf.mxu0
      %v1040 = vadd.f32 %v1011, %v1039
      %1041 = vmatmul.bf16.gmra.mxu0 %v482
      %v1042 = vpop.f32.mrf.mxu0
      %v1043 = vadd.f32 %v1014, %v1042
      %v1044 = vpop.f32.mrf.mxu0
      %v1045 = vadd.f32 %v1016, %v1044
      %1046 = vdwg.mxu0
      %1047 = vmatpush.bf16.msra.mxu0 %v821
      %1048 = vmatpush.bf16.msra.mxu0 %v820
      %1049 = vmatpush.bf16.msra.mxu0 %v819
      %1050 = vmatpush.bf16.msra.mxu0 %v818
      %1051 = vmatpush.bf16.msra.mxu0 %v817
      %1052 = vmatpush.bf16.msra.mxu0 %v816
      %1053 = vmatpush.bf16.msra.mxu0 %v815
      %1054 = vmatpush.bf16.msra.mxu0 %v814
      %1055 = vmatmul.bf16.gmra.mxu0 %v459
      %v1056 = vpop.f32.mrf.mxu0
      %v1057 = vadd.f32 %v1028, %v1056
      %v1058 = vpop.f32.mrf.mxu0
      %v1059 = vadd.f32 %v1030, %v1058
      %1060 = vmatmul.bf16.gmra.mxu0 %v467
      %v1061 = vpop.f32.mrf.mxu0
      %v1062 = vadd.f32 %v1033, %v1061
      %v1063 = vpop.f32.mrf.mxu0
      %v1064 = vadd.f32 %v1035, %v1063
      %1065 = vmatmul.bf16.gmra.mxu0 %v475
      %v1066 = vpop.f32.mrf.mxu0
      %v1067 = vadd.f32 %v1038, %v1066
      %v1068 = vpop.f32.mrf.mxu0
      %v1069 = vadd.f32 %v1040, %v1068
      %1070 = vmatmul.bf16.gmra.mxu0 %v483
      %v1071 = vpop.f32.mrf.mxu0
      %v1072 = vadd.f32 %v1043, %v1071
      %v1073 = vpop.f32.mrf.mxu0
      %v1074 = vadd.f32 %v1045, %v1073
      %1075 = vdwg.mxu0
      %1076 = vmatpush.bf16.msra.mxu0 %v829
      %1077 = vmatpush.bf16.msra.mxu0 %v828
      %1078 = vmatpush.bf16.msra.mxu0 %v827
      %1079 = vmatpush.bf16.msra.mxu0 %v826
      %1080 = vmatpush.bf16.msra.mxu0 %v825
      %1081 = vmatpush.bf16.msra.mxu0 %v824
      %1082 = vmatpush.bf16.msra.mxu0 %v823
      %1083 = vmatpush.bf16.msra.mxu0 %v822
      %1084 = vmatmul.bf16.gmra.mxu0 %v460
      %v1085 = vpop.f32.mrf.mxu0
      %v1086 = vadd.f32 %v1057, %v1085
      %v1087 = vpop.f32.mrf.mxu0
      %v1088 = vadd.f32 %v1059, %v1087
      %1089 = vmatmul.bf16.gmra.mxu0 %v468
      %v1090 = vpop.f32.mrf.mxu0
      %v1091 = vadd.f32 %v1062, %v1090
      %v1092 = vpop.f32.mrf.mxu0
      %v1093 = vadd.f32 %v1064, %v1092
      %1094 = vmatmul.bf16.gmra.mxu0 %v476
      %v1095 = vpop.f32.mrf.mxu0
      %v1096 = vadd.f32 %v1067, %v1095
      %v1097 = vpop.f32.mrf.mxu0
      %v1098 = vadd.f32 %v1069, %v1097
      %1099 = vmatmul.bf16.gmra.mxu0 %v484
      %v1100 = vpop.f32.mrf.mxu0
      %v1101 = vadd.f32 %v1072, %v1100
      %v1102 = vpop.f32.mrf.mxu0
      %v1103 = vadd.f32 %v1074, %v1102
      %1104 = vdwg.mxu0
      %1105 = vmatpush.bf16.msra.mxu0 %v837
      %1106 = vmatpush.bf16.msra.mxu0 %v836
      %1107 = vmatpush.bf16.msra.mxu0 %v835
      %1108 = vmatpush.bf16.msra.mxu0 %v834
      %1109 = vmatpush.bf16.msra.mxu0 %v833
      %1110 = vmatpush.bf16.msra.mxu0 %v832
      %1111 = vmatpush.bf16.msra.mxu0 %v831
      %1112 = vmatpush.bf16.msra.mxu0 %v830
      %1113 = vmatmul.bf16.gmra.mxu0 %v461
      %v1114 = vpop.f32.mrf.mxu0
      %v1115 = vadd.f32 %v1086, %v1114
      %v1116 = vpop.f32.mrf.mxu0
      %v1117 = vadd.f32 %v1088, %v1116
      %1118 = vmatmul.bf16.gmra.mxu0 %v469
      %v1119 = vpop.f32.mrf.mxu0
      %v1120 = vadd.f32 %v1091, %v1119
      %v1121 = vpop.f32.mrf.mxu0
      %v1122 = vadd.f32 %v1093, %v1121
      %1123 = vmatmul.bf16.gmra.mxu0 %v477
      %v1124 = vpop.f32.mrf.mxu0
      %v1125 = vadd.f32 %v1096, %v1124
      %v1126 = vpop.f32.mrf.mxu0
      %v1127 = vadd.f32 %v1098, %v1126
      %1128 = vmatmul.bf16.gmra.mxu0 %v485
      %v1129 = vpop.f32.mrf.mxu0
      %v1130 = vadd.f32 %v1101, %v1129
      %v1131 = vpop.f32.mrf.mxu0
      %v1132 = vadd.f32 %v1103, %v1131
      %1133 = vdwg.mxu0
      %v1134 = vadd.f32 %v1115, %v1117
      %v1135 = vadd.f32 %v1134, %v1120
      %v1136 = vadd.f32 %v1135, %v1122
      %v1137 = vadd.f32 %v1136, %v1125
      %v1138 = vadd.f32 %v1137, %v1127
      %v1139 = vadd.f32 %v1138, %v1130
      %v1140 = vadd.f32 %v1139, %v1132
      %v1141 = vrot.slane %v1140, 4
      %v1142 = vadd.f32 %v1140, %v1141
      %v1143 = vrot.slane %v1142, 2
      %v1144 = vadd.f32 %v1142, %v1143
      %v1145 = vrot.slane %v1144, 1
      %v1146 = vadd.f32 %v1144, %v1145
      %v1147 = vrcp.pop 64.0
      %v1148 = vmul.f32 64.0, %v1147
      %v1149 = vsub.f32 1.0, %v1148
      %v1150 = vmul.f32 %v1147, %v1149
      %v1151 = vadd.f32 %v1147, %v1150
      %vm1152 = vweird.f32 %v1147
      %v1153 = vsel %vm1152, %v1147, %v1151
      %v1154 = vmul.f32 %v1146, %v1153
      %v1155 = vsub.f32 %v1115, %v1154
      %v1156 = vsub.f32 %v1117, %v1154
      %v1157 = vsub.f32 %v1120, %v1154
      %v1158 = vsub.f32 %v1122, %v1154
      %v1159 = vsub.f32 %v1125, %v1154
      %v1160 = vsub.f32 %v1127, %v1154
      %v1161 = vsub.f32 %v1130, %v1154
      %v1162 = vsub.f32 %v1132, %v1154
      %v1163 = vmul.f32 %v1155, %v1155
      %v1164 = vmul.f32 %v1156, %v1156
      %v1165 = vmul.f32 %v1157, %v1157
      %v1166 = vmul.f32 %v1158, %v1158
      %v1167 = vmul.f32 %v1159, %v1159
      %v1168 = vmul.f32 %v1160, %v1160
      %v1169 = vmul.f32 %v1161, %v1161
      %v1170 = vmul.f32 %v1162, %v1162
      %v1171 = vadd.f32 %v1163, %v1164
      %v1172 = vadd.f32 %v1171, %v1165
      %v1173 = vadd.f32 %v1172, %v1166
      %v1174 = vadd.f32 %v1173, %v1167
      %v1175 = vadd.f32 %v1174, %v1168
      %v1176 = vadd.f32 %v1175, %v1169
      %v1177 = vadd.f32 %v1176, %v1170
      %v1178 = vrot.slane %v1177, 4
      %v1179 = vadd.f32 %v1177, %v1178
      %v1180 = vrot.slane %v1179, 2
      %v1181 = vadd.f32 %v1179, %v1180
      %v1182 = vrot.slane %v1181, 1
      %v1183 = vadd.f32 %v1181, %v1182
      %v1184 = vmul.f32 %v1183, %v1153
      %v1185 = vadd.f32 %v1184, 1e-05
      %v1186 = vrsqrt.pop %v1185
      %v1187 = vmul.f32 %v1186, %v1185
      %v1188 = vmul.f32 %v1187, %v1186
      %v1189 = vmul.f32 0.5, %v1188
      %v1190 = vsub.f32 1.5, %v1189
      %v1191 = vmul.f32 %v1186, %v1190
      %vm1192 = vweird.f32 %v1185
      %vm1193 = vweird.f32 %v1186
      %vm1194 = vmor %vm1192, %vm1193
      %v1195 = vsel %vm1194, %v1186, %v1191
      %v1196 = vmul.f32 %v1155, %v1195
      %v1197 = vmul.f32 %v1156, %v1195
      %v1198 = vmul.f32 %v1157, %v1195
      %v1199 = vmul.f32 %v1158, %v1195
      %v1200 = vmul.f32 %v1159, %v1195
      %v1201 = vmul.f32 %v1160, %v1195
      %v1202 = vmul.f32 %v1161, %v1195
      %v1203 = vmul.f32 %v1162, %v1195
      %v1204 = vld [vmem:[%s2] sm:$0x1]
      %v1206 = vperm.slane %v1204, 0
      %v1208 = vmul.f32 %v1196, %v1206
      %v1209 = vmul.f32 %v1197, %v1206
      %v1210 = vmul.f32 %v1198, %v1206
      %v1211 = vmul.f32 %v1199, %v1206
      %v1212 = vmul.f32 %v1200, %v1206
      %v1213 = vmul.f32 %v1201, %v1206
      %v1214 = vmul.f32 %v1202, %v1206
      %v1215 = vmul.f32 %v1203, %v1206
      %v1216 = vld [vmem:[%s3] sm:$0x1]
      %v1218 = vperm.slane %v1216, 0
      %v1220 = vadd.f32 %v1208, %v1218
      %v1221 = vadd.f32 %v1209, %v1218
      %v1222 = vadd.f32 %v1210, %v1218
      %v1223 = vadd.f32 %v1211, %v1218
      %v1224 = vadd.f32 %v1212, %v1218
      %v1225 = vadd.f32 %v1213, %v1218
      %v1226 = vadd.f32 %v1214, %v1218
      %v1227 = vadd.f32 %v1215, %v1218
      %vm1228 = vcmp.gt.f32.partialorder %v1220, 0.0
      %vm1229 = vcmp.gt.f32.partialorder %v1221, 0.0
      %vm1230 = vcmp.gt.f32.partialorder %v1222, 0.0
      %vm1231 = vcmp.gt.f32.partialorder %v1223, 0.0
      %vm1232 = vcmp.gt.f32.partialorder %v1224, 0.0
      %vm1233 = vcmp.gt.f32.partialorder %v1225, 0.0
      %vm1234 = vcmp.gt.f32.partialorder %v1226, 0.0
      %vm1235 = vcmp.gt.f32.partialorder %v1227, 0.0
      %v1236 = vmul.f32 %v1220, 0.2
      %v1237 = vmul.f32 %v1221, 0.2
      %v1238 = vmul.f32 %v1222, 0.2
      %v1239 = vmul.f32 %v1223, 0.2
      %v1240 = vmul.f32 %v1224, 0.2
      %v1241 = vmul.f32 %v1225, 0.2
      %v1242 = vmul.f32 %v1226, 0.2
      %v1243 = vmul.f32 %v1227, 0.2
      %v1244 = vsel %vm1228, %v1220, %v1236
      %v1245 = vsel %vm1229, %v1221, %v1237
      %v1246 = vsel %vm1230, %v1222, %v1238
      %v1247 = vsel %vm1231, %v1223, %v1239
      %v1248 = vsel %vm1232, %v1224, %v1240
      %v1249 = vsel %vm1233, %v1225, %v1241
      %v1250 = vsel %vm1234, %v1226, %v1242
      %v1251 = vsel %vm1235, %v1227, %v1243
      %v1252 = vpack.c.bf16 %v1244, %v1244
      %v1253 = vpack.c.bf16 %v1245, %v1245
      %v1254 = vpack.c.bf16 %v1246, %v1246
      %v1255 = vpack.c.bf16 %v1247, %v1247
      %v1256 = vpack.c.bf16 %v1248, %v1248
      %v1257 = vpack.c.bf16 %v1249, %v1249
      %v1258 = vpack.c.bf16 %v1250, %v1250
      %v1259 = vpack.c.bf16 %v1251, %v1251
      %1260 = vst [vmem:[%s197] sm:$0xf] %v1252
      %1261 = vst [vmem:[%s197 + $0x4] sm:$0xf] %v1253
      %1262 = vst [vmem:[%s197 + $0x8] sm:$0xf] %v1254
      %1263 = vst [vmem:[%s197 + $0xc] sm:$0xf] %v1255
      %1264 = vst [vmem:[%s197 + $0x10] sm:$0xf] %v1256
      %1265 = vst [vmem:[%s197 + $0x14] sm:$0xf] %v1257
      %1266 = vst [vmem:[%s197 + $0x18] sm:$0xf] %v1258
      %1267 = vst [vmem:[%s197 + $0x1c] sm:$0xf] %v1259
      %p1268 = scmp.lt.s32.totalorder %s15, 1
      %s1269 = scalar_select %p1268, %s15, 1
      %s1270 = smul.addr %s1269, 8
      %s1271 = smul.addr %s1270, 4
      %s1272 = scalar_lea.vmem %s4, %s1271
      // Predicated region
      $region37: #{discriminator_forward.4} parent=35 // pred_check
        %p1273 = pneg %p122
      $region38: #{discriminator_forward.4} parent=35 // pred_check_branch
        %1275 = sbr.rel (%p1273) target = $region40
      $region39: #{discriminator_forward.4} parent=35 // pred_region
        _
      $region40: #{discriminator_forward.4} parent=35 // pred_fallthru
        _
    $region36: #{discriminator_forward.4} parent=5 // pred_fallthru
      _
    %p1276 = scmp.le.s32.totalorder 2, %s10
    // Predicated region
    $region41: #{discriminator_forward.4} parent=5 // pred_check
      %p1277 = pneg %p1276
    $region42: #{discriminator_forward.4} parent=5 // pred_check_branch
      %1279 = sbr.rel (%p1277) target = $region44
    $region43: #{discriminator_forward.4} parent=5 // pred_region
      %s1280 = ssub.s32 %s10, 2
      // Predicated region
      $region45: #{discriminator_forward.4} parent=43 // pred_check
        %p1281 = pneg %p128
      $region46: #{discriminator_forward.4} parent=43 // pred_check_branch
        %1283 = sbr.rel (%p1281) target = $region48
      $region47: #{discriminator_forward.4} parent=43 // pred_region
        %p1284 = scmp.lt.s32.totalorder %s16, 1
        %s1285 = scalar_select %p1284, %s16, 1
        %s1286 = smul.addr %s1285, 8
        %s1287 = smul.addr %s1286, 4
        %s1288 = scalar_lea.vmem %s4, %s1287
      $region48: #{discriminator_forward.4} parent=43 // pred_fallthru
        _
    $region44: #{discriminator_forward.4} parent=5 // pred_fallthru
      _
  $region6: #{discriminator_forward.4} parent=0 // loop_footer
    %s14 = sadd.s32 1, %s10
  $region7: #{discriminator_forward.4} parent=0 // loop_footer_branch
    %9 = sbr.rel target = $region3
  $region8: #{discriminator_forward.4} parent=0 // loop_exit
    _

// kernel: discriminator_forward.5
$region0: #{discriminator_forward.5}
  #allocation0 [shape = 'u32[]', space=smem, size = 0x4, offset = 0x4, fixed_abs, tag = 'smem constant byte address 0x4 - core index']
  #allocation1 [shape = 'u32[72,128]{1,0:T(1,128)}', space=vmem, size = 0x9000, scoped, tag = 'internal scratch']
  %s0 = inlined_call_operand.vmem [shape: bf16[2,16,2048], index: 0, kind: input, shape index: {}]
  %s1 = inlined_call_operand.vmem [shape: bf16[2048,256], index: 1, kind: input, shape index: {}]
  %s2 = inlined_call_operand.vmem [shape: f32[1,256], index: 2, kind: input, shape index: {}]
  %s3 = inlined_call_operand.vmem [shape: f32[1,256], index: 3, kind: input, shape index: {}]
  %s4 = inlined_call_operand.vmem [shape: f32[16,256], index: 4, kind: input, shape index: {}]
  %s5 = inlined_call_operand.vmem [shape: f32[1,128], index: 5, kind: input, shape index: {}]
  %s6 = inlined_call_operand.vmem [shape: f32[2,8,128], index: 6, kind: output, shape index: {}]
  %s7 = sld [smem:[#allocation0]]
  $region57: #{discriminator_forward.5} parent=0
    _
  %s9 = ssub.s32 1, %s7
  %s10 = scalar_select 0, %s9, %s7
  loop: start=0, step=1, limit=4
  $region2: #{discriminator_forward.5} parent=0 // loop_pre_header
    _
  $region3: #{discriminator_forward.5} parent=0 // loop_header
    %s12 = sphi 0, %s16
    %p13 = scmp.ge.s32.totalorder %s12, 4
    %s22 = sphi 0, %s24
    %s25 = sphi 0, %s22
    %s26 = sphi 0, %s25
    %s42 = sphi 0, %s26
    %s46 = sphi 0, %s46
    %s48 = sphi 0, %s46
    %s49 = sphi 0, %s48
    %s63 = sphi 0, %s49
    %s67 = sphi 0, %s67
    %s69 = sphi 0, %s67
    %s70 = sphi 0, %s69
    %s84 = sphi 0, %s70
    %s88 = sphi 0, %s88
    %s90 = sphi 0, %s88
    %s91 = sphi 0, %s90
    %s105 = sphi 0, %s91
    %s109 = sphi 0, %s109
    %s111 = sphi 0, %s109
    %s112 = sphi 0, %s111
    %s126 = sphi 0, %s112
    %s130 = sphi 0, %s130
    %s132 = sphi 0, %s130
    %s133 = sphi 0, %s132
    %s147 = sphi 0, %s133
    %s153 = sphi 0, %s155
    %s156 = sphi 0, %s153
    %s157 = sphi 0, %s156
    %s173 = sphi 0, %s157
  $region4: #{discriminator_forward.5} parent=0 // loop_header_branch
    %15 = sbr.rel (%p13) target = $region8
  $region5: #{discriminator_forward.5} parent=0 // loop_body
    %s17 = ssub.s32 %s12, 1
    %s18 = ssub.s32 %s12, 2
    %s19 = sadd.s32 %s12, 1
    %s20 = ssub.s32 %s12, %s19
    %p21 = scmp.eq.s32.totalorder %s20, 0
    %s23 = sadd.s32 %s22, 1
    %s24 = scalar_select %p21, %s22, %s23
    %p27 = pneg %p21
    %p28 = scmp.eq.s32.totalorder %s12, 1
    %p29 = por %p27, %p28
    %p30 = scmp.ne.s32.totalorder %s22, %s25
    %p31 = scmp.eq.s32.totalorder %s12, 0
    %p32 = por %p30, %p31
    %p33 = scmp.ne.s32.totalorder %s22, %s25
    %p34 = scmp.eq.s32.totalorder %s17, 1
    %p35 = por %p33, %p34
    %p36 = scmp.ne.s32.totalorder %s25, %s26
    %p37 = scmp.eq.s32.totalorder %s17, 0
    %p38 = por %p36, %p37
    %p39 = scmp.ne.s32.totalorder %s25, %s26
    %p40 = scmp.eq.s32.totalorder %s18, 1
    %p41 = por %p39, %p40
    %p43 = scmp.ne.s32.totalorder %s26, %s42
    %p44 = scmp.eq.s32.totalorder %s18, 0
    %p45 = por %p43, %p44
    %s47 = sadd.s32 %s46, 1
    %p50 = scmp.eq.s32.totalorder %s12, 1
    %p51 = scmp.ne.s32.totalorder %s46, %s48
    %p52 = scmp.eq.s32.totalorder %s12, 0
    %p53 = por %p51, %p52
    %p54 = scmp.ne.s32.totalorder %s46, %s48
    %p55 = scmp.eq.s32.totalorder %s17, 1
    %p56 = por %p54, %p55
    %p57 = scmp.ne.s32.totalorder %s48, %s49
    %p58 = scmp.eq.s32.totalorder %s17, 0
    %p59 = por %p57, %p58
    %p60 = scmp.ne.s32.totalorder %s48, %s49
    %p61 = scmp.eq.s32.totalorder %s18, 1
    %p62 = por %p60, %p61
    %p64 = scmp.ne.s32.totalorder %s49, %s63
    %p65 = scmp.eq.s32.totalorder %s18, 0
    %p66 = por %p64, %p65
    %s68 = sadd.s32 %s67, 1
    %p71 = scmp.eq.s32.totalorder %s12, 1
    %p72 = scmp.ne.s32.totalorder %s67, %s69
    %p73 = scmp.eq.s32.totalorder %s12, 0
    %p74 = por %p72, %p73
    %p75 = scmp.ne.s32.totalorder %s67, %s69
    %p76 = scmp.eq.s32.totalorder %s17, 1
    %p77 = por %p75, %p76
    %p78 = scmp.ne.s32.totalorder %s69, %s70
    %p79 = scmp.eq.s32.totalorder %s17, 0
    %p80 = por %p78, %p79
    %p81 = scmp.ne.s32.totalorder %s69, %s70
    %p82 = scmp.eq.s32.totalorder %s18, 1
    %p83 = por %p81, %p82
    %p85 = scmp.ne.s32.totalorder %s70, %s84
    %p86 = scmp.eq.s32.totalorder %s18, 0
    %p87 = por %p85, %p86
    %s89 = sadd.s32 %s88, 1
    %p92 = scmp.eq.s32.totalorder %s12, 1
    %p93 = scmp.ne.s32.totalorder %s88, %s90
    %p94 = scmp.eq.s32.totalorder %s12, 0
    %p95 = por %p93, %p94
    %p96 = scmp.ne.s32.totalorder %s88, %s90
    %p97 = scmp.eq.s32.totalorder %s17, 1
    %p98 = por %p96, %p97
    %p99 = scmp.ne.s32.totalorder %s90, %s91
    %p100 = scmp.eq.s32.totalorder %s17, 0
    %p101 = por %p99, %p100
    %p102 = scmp.ne.s32.totalorder %s90, %s91
    %p103 = scmp.eq.s32.totalorder %s18, 1
    %p104 = por %p102, %p103
    %p106 = scmp.ne.s32.totalorder %s91, %s105
    %p107 = scmp.eq.s32.totalorder %s18, 0
    %p108 = por %p106, %p107
    %s110 = sadd.s32 %s109, 1
    %p113 = scmp.eq.s32.totalorder %s12, 1
    %p114 = scmp.ne.s32.totalorder %s109, %s111
    %p115 = scmp.eq.s32.totalorder %s12, 0
    %p116 = por %p114, %p115
    %p117 = scmp.ne.s32.totalorder %s109, %s111
    %p118 = scmp.eq.s32.totalorder %s17, 1
    %p119 = por %p117, %p118
    %p120 = scmp.ne.s32.totalorder %s111, %s112
    %p121 = scmp.eq.s32.totalorder %s17, 0
    %p122 = por %p120, %p121
    %p123 = scmp.ne.s32.totalorder %s111, %s112
    %p124 = scmp.eq.s32.totalorder %s18, 1
    %p125 = por %p123, %p124
    %p127 = scmp.ne.s32.totalorder %s112, %s126
    %p128 = scmp.eq.s32.totalorder %s18, 0
    %p129 = por %p127, %p128
    %s131 = sadd.s32 %s130, 1
    %p134 = scmp.eq.s32.totalorder %s12, 1
    %p135 = scmp.ne.s32.totalorder %s130, %s132
    %p136 = scmp.eq.s32.totalorder %s12, 0
    %p137 = por %p135, %p136
    %p138 = scmp.ne.s32.totalorder %s130, %s132
    %p139 = scmp.eq.s32.totalorder %s17, 1
    %p140 = por %p138, %p139
    %p141 = scmp.ne.s32.totalorder %s132, %s133
    %p142 = scmp.eq.s32.totalorder %s17, 0
    %p143 = por %p141, %p142
    %p144 = scmp.ne.s32.totalorder %s132, %s133
    %p145 = scmp.eq.s32.totalorder %s18, 1
    %p146 = por %p144, %p145
    %p148 = scmp.ne.s32.totalorder %s133, %s147
    %p149 = scmp.eq.s32.totalorder %s18, 0
    %p150 = por %p148, %p149
    %s151 = ssub.s32 %s12, %s19
    %p152 = scmp.eq.s32.totalorder %s151, 0
    %s154 = sadd.s32 %s153, 1
    %s155 = scalar_select %p152, %s153, %s154
    %p158 = pneg %p152
    %p159 = scmp.eq.s32.totalorder %s12, 1
    %p160 = por %p158, %p159
    %p161 = scmp.ne.s32.totalorder %s153, %s156
    %p162 = scmp.eq.s32.totalorder %s12, 0
    %p163 = por %p161, %p162
    %p164 = scmp.ne.s32.totalorder %s153, %s156
    %p165 = scmp.eq.s32.totalorder %s17, 1
    %p166 = por %p164, %p165
    %p167 = scmp.ne.s32.totalorder %s156, %s157
    %p168 = scmp.eq.s32.totalorder %s17, 0
    %p169 = por %p167, %p168
    %p170 = scmp.ne.s32.totalorder %s156, %s157
    %p171 = scmp.eq.s32.totalorder %s18, 1
    %p172 = por %p170, %p171
    %p174 = scmp.ne.s32.totalorder %s157, %s173
    %p175 = scmp.eq.s32.totalorder %s18, 0
    %p176 = por %p174, %p175
    %p177 = scmp.le.s32.totalorder 1, %s12
    %p178 = scmp.lt.s32.totalorder %s12, 3
    %p179 = pnand %p177, %p178
    %p180 = pneg %p179
    // Predicated region
    $region9: #{discriminator_forward.5} parent=5 // pred_check
      _
    $region10: #{discriminator_forward.5} parent=5 // pred_check_branch
      %182 = sbr.rel (%p179) target = $region12
    $region11: #{discriminator_forward.5} parent=5 // pred_region
      %s183 = ssub.s32 %s12, 1
      // Predicated region
      $region13: #{discriminator_forward.5} parent=11 // pred_check
        %p184 = pneg %p59
      $region14: #{discriminator_forward.5} parent=11 // pred_check_branch
        %186 = sbr.rel (%p184) target = $region16
      $region15: #{discriminator_forward.5} parent=11 // pred_region
        _
      $region16: #{discriminator_forward.5} parent=11 // pred_fallthru
        _
      // Predicated region
      $region17: #{discriminator_forward.5} parent=11 // pred_check
        %p187 = pneg %p80
      $region18: #{discriminator_forward.5} parent=11 // pred_check_branch
        %189 = sbr.rel (%p187) target = $region20
      $region19: #{discriminator_forward.5} parent=11 // pred_region
        _
      $region20: #{discriminator_forward.5} parent=11 // pred_fallthru
        _
      // Predicated region
      $region21: #{discriminator_forward.5} parent=11 // pred_check
        %p190 = pneg %p101
      $region22: #{discriminator_forward.5} parent=11 // pred_check_branch
        %192 = sbr.rel (%p190) target = $region24
      $region23: #{discriminator_forward.5} parent=11 // pred_region
        _
      $region24: #{discriminator_forward.5} parent=11 // pred_fallthru
        _
      // Predicated region
      $region25: #{discriminator_forward.5} parent=11 // pred_check
        %p193 = pneg %p122
      $region26: #{discriminator_forward.5} parent=11 // pred_check_branch
        %195 = sbr.rel (%p193) target = $region28
      $region27: #{discriminator_forward.5} parent=11 // pred_region
        _
      $region28: #{discriminator_forward.5} parent=11 // pred_fallthru
        _
      // Predicated region
      $region29: #{discriminator_forward.5} parent=11 // pred_check
        %p196 = pneg %p143
      $region30: #{discriminator_forward.5} parent=11 // pred_check_branch
        %198 = sbr.rel (%p196) target = $region32
      $region31: #{discriminator_forward.5} parent=11 // pred_region
        _
      $region32: #{discriminator_forward.5} parent=11 // pred_fallthru
        _
    $region12: #{discriminator_forward.5} parent=5 // pred_fallthru
      _
    %p199 = scmp.lt.s32.totalorder %s12, 2
    // Predicated region
    $region33: #{discriminator_forward.5} parent=5 // pred_check
      %p200 = pneg %p199
    $region34: #{discriminator_forward.5} parent=5 // pred_check_branch
      %202 = sbr.rel (%p200) target = $region36
    $region35: #{discriminator_forward.5} parent=5 // pred_region
      // Predicated region
      $region37: #{discriminator_forward.5} parent=35 // pred_check
        %p203 = pneg %p32
      $region38: #{discriminator_forward.5} parent=35 // pred_check_branch
        %205 = sbr.rel (%p203) target = $region40
      $region39: #{discriminator_forward.5} parent=35 // pred_region
        %p206 = scmp.lt.s32.totalorder %s12, 1
        %s207 = scalar_select %p206, %s12, 1
        %s208 = smul.addr %s207, 32
        %s209 = smul.addr %s208, 4
        %s210 = scalar_lea.vmem %s0, %s209
      $region40: #{discriminator_forward.5} parent=35 // pred_fallthru
        _
    $region36: #{discriminator_forward.5} parent=5 // pred_fallthru
      _
    %p211 = scmp.le.s32.totalorder 1, %s12
    %p212 = scmp.lt.s32.totalorder %s12, 3
    %p213 = pnand %p211, %p212
    %p214 = pneg %p213
    // Predicated region
    $region41: #{discriminator_forward.5} parent=5 // pred_check
      _
    $region42: #{discriminator_forward.5} parent=5 // pred_check_branch
      %216 = sbr.rel (%p213) target = $region44
    $region43: #{discriminator_forward.5} parent=5 // pred_region
      %s217 = ssub.s32 %s12, 1
      %p218 = scmp.lt.s32.totalorder %s17, 1
      %s219 = scalar_select %p218, %s17, 1
      %s220 = smul.addr %s219, 32
      %s221 = smul.addr %s220, 4
      %s222 = scalar_lea.vmem %s0, %s221
      %p223 = pneg %p38
      %p224 = pneg %p35
      %p225 = pneg %p59
      %p226 = pneg %p56
      %p227 = pneg %p80
      %p228 = pneg %p77
      %p229 = pneg %p101
      %p230 = pneg %p98
      %p231 = pneg %p122
      %p232 = pneg %p119
      %p233 = pneg %p143
      %p234 = pneg %p140
      %p235 = pneg %p169
      %p236 = pneg %p166
      %p237 = scmp.lt.s32.totalorder %s17, 1
      %s238 = scalar_select %p237, %s17, 1
      %s239 = smul.addr %s238, 8
      %s240 = scalar_lea.vmem %s6, %s239
      %p241 = scmp.lt.s32.totalorder %s17, 1
      %s242 = scalar_select %p241, %s17, 1
      %s243 = smul.addr %s242, 32
      %s244 = smul.addr %s243, 4
      %s245 = scalar_lea.vmem %s0, %s244
      %p246 = scmp.lt.s32.totalorder %s17, 1
      %s247 = scalar_select %p246, %s17, 1
      %s248 = smul.addr %s247, 8
      %s249 = scalar_lea.vmem %s6, %s248
      %v250 = vld [vmem:[%s245] sm:$0xff]
      %v251 = vld [vmem:[%s245 + $0x8] sm:$0xff]
      %v252 = vld [vmem:[%s245 + $0x10] sm:$0xff]
      %v253 = vld [vmem:[%s245 + $0x18] sm:$0xff]
      %v254 = vld [vmem:[%s245 + $0x20] sm:$0xff]
      %v255 = vld [vmem:[%s245 + $0x28] sm:$0xff]
      %v256 = vld [vmem:[%s245 + $0x30] sm:$0xff]
      %v257 = vld [vmem:[%s245 + $0x38] sm:$0xff]
      %v258 = vld [vmem:[%s245 + $0x40] sm:$0xff]
      %v259 = vld [vmem:[%s245 + $0x48] sm:$0xff]
      %v260 = vld [vmem:[%s245 + $0x50] sm:$0xff]
      %v261 = vld [vmem:[%s245 + $0x58] sm:$0xff]
      %v262 = vld [vmem:[%s245 + $0x60] sm:$0xff]
      %v263 = vld [vmem:[%s245 + $0x68] sm:$0xff]
      %v264 = vld [vmem:[%s245 + $0x70] sm:$0xff]
      %v265 = vld [vmem:[%s245 + $0x78] sm:$0xff]
      %v266 = vld [vmem:[%s1] sm:$0xff]
      %v267 = vld [vmem:[%s1 + $0x8] sm:$0xff]
      %v268 = vld [vmem:[%s1 + $0x10] sm:$0xff]
      %v269 = vld [vmem:[%s1 + $0x18] sm:$0xff]
      %v270 = vld [vmem:[%s1 + $0x20] sm:$0xff]
      %v271 = vld [vmem:[%s1 + $0x28] sm:$0xff]
      %v272 = vld [vmem:[%s1 + $0x30] sm:$0xff]
      %v273 = vld [vmem:[%s1 + $0x38] sm:$0xff]
      %v274 = vld [vmem:[%s1 + $0x40] sm:$0xff]
      %v275 = vld [vmem:[%s1 + $0x48] sm:$0xff]
      %v276 = vld [vmem:[%s1 + $0x50] sm:$0xff]
      %v277 = vld [vmem:[%s1 + $0x58] sm:$0xff]
      %v278 = vld [vmem:[%s1 + $0x60] sm:$0xff]
      %v279 = vld [vmem:[%s1 + $0x68] sm:$0xff]
      %v280 = vld [vmem:[%s1 + $0x70] sm:$0xff]
      %v281 = vld [vmem:[%s1 + $0x78] sm:$0xff]
      %v282 = vld [vmem:[%s1 + $0x80] sm:$0xff]
      %v283 = vld [vmem:[%s1 + $0x88] sm:$0xff]
      %v284 = vld [vmem:[%s1 + $0x90] sm:$0xff]
      %v285 = vld [vmem:[%s1 + $0x98] sm:$0xff]
      %v286 = vld [vmem:[%s1 + $0xa0] sm:$0xff]
      %v287 = vld [vmem:[%s1 + $0xa8] sm:$0xff]
      %v288 = vld [vmem:[%s1 + $0xb0] sm:$0xff]
      %v289 = vld [vmem:[%s1 + $0xb8] sm:$0xff]
      %v290 = vld [vmem:[%s1 + $0xc0] sm:$0xff]
      %v291 = vld [vmem:[%s1 + $0xc8] sm:$0xff]
      %v292 = vld [vmem:[%s1 + $0xd0] sm:$0xff]
      %v293 = vld [vmem:[%s1 + $0xd8] sm:$0xff]
      %v294 = vld [vmem:[%s1 + $0xe0] sm:$0xff]
      %v295 = vld [vmem:[%s1 + $0xe8] sm:$0xff]
      %v296 = vld [vmem:[%s1 + $0xf0] sm:$0xff]
      %v297 = vld [vmem:[%s1 + $0xf8] sm:$0xff]
      %v298 = vld [vmem:[%s1 + $0x100] sm:$0xff]
      %v299 = vld [vmem:[%s1 + $0x108] sm:$0xff]
      %v300 = vld [vmem:[%s1 + $0x110] sm:$0xff]
      %v301 = vld [vmem:[%s1 + $0x118] sm:$0xff]
      %v302 = vld [vmem:[%s1 + $0x120] sm:$0xff]
      %v303 = vld [vmem:[%s1 + $0x128] sm:$0xff]
      %v304 = vld [vmem:[%s1 + $0x130] sm:$0xff]
      %v305 = vld [vmem:[%s1 + $0x138] sm:$0xff]
      %v306 = vld [vmem:[%s1 + $0x140] sm:$0xff]
      %v307 = vld [vmem:[%s1 + $0x148] sm:$0xff]
      %v308 = vld [vmem:[%s1 + $0x150] sm:$0xff]
      %v309 = vld [vmem:[%s1 + $0x158] sm:$0xff]
      %v310 = vld [vmem:[%s1 + $0x160] sm:$0xff]
      %v311 = vld [vmem:[%s1 + $0x168] sm:$0xff]
      %v312 = vld [vmem:[%s1 + $0x170] sm:$0xff]
      %v313 = vld [vmem:[%s1 + $0x178] sm:$0xff]
      %v314 = vld [vmem:[%s1 + $0x180] sm:$0xff]
      %v315 = vld [vmem:[%s1 + $0x188] sm:$0xff]
      %v316 = vld [vmem:[%s1 + $0x190] sm:$0xff]
      %v317 = vld [vmem:[%s1 + $0x198] sm:$0xff]
      %v318 = vld [vmem:[%s1 + $0x1a0] sm:$0xff]
      %v319 = vld [vmem:[%s1 + $0x1a8] sm:$0xff]
      %v320 = vld [vmem:[%s1 + $0x1b0] sm:$0xff]
      %v321 = vld [vmem:[%s1 + $0x1b8] sm:$0xff]
      %v322 = vld [vmem:[%s1 + $0x1c0] sm:$0xff]
      %v323 = vld [vmem:[%s1 + $0x1c8] sm:$0xff]
      %v324 = vld [vmem:[%s1 + $0x1d0] sm:$0xff]
      %v325 = vld [vmem:[%s1 + $0x1d8] sm:$0xff]
      %v326 = vld [vmem:[%s1 + $0x1e0] sm:$0xff]
      %v327 = vld [vmem:[%s1 + $0x1e8] sm:$0xff]
      %v328 = vld [vmem:[%s1 + $0x1f0] sm:$0xff]
      %v329 = vld [vmem:[%s1 + $0x1f8] sm:$0xff]
      %v330 = vld [vmem:[%s1 + $0x200] sm:$0xff]
      %v331 = vld [vmem:[%s1 + $0x208] sm:$0xff]
      %v332 = vld [vmem:[%s1 + $0x210] sm:$0xff]
      %v333 = vld [vmem:[%s1 + $0x218] sm:$0xff]
      %v334 = vld [vmem:[%s1 + $0x220] sm:$0xff]
      %v335 = vld [vmem:[%s1 + $0x228] sm:$0xff]
      %v336 = vld [vmem:[%s1 + $0x230] sm:$0xff]
      %v337 = vld [vmem:[%s1 + $0x238] sm:$0xff]
      %v338 = vld [vmem:[%s1 + $0x240] sm:$0xff]
      %v339 = vld [vmem:[%s1 + $0x248] sm:$0xff]
      %v340 = vld [vmem:[%s1 + $0x250] sm:$0xff]
      %v341 = vld [vmem:[%s1 + $0x258] sm:$0xff]
      %v342 = vld [vmem:[%s1 + $0x260] sm:$0xff]
      %v343 = vld [vmem:[%s1 + $0x268] sm:$0xff]
      %v344 = vld [vmem:[%s1 + $0x270] sm:$0xff]
      %v345 = vld [vmem:[%s1 + $0x278] sm:$0xff]
      %v346 = vld [vmem:[%s1 + $0x280] sm:$0xff]
      %v347 = vld [vmem:[%s1 + $0x288] sm:$0xff]
      %v348 = vld [vmem:[%s1 + $0x290] sm:$0xff]
      %v349 = vld [vmem:[%s1 + $0x298] sm:$0xff]
      %v350 = vld [vmem:[%s1 + $0x2a0] sm:$0xff]
      %v351 = vld [vmem:[%s1 + $0x2a8] sm:$0xff]
      %v352 = vld [vmem:[%s1 + $0x2b0] sm:$0xff]
      %v353 = vld [vmem:[%s1 + $0x2b8] sm:$0xff]
      %v354 = vld [vmem:[%s1 + $0x2c0] sm:$0xff]
      %v355 = vld [vmem:[%s1 + $0x2c8] sm:$0xff]
      %v356 = vld [vmem:[%s1 + $0x2d0] sm:$0xff]
      %v357 = vld [vmem:[%s1 + $0x2d8] sm:$0xff]
      %v358 = vld [vmem:[%s1 + $0x2e0] sm:$0xff]
      %v359 = vld [vmem:[%s1 + $0x2e8] sm:$0xff]
      %v360 = vld [vmem:[%s1 + $0x2f0] sm:$0xff]
      %v361 = vld [vmem:[%s1 + $0x2f8] sm:$0xff]
      %v362 = vld [vmem:[%s1 + $0x300] sm:$0xff]
      %v363 = vld [vmem:[%s1 + $0x308] sm:$0xff]
      %v364 = vld [vmem:[%s1 + $0x310] sm:$0xff]
      %v365 = vld [vmem:[%s1 + $0x318] sm:$0xff]
      %v366 = vld [vmem:[%s1 + $0x320] sm:$0xff]
      %v367 = vld [vmem:[%s1 + $0x328] sm:$0xff]
      %v368 = vld [vmem:[%s1 + $0x330] sm:$0xff]
      %v369 = vld [vmem:[%s1 + $0x338] sm:$0xff]
      %v370 = vld [vmem:[%s1 + $0x340] sm:$0xff]
      %v371 = vld [vmem:[%s1 + $0x348] sm:$0xff]
      %v372 = vld [vmem:[%s1 + $0x350] sm:$0xff]
      %v373 = vld [vmem:[%s1 + $0x358] sm:$0xff]
      %v374 = vld [vmem:[%s1 + $0x360] sm:$0xff]
      %v375 = vld [vmem:[%s1 + $0x368] sm:$0xff]
      %v376 = vld [vmem:[%s1 + $0x370] sm:$0xff]
      %v377 = vld [vmem:[%s1 + $0x378] sm:$0xff]
      %v378 = vld [vmem:[%s1 + $0x380] sm:$0xff]
      %v379 = vld [vmem:[%s1 + $0x388] sm:$0xff]
      %v380 = vld [vmem:[%s1 + $0x390] sm:$0xff]
      %v381 = vld [vmem:[%s1 + $0x398] sm:$0xff]
      %v382 = vld [vmem:[%s1 + $0x3a0] sm:$0xff]
      %v383 = vld [vmem:[%s1 + $0x3a8] sm:$0xff]
      %v384 = vld [vmem:[%s1 + $0x3b0] sm:$0xff]
      %v385 = vld [vmem:[%s1 + $0x3b8] sm:$0xff]
      %v386 = vld [vmem:[%s1 + $0x3c0] sm:$0xff]
      %v387 = vld [vmem:[%s1 + $0x3c8] sm:$0xff]
      %v388 = vld [vmem:[%s1 + $0x3d0] sm:$0xff]
      %v389 = vld [vmem:[%s1 + $0x3d8] sm:$0xff]
      %v390 = vld [vmem:[%s1 + $0x3e0] sm:$0xff]
      %v391 = vld [vmem:[%s1 + $0x3e8] sm:$0xff]
      %v392 = vld [vmem:[%s1 + $0x3f0] sm:$0xff]
      %v393 = vld [vmem:[%s1 + $0x3f8] sm:$0xff]
      %v394 = vld [vmem:[%s1 + $0x400] sm:$0xff]
      %v395 = vld [vmem:[%s1 + $0x408] sm:$0xff]
      %v396 = vld [vmem:[%s1 + $0x410] sm:$0xff]
      %v397 = vld [vmem:[%s1 + $0x418] sm:$0xff]
      %v398 = vld [vmem:[%s1 + $0x420] sm:$0xff]
      %v399 = vld [vmem:[%s1 + $0x428] sm:$0xff]
      %v400 = vld [vmem:[%s1 + $0x430] sm:$0xff]
      %v401 = vld [vmem:[%s1 + $0x438] sm:$0xff]
      %v402 = vld [vmem:[%s1 + $0x440] sm:$0xff]
      %v403 = vld [vmem:[%s1 + $0x448] sm:$0xff]
      %v404 = vld [vmem:[%s1 + $0x450] sm:$0xff]
      %v405 = vld [vmem:[%s1 + $0x458] sm:$0xff]
      %v406 = vld [vmem:[%s1 + $0x460] sm:$0xff]
      %v407 = vld [vmem:[%s1 + $0x468] sm:$0xff]
      %v408 = vld [vmem:[%s1 + $0x470] sm:$0xff]
      %v409 = vld [vmem:[%s1 + $0x478] sm:$0xff]
      %v410 = vld [vmem:[%s1 + $0x480] sm:$0xff]
      %v411 = vld [vmem:[%s1 + $0x488] sm:$0xff]
      %v412 = vld [vmem:[%s1 + $0x490] sm:$0xff]
      %v413 = vld [vmem:[%s1 + $0x498] sm:$0xff]
      %v414 = vld [vmem:[%s1 + $0x4a0] sm:$0xff]
      %v415 = vld [vmem:[%s1 + $0x4a8] sm:$0xff]
      %v416 = vld [vmem:[%s1 + $0x4b0] sm:$0xff]
      %v417 = vld [vmem:[%s1 + $0x4b8] sm:$0xff]
      %v418 = vld [vmem:[%s1 + $0x4c0] sm:$0xff]
      %v419 = vld [vmem:[%s1 + $0x4c8] sm:$0xff]
      %v420 = vld [vmem:[%s1 + $0x4d0] sm:$0xff]
      %v421 = vld [vmem:[%s1 + $0x4d8] sm:$0xff]
      %v422 = vld [vmem:[%s1 + $0x4e0] sm:$0xff]
      %v423 = vld [vmem:[%s1 + $0x4e8] sm:$0xff]
      %v424 = vld [vmem:[%s1 + $0x4f0] sm:$0xff]
      %v425 = vld [vmem:[%s1 + $0x4f8] sm:$0xff]
      %v426 = vld [vmem:[%s1 + $0x500] sm:$0xff]
      %v427 = vld [vmem:[%s1 + $0x508] sm:$0xff]
      %v428 = vld [vmem:[%s1 + $0x510] sm:$0xff]
      %v429 = vld [vmem:[%s1 + $0x518] sm:$0xff]
      %v430 = vld [vmem:[%s1 + $0x520] sm:$0xff]
      %v431 = vld [vmem:[%s1 + $0x528] sm:$0xff]
      %v432 = vld [vmem:[%s1 + $0x530] sm:$0xff]
      %v433 = vld [vmem:[%s1 + $0x538] sm:$0xff]
      %v434 = vld [vmem:[%s1 + $0x540] sm:$0xff]
      %v435 = vld [vmem:[%s1 + $0x548] sm:$0xff]
      %v436 = vld [vmem:[%s1 + $0x550] sm:$0xff]
      %v437 = vld [vmem:[%s1 + $0x558] sm:$0xff]
      %v438 = vld [vmem:[%s1 + $0x560] sm:$0xff]
      %v439 = vld [vmem:[%s1 + $0x568] sm:$0xff]
      %v440 = vld [vmem:[%s1 + $0x570] sm:$0xff]
      %v441 = vld [vmem:[%s1 + $0x578] sm:$0xff]
      %v442 = vld [vmem:[%s1 + $0x580] sm:$0xff]
      %v443 = vld [vmem:[%s1 + $0x588] sm:$0xff]
      %v444 = vld [vmem:[%s1 + $0x590] sm:$0xff]
      %v445 = vld [vmem:[%s1 + $0x598] sm:$0xff]
      %v446 = vld [vmem:[%s1 + $0x5a0] sm:$0xff]
      %v447 = vld [vmem:[%s1 + $0x5a8] sm:$0xff]
      %v448 = vld [vmem:[%s1 + $0x5b0] sm:$0xff]
      %v449 = vld [vmem:[%s1 + $0x5b8] sm:$0xff]
      %v450 = vld [vmem:[%s1 + $0x5c0] sm:$0xff]
      %v451 = vld [vmem:[%s1 + $0x5c8] sm:$0xff]
      %v452 = vld [vmem:[%s1 + $0x5d0] sm:$0xff]
      %v453 = vld [vmem:[%s1 + $0x5d8] sm:$0xff]
      %v454 = vld [vmem:[%s1 + $0x5e0] sm:$0xff]
      %v455 = vld [vmem:[%s1 + $0x5e8] sm:$0xff]
      %v456 = vld [vmem:[%s1 + $0x5f0] sm:$0xff]
      %v457 = vld [vmem:[%s1 + $0x5f8] sm:$0xff]
      %v458 = vld [vmem:[%s1 + $0x600] sm:$0xff]
      %v459 = vld [vmem:[%s1 + $0x608] sm:$0xff]
      %v460 = vld [vmem:[%s1 + $0x610] sm:$0xff]
      %v461 = vld [vmem:[%s1 + $0x618] sm:$0xff]
      %v462 = vld [vmem:[%s1 + $0x620] sm:$0xff]
      %v463 = vld [vmem:[%s1 + $0x628] sm:$0xff]
      %v464 = vld [vmem:[%s1 + $0x630] sm:$0xff]
      %v465 = vld [vmem:[%s1 + $0x638] sm:$0xff]
      %v466 = vld [vmem:[%s1 + $0x640] sm:$0xff]
      %v467 = vld [vmem:[%s1 + $0x648] sm:$0xff]
      %v468 = vld [vmem:[%s1 + $0x650] sm:$0xff]
      %v469 = vld [vmem:[%s1 + $0x658] sm:$0xff]
      %v470 = vld [vmem:[%s1 + $0x660] sm:$0xff]
      %v471 = vld [vmem:[%s1 + $0x668] sm:$0xff]
      %v472 = vld [vmem:[%s1 + $0x670] sm:$0xff]
      %v473 = vld [vmem:[%s1 + $0x678] sm:$0xff]
      %v474 = vld [vmem:[%s1 + $0x680] sm:$0xff]
      %v475 = vld [vmem:[%s1 + $0x688] sm:$0xff]
      %v476 = vld [vmem:[%s1 + $0x690] sm:$0xff]
      %v477 = vld [vmem:[%s1 + $0x698] sm:$0xff]
      %v478 = vld [vmem:[%s1 + $0x6a0] sm:$0xff]
      %v479 = vld [vmem:[%s1 + $0x6a8] sm:$0xff]
      %v480 = vld [vmem:[%s1 + $0x6b0] sm:$0xff]
      %v481 = vld [vmem:[%s1 + $0x6b8] sm:$0xff]
      %v482 = vld [vmem:[%s1 + $0x6c0] sm:$0xff]
      %v483 = vld [vmem:[%s1 + $0x6c8] sm:$0xff]
      %v484 = vld [vmem:[%s1 + $0x6d0] sm:$0xff]
      %v485 = vld [vmem:[%s1 + $0x6d8] sm:$0xff]
      %v486 = vld [vmem:[%s1 + $0x6e0] sm:$0xff]
      %v487 = vld [vmem:[%s1 + $0x6e8] sm:$0xff]
      %v488 = vld [vmem:[%s1 + $0x6f0] sm:$0xff]
      %v489 = vld [vmem:[%s1 + $0x6f8] sm:$0xff]
      %v490 = vld [vmem:[%s1 + $0x700] sm:$0xff]
      %v491 = vld [vmem:[%s1 + $0x708] sm:$0xff]
      %v492 = vld [vmem:[%s1 + $0x710] sm:$0xff]
      %v493 = vld [vmem:[%s1 + $0x718] sm:$0xff]
      %v494 = vld [vmem:[%s1 + $0x720] sm:$0xff]
      %v495 = vld [vmem:[%s1 + $0x728] sm:$0xff]
      %v496 = vld [vmem:[%s1 + $0x730] sm:$0xff]
      %v497 = vld [vmem:[%s1 + $0x738] sm:$0xff]
      %v498 = vld [vmem:[%s1 + $0x740] sm:$0xff]
      %v499 = vld [vmem:[%s1 + $0x748] sm:$0xff]
      %v500 = vld [vmem:[%s1 + $0x750] sm:$0xff]
      %v501 = vld [vmem:[%s1 + $0x758] sm:$0xff]
      %v502 = vld [vmem:[%s1 + $0x760] sm:$0xff]
      %v503 = vld [vmem:[%s1 + $0x768] sm:$0xff]
      %v504 = vld [vmem:[%s1 + $0x770] sm:$0xff]
      %v505 = vld [vmem:[%s1 + $0x778] sm:$0xff]
      %v506 = vld [vmem:[%s1 + $0x780] sm:$0xff]
      %v507 = vld [vmem:[%s1 + $0x788] sm:$0xff]
      %v508 = vld [vmem:[%s1 + $0x790] sm:$0xff]
      %v509 = vld [vmem:[%s1 + $0x798] sm:$0xff]
      %v510 = vld [vmem:[%s1 + $0x7a0] sm:$0xff]
      %v511 = vld [vmem:[%s1 + $0x7a8] sm:$0xff]
      %v512 = vld [vmem:[%s1 + $0x7b0] sm:$0xff]
      %v513 = vld [vmem:[%s1 + $0x7b8] sm:$0xff]
      %v514 = vld [vmem:[%s1 + $0x7c0] sm:$0xff]
      %v515 = vld [vmem:[%s1 + $0x7c8] sm:$0xff]
      %v516 = vld [vmem:[%s1 + $0x7d0] sm:$0xff]
      %v517 = vld [vmem:[%s1 + $0x7d8] sm:$0xff]
      %v518 = vld [vmem:[%s1 + $0x7e0] sm:$0xff]
      %v519 = vld [vmem:[%s1 + $0x7e8] sm:$0xff]
      %v520 = vld [vmem:[%s1 + $0x7f0] sm:$0xff]
      %v521 = vld [vmem:[%s1 + $0x7f8] sm:$0xff]
      %v538 = vunpack.c.l.b16 %v250
      %v539 = vunpack.c.h.b16 %v250
      %v540 = vunpack.c.l.b16 %v251
      %v541 = vunpack.c.h.b16 %v251
      %v542 = vunpack.c.l.b16 %v252
      %v543 = vunpack.c.h.b16 %v252
      %v544 = vunpack.c.l.b16 %v253
      %v545 = vunpack.c.h.b16 %v253
      %v546 = vunpack.c.l.b16 %v254
      %v547 = vunpack.c.h.b16 %v254
      %v548 = vunpack.c.l.b16 %v255
      %v549 = vunpack.c.h.b16 %v255
      %v550 = vunpack.c.l.b16 %v256
      %v551 = vunpack.c.h.b16 %v256
      %v552 = vunpack.c.l.b16 %v257
      %v553 = vunpack.c.h.b16 %v257
      %v554 = vunpack.c.l.b16 %v258
      %v555 = vunpack.c.h.b16 %v258
      %v556 = vunpack.c.l.b16 %v259
      %v557 = vunpack.c.h.b16 %v259
      %v558 = vunpack.c.l.b16 %v260
      %v559 = vunpack.c.h.b16 %v260
      %v560 = vunpack.c.l.b16 %v261
      %v561 = vunpack.c.h.b16 %v261
      %v562 = vunpack.c.l.b16 %v262
      %v563 = vunpack.c.h.b16 %v262
      %v564 = vunpack.c.l.b16 %v263
      %v565 = vunpack.c.h.b16 %v263
      %v566 = vunpack.c.l.b16 %v264
      %v567 = vunpack.c.h.b16 %v264
      %v568 = vunpack.c.l.b16 %v265
      %v569 = vunpack.c.h.b16 %v265
      %v570 = vpack.c.b16 %v554, %v538
      %v571 = vpack.c.b16 %v555, %v539
      %v572 = vpack.c.b16 %v556, %v540
      %v573 = vpack.c.b16 %v557, %v541
      %v574 = vpack.c.b16 %v558, %v542
      %v575 = vpack.c.b16 %v559, %v543
      %v576 = vpack.c.b16 %v560, %v544
      %v577 = vpack.c.b16 %v561, %v545
      %v578 = vpack.c.b16 %v562, %v546
      %v579 = vpack.c.b16 %v563, %v547
      %v580 = vpack.c.b16 %v564, %v548
      %v581 = vpack.c.b16 %v565, %v549
      %v582 = vpack.c.b16 %v566, %v550
      %v583 = vpack.c.b16 %v567, %v551
      %v584 = vpack.c.b16 %v568, %v552
      %v585 = vpack.c.b16 %v569, %v553
      %v858 = vunpack.c.l.b16 %v266
      %v859 = vunpack.c.h.b16 %v266
      %v860 = vunpack.c.l.b16 %v267
      %v861 = vunpack.c.h.b16 %v267
      %v862 = vunpack.c.l.b16 %v268
      %v863 = vunpack.c.h.b16 %v268
      %v864 = vunpack.c.l.b16 %v269
      %v865 = vunpack.c.h.b16 %v269
      %v866 = vunpack.c.l.b16 %v270
      %v867 = vunpack.c.h.b16 %v270
      %v868 = vunpack.c.l.b16 %v271
      %v869 = vunpack.c.h.b16 %v271
      %v870 = vunpack.c.l.b16 %v272
      %v871 = vunpack.c.h.b16 %v272
      %v872 = vunpack.c.l.b16 %v273
      %v873 = vunpack.c.h.b16 %v273
      %v874 = vunpack.c.l.b16 %v274
      %v875 = vunpack.c.h.b16 %v274
      %v876 = vunpack.c.l.b16 %v275
      %v877 = vunpack.c.h.b16 %v275
      %v878 = vunpack.c.l.b16 %v276
      %v879 = vunpack.c.h.b16 %v276
      %v880 = vunpack.c.l.b16 %v277
      %v881 = vunpack.c.h.b16 %v277
      %v882 = vunpack.c.l.b16 %v278
      %v883 = vunpack.c.h.b16 %v278
      %v884 = vunpack.c.l.b16 %v279
      %v885 = vunpack.c.h.b16 %v279
      %v886 = vunpack.c.l.b16 %v280
      %v887 = vunpack.c.h.b16 %v280
      %v888 = vunpack.c.l.b16 %v281
      %v889 = vunpack.c.h.b16 %v281
      %v890 = vunpack.c.l.b16 %v282
      %v891 = vunpack.c.h.b16 %v282
      %v892 = vunpack.c.l.b16 %v283
      %v893 = vunpack.c.h.b16 %v283
      %v894 = vunpack.c.l.b16 %v284
      %v895 = vunpack.c.h.b16 %v284
      %v896 = vunpack.c.l.b16 %v285
      %v897 = vunpack.c.h.b16 %v285
      %v898 = vunpack.c.l.b16 %v286
      %v899 = vunpack.c.h.b16 %v286
      %v900 = vunpack.c.l.b16 %v287
      %v901 = vunpack.c.h.b16 %v287
      %v902 = vunpack.c.l.b16 %v288
      %v903 = vunpack.c.h.b16 %v288
      %v904 = vunpack.c.l.b16 %v289
      %v905 = vunpack.c.h.b16 %v289
      %v906 = vunpack.c.l.b16 %v290
      %v907 = vunpack.c.h.b16 %v290
      %v908 = vunpack.c.l.b16 %v291
      %v909 = vunpack.c.h.b16 %v291
      %v910 = vunpack.c.l.b16 %v292
      %v911 = vunpack.c.h.b16 %v292
      %v912 = vunpack.c.l.b16 %v293
      %v913 = vunpack.c.h.b16 %v293
      %v914 = vunpack.c.l.b16 %v294
      %v915 = vunpack.c.h.b16 %v294
      %v916 = vunpack.c.l.b16 %v295
      %v917 = vunpack.c.h.b16 %v295
      %v918 = vunpack.c.l.b16 %v296
      %v919 = vunpack.c.h.b16 %v296
      %v920 = vunpack.c.l.b16 %v297
      %v921 = vunpack.c.h.b16 %v297
      %v922 = vunpack.c.l.b16 %v298
      %v923 = vunpack.c.h.b16 %v298
      %v924 = vunpack.c.l.b16 %v299
      %v925 = vunpack.c.h.b16 %v299
      %v926 = vunpack.c.l.b16 %v300
      %v927 = vunpack.c.h.b16 %v300
      %v928 = vunpack.c.l.b16 %v301
      %v929 = vunpack.c.h.b16 %v301
      %v930 = vunpack.c.l.b16 %v302
      %v931 = vunpack.c.h.b16 %v302
      %v932 = vunpack.c.l.b16 %v303
      %v933 = vunpack.c.h.b16 %v303
      %v934 = vunpack.c.l.b16 %v304
      %v935 = vunpack.c.h.b16 %v304
      %v936 = vunpack.c.l.b16 %v305
      %v937 = vunpack.c.h.b16 %v305
      %v938 = vunpack.c.l.b16 %v306
      %v939 = vunpack.c.h.b16 %v306
      %v940 = vunpack.c.l.b16 %v307
      %v941 = vunpack.c.h.b16 %v307
      %v942 = vunpack.c.l.b16 %v308
      %v943 = vunpack.c.h.b16 %v308
      %v944 = vunpack.c.l.b16 %v309
      %v945 = vunpack.c.h.b16 %v309
      %v946 = vunpack.c.l.b16 %v310
      %v947 = vunpack.c.h.b16 %v310
      %v948 = vunpack.c.l.b16 %v311
      %v949 = vunpack.c.h.b16 %v311
      %v950 = vunpack.c.l.b16 %v312
      %v951 = vunpack.c.h.b16 %v312
      %v952 = vunpack.c.l.b16 %v313
      %v953 = vunpack.c.h.b16 %v313
      %v954 = vunpack.c.l.b16 %v314
      %v955 = vunpack.c.h.b16 %v314
      %v956 = vunpack.c.l.b16 %v315
      %v957 = vunpack.c.h.b16 %v315
      %v958 = vunpack.c.l.b16 %v316
      %v959 = vunpack.c.h.b16 %v316
      %v960 = vunpack.c.l.b16 %v317
      %v961 = vunpack.c.h.b16 %v317
      %v962 = vunpack.c.l.b16 %v318
      %v963 = vunpack.c.h.b16 %v318
      %v964 = vunpack.c.l.b16 %v319
      %v965 = vunpack.c.h.b16 %v319
      %v966 = vunpack.c.l.b16 %v320
      %v967 = vunpack.c.h.b16 %v320
      %v968 = vunpack.c.l.b16 %v321
      %v969 = vunpack.c.h.b16 %v321
      %v970 = vunpack.c.l.b16 %v322
      %v971 = vunpack.c.h.b16 %v322
      %v972 = vunpack.c.l.b16 %v323
      %v973 = vunpack.c.h.b16 %v323
      %v974 = vunpack.c.l.b16 %v324
      %v975 = vunpack.c.h.b16 %v324
      %v976 = vunpack.c.l.b16 %v325
      %v977 = vunpack.c.h.b16 %v325
      %v978 = vunpack.c.l.b16 %v326
      %v979 = vunpack.c.h.b16 %v326
      %v980 = vunpack.c.l.b16 %v327
      %v981 = vunpack.c.h.b16 %v327
      %v982 = vunpack.c.l.b16 %v328
      %v983 = vunpack.c.h.b16 %v328
      %v984 = vunpack.c.l.b16 %v329
      %v985 = vunpack.c.h.b16 %v329
      %v986 = vunpack.c.l.b16 %v330
      %v987 = vunpack.c.h.b16 %v330
      %v988 = vunpack.c.l.b16 %v331
      %v989 = vunpack.c.h.b16 %v331
      %v990 = vunpack.c.l.b16 %v332
      %v991 = vunpack.c.h.b16 %v332
      %v992 = vunpack.c.l.b16 %v333
      %v993 = vunpack.c.h.b16 %v333
      %v994 = vunpack.c.l.b16 %v334
      %v995 = vunpack.c.h.b16 %v334
      %v996 = vunpack.c.l.b16 %v335
      %v997 = vunpack.c.h.b16 %v335
      %v998 = vunpack.c.l.b16 %v336
      %v999 = vunpack.c.h.b16 %v336
      %v1000 = vunpack.c.l.b16 %v337
      %v1001 = vunpack.c.h.b16 %v337
      %v1002 = vunpack.c.l.b16 %v338
      %v1003 = vunpack.c.h.b16 %v338
      %v1004 = vunpack.c.l.b16 %v339
      %v1005 = vunpack.c.h.b16 %v339
      %v1006 = vunpack.c.l.b16 %v340
      %v1007 = vunpack.c.h.b16 %v340
      %v1008 = vunpack.c.l.b16 %v341
      %v1009 = vunpack.c.h.b16 %v341
      %v1010 = vunpack.c.l.b16 %v342
      %v1011 = vunpack.c.h.b16 %v342
      %v1012 = vunpack.c.l.b16 %v343
      %v1013 = vunpack.c.h.b16 %v343
      %v1014 = vunpack.c.l.b16 %v344
      %v1015 = vunpack.c.h.b16 %v344
      %v1016 = vunpack.c.l.b16 %v345
      %v1017 = vunpack.c.h.b16 %v345
      %v1018 = vunpack.c.l.b16 %v346
      %v1019 = vunpack.c.h.b16 %v346
      %v1020 = vunpack.c.l.b16 %v347
      %v1021 = vunpack.c.h.b16 %v347
      %v1022 = vunpack.c.l.b16 %v348
      %v1023 = vunpack.c.h.b16 %v348
      %v1024 = vunpack.c.l.b16 %v349
      %v1025 = vunpack.c.h.b16 %v349
      %v1026 = vunpack.c.l.b16 %v350
      %v1027 = vunpack.c.h.b16 %v350
      %v1028 = vunpack.c.l.b16 %v351
      %v1029 = vunpack.c.h.b16 %v351
      %v1030 = vunpack.c.l.b16 %v352
      %v1031 = vunpack.c.h.b16 %v352
      %v1032 = vunpack.c.l.b16 %v353
      %v1033 = vunpack.c.h.b16 %v353
      %v1034 = vunpack.c.l.b16 %v354
      %v1035 = vunpack.c.h.b16 %v354
      %v1036 = vunpack.c.l.b16 %v355
      %v1037 = vunpack.c.h.b16 %v355
      %v1038 = vunpack.c.l.b16 %v356
      %v1039 = vunpack.c.h.b16 %v356
      %v1040 = vunpack.c.l.b16 %v357
      %v1041 = vunpack.c.h.b16 %v357
      %v1042 = vunpack.c.l.b16 %v358
      %v1043 = vunpack.c.h.b16 %v358
      %v1044 = vunpack.c.l.b16 %v359
      %v1045 = vunpack.c.h.b16 %v359
      %v1046 = vunpack.c.l.b16 %v360
      %v1047 = vunpack.c.h.b16 %v360
      %v1048 = vunpack.c.l.b16 %v361
      %v1049 = vunpack.c.h.b16 %v361
      %v1050 = vunpack.c.l.b16 %v362
      %v1051 = vunpack.c.h.b16 %v362
      %v1052 = vunpack.c.l.b16 %v363
      %v1053 = vunpack.c.h.b16 %v363
      %v1054 = vunpack.c.l.b16 %v364
      %v1055 = vunpack.c.h.b16 %v364
      %v1056 = vunpack.c.l.b16 %v365
      %v1057 = vunpack.c.h.b16 %v365
      %v1058 = vunpack.c.l.b16 %v366
      %v1059 = vunpack.c.h.b16 %v366
      %v1060 = vunpack.c.l.b16 %v367
      %v1061 = vunpack.c.h.b16 %v367
      %v1062 = vunpack.c.l.b16 %v368
      %v1063 = vunpack.c.h.b16 %v368
      %v1064 = vunpack.c.l.b16 %v369
      %v1065 = vunpack.c.h.b16 %v369
      %v1066 = vunpack.c.l.b16 %v370
      %v1067 = vunpack.c.h.b16 %v370
      %v1068 = vunpack.c.l.b16 %v371
      %v1069 = vunpack.c.h.b16 %v371
      %v1070 = vunpack.c.l.b16 %v372
      %v1071 = vunpack.c.h.b16 %v372
      %v1072 = vunpack.c.l.b16 %v373
      %v1073 = vunpack.c.h.b16 %v373
      %v1074 = vunpack.c.l.b16 %v374
      %v1075 = vunpack.c.h.b16 %v374
      %v1076 = vunpack.c.l.b16 %v375
      %v1077 = vunpack.c.h.b16 %v375
      %v1078 = vunpack.c.l.b16 %v376
      %v1079 = vunpack.c.h.b16 %v376
      %v1080 = vunpack.c.l.b16 %v377
      %v1081 = vunpack.c.h.b16 %v377
      %v1082 = vunpack.c.l.b16 %v378
      %v1083 = vunpack.c.h.b16 %v378
      %v1084 = vunpack.c.l.b16 %v379
      %v1085 = vunpack.c.h.b16 %v379
      %v1086 = vunpack.c.l.b16 %v380
      %v1087 = vunpack.c.h.b16 %v380
      %v1088 = vunpack.c.l.b16 %v381
      %v1089 = vunpack.c.h.b16 %v381
      %v1090 = vunpack.c.l.b16 %v382
      %v1091 = vunpack.c.h.b16 %v382
      %v1092 = vunpack.c.l.b16 %v383
      %v1093 = vunpack.c.h.b16 %v383
      %v1094 = vunpack.c.l.b16 %v384
      %v1095 = vunpack.c.h.b16 %v384
      %v1096 = vunpack.c.l.b16 %v385
      %v1097 = vunpack.c.h.b16 %v385
      %v1098 = vunpack.c.l.b16 %v386
      %v1099 = vunpack.c.h.b16 %v386
      %v1100 = vunpack.c.l.b16 %v387
      %v1101 = vunpack.c.h.b16 %v387
      %v1102 = vunpack.c.l.b16 %v388
      %v1103 = vunpack.c.h.b16 %v388
      %v1104 = vunpack.c.l.b16 %v389
      %v1105 = vunpack.c.h.b16 %v389
      %v1106 = vunpack.c.l.b16 %v390
      %v1107 = vunpack.c.h.b16 %v390
      %v1108 = vunpack.c.l.b16 %v391
      %v1109 = vunpack.c.h.b16 %v391
      %v1110 = vunpack.c.l.b16 %v392
      %v1111 = vunpack.c.h.b16 %v392
      %v1112 = vunpack.c.l.b16 %v393
      %v1113 = vunpack.c.h.b16 %v393
      %v1114 = vunpack.c.l.b16 %v394
      %v1115 = vunpack.c.h.b16 %v394
      %v1116 = vunpack.c.l.b16 %v395
      %v1117 = vunpack.c.h.b16 %v395
      %v1118 = vunpack.c.l.b16 %v396
      %v1119 = vunpack.c.h.b16 %v396
      %v1120 = vunpack.c.l.b16 %v397
      %v1121 = vunpack.c.h.b16 %v397
      %v1122 = vunpack.c.l.b16 %v398
      %v1123 = vunpack.c.h.b16 %v398
      %v1124 = vunpack.c.l.b16 %v399
      %v1125 = vunpack.c.h.b16 %v399
      %v1126 = vunpack.c.l.b16 %v400
      %v1127 = vunpack.c.h.b16 %v400
      %v1128 = vunpack.c.l.b16 %v401
      %v1129 = vunpack.c.h.b16 %v401
      %v1130 = vunpack.c.l.b16 %v402
      %v1131 = vunpack.c.h.b16 %v402
      %v1132 = vunpack.c.l.b16 %v403
      %v1133 = vunpack.c.h.b16 %v403
      %v1134 = vunpack.c.l.b16 %v404
      %v1135 = vunpack.c.h.b16 %v404
      %v1136 = vunpack.c.l.b16 %v405
      %v1137 = vunpack.c.h.b16 %v405
      %v1138 = vunpack.c.l.b16 %v406
      %v1139 = vunpack.c.h.b16 %v406
      %v1140 = vunpack.c.l.b16 %v407
      %v1141 = vunpack.c.h.b16 %v407
      %v1142 = vunpack.c.l.b16 %v408
      %v1143 = vunpack.c.h.b16 %v408
      %v1144 = vunpack.c.l.b16 %v409
      %v1145 = vunpack.c.h.b16 %v409
      %v1146 = vunpack.c.l.b16 %v410
      %v1147 = vunpack.c.h.b16 %v410
      %v1148 = vunpack.c.l.b16 %v411
      %v1149 = vunpack.c.h.b16 %v411
      %v1150 = vunpack.c.l.b16 %v412
      %v1151 = vunpack.c.h.b16 %v412
      %v1152 = vunpack.c.l.b16 %v413
      %v1153 = vunpack.c.h.b16 %v413
      %v1154 = vunpack.c.l.b16 %v414
      %v1155 = vunpack.c.h.b16 %v414
      %v1156 = vunpack.c.l.b16 %v415
      %v1157 = vunpack.c.h.b16 %v415
      %v1158 = vunpack.c.l.b16 %v416
      %v1159 = vunpack.c.h.b16 %v416
      %v1160 = vunpack.c.l.b16 %v417
      %v1161 = vunpack.c.h.b16 %v417
      %v1162 = vunpack.c.l.b16 %v418
      %v1163 = vunpack.c.h.b16 %v418
      %v1164 = vunpack.c.l.b16 %v419
      %v1165 = vunpack.c.h.b16 %v419
      %v1166 = vunpack.c.l.b16 %v420
      %v1167 = vunpack.c.h.b16 %v420
      %v1168 = vunpack.c.l.b16 %v421
      %v1169 = vunpack.c.h.b16 %v421
      %v1170 = vunpack.c.l.b16 %v422
      %v1171 = vunpack.c.h.b16 %v422
      %v1172 = vunpack.c.l.b16 %v423
      %v1173 = vunpack.c.h.b16 %v423
      %v1174 = vunpack.c.l.b16 %v424
      %v1175 = vunpack.c.h.b16 %v424
      %v1176 = vunpack.c.l.b16 %v425
      %v1177 = vunpack.c.h.b16 %v425
      %v1178 = vunpack.c.l.b16 %v426
      %v1179 = vunpack.c.h.b16 %v426
      %v1180 = vunpack.c.l.b16 %v427
      %v1181 = vunpack.c.h.b16 %v427
      %v1182 = vunpack.c.l.b16 %v428
      %v1183 = vunpack.c.h.b16 %v428
      %v1184 = vunpack.c.l.b16 %v429
      %v1185 = vunpack.c.h.b16 %v429
      %v1186 = vunpack.c.l.b16 %v430
      %v1187 = vunpack.c.h.b16 %v430
      %v1188 = vunpack.c.l.b16 %v431
      %v1189 = vunpack.c.h.b16 %v431
      %v1190 = vunpack.c.l.b16 %v432
      %v1191 = vunpack.c.h.b16 %v432
      %v1192 = vunpack.c.l.b16 %v433
      %v1193 = vunpack.c.h.b16 %v433
      %v1194 = vunpack.c.l.b16 %v434
      %v1195 = vunpack.c.h.b16 %v434
      %v1196 = vunpack.c.l.b16 %v435
      %v1197 = vunpack.c.h.b16 %v435
      %v1198 = vunpack.c.l.b16 %v436
      %v1199 = vunpack.c.h.b16 %v436
      %v1200 = vunpack.c.l.b16 %v437
      %v1201 = vunpack.c.h.b16 %v437
      %v1202 = vunpack.c.l.b16 %v438
      %v1203 = vunpack.c.h.b16 %v438
      %v1204 = vunpack.c.l.b16 %v439
      %v1205 = vunpack.c.h.b16 %v439
      %v1206 = vunpack.c.l.b16 %v440
      %v1207 = vunpack.c.h.b16 %v440
      %v1208 = vunpack.c.l.b16 %v441
      %v1209 = vunpack.c.h.b16 %v441
      %v1210 = vunpack.c.l.b16 %v442
      %v1211 = vunpack.c.h.b16 %v442
      %v1212 = vunpack.c.l.b16 %v443
      %v1213 = vunpack.c.h.b16 %v443
      %v1214 = vunpack.c.l.b16 %v444
      %v1215 = vunpack.c.h.b16 %v444
      %v1216 = vunpack.c.l.b16 %v445
      %v1217 = vunpack.c.h.b16 %v445
      %v1218 = vunpack.c.l.b16 %v446
      %v1219 = vunpack.c.h.b16 %v446
      %v1220 = vunpack.c.l.b16 %v447
      %v1221 = vunpack.c.h.b16 %v447
      %v1222 = vunpack.c.l.b16 %v448
      %v1223 = vunpack.c.h.b16 %v448
      %v1224 = vunpack.c.l.b16 %v449
      %v1225 = vunpack.c.h.b16 %v449
      %v1226 = vunpack.c.l.b16 %v450
      %v1227 = vunpack.c.h.b16 %v450
      %v1228 = vunpack.c.l.b16 %v451
      %v1229 = vunpack.c.h.b16 %v451
      %v1230 = vunpack.c.l.b16 %v452
      %v1231 = vunpack.c.h.b16 %v452
      %v1232 = vunpack.c.l.b16 %v453
      %v1233 = vunpack.c.h.b16 %v453
      %v1234 = vunpack.c.l.b16 %v454
      %v1235 = vunpack.c.h.b16 %v454
      %v1236 = vunpack.c.l.b16 %v455
      %v1237 = vunpack.c.h.b16 %v455
      %v1238 = vunpack.c.l.b16 %v456
      %v1239 = vunpack.c.h.b16 %v456
      %v1240 = vunpack.c.l.b16 %v457
      %v1241 = vunpack.c.h.b16 %v457
      %v1242 = vunpack.c.l.b16 %v458
      %v1243 = vunpack.c.h.b16 %v458
      %v1244 = vunpack.c.l.b16 %v459
      %v1245 = vunpack.c.h.b16 %v459
      %v1246 = vunpack.c.l.b16 %v460
      %v1247 = vunpack.c.h.b16 %v460
      %v1248 = vunpack.c.l.b16 %v461
      %v1249 = vunpack.c.h.b16 %v461
      %v1250 = vunpack.c.l.b16 %v462
      %v1251 = vunpack.c.h.b16 %v462
      %v1252 = vunpack.c.l.b16 %v463
      %v1253 = vunpack.c.h.b16 %v463
      %v1254 = vunpack.c.l.b16 %v464
      %v1255 = vunpack.c.h.b16 %v464
      %v1256 = vunpack.c.l.b16 %v465
      %v1257 = vunpack.c.h.b16 %v465
      %v1258 = vunpack.c.l.b16 %v466
      %v1259 = vunpack.c.h.b16 %v466
      %v1260 = vunpack.c.l.b16 %v467
      %v1261 = vunpack.c.h.b16 %v467
      %v1262 = vunpack.c.l.b16 %v468
      %v1263 = vunpack.c.h.b16 %v468
      %v1264 = vunpack.c.l.b16 %v469
      %v1265 = vunpack.c.h.b16 %v469
      %v1266 = vunpack.c.l.b16 %v470
      %v1267 = vunpack.c.h.b16 %v470
      %v1268 = vunpack.c.l.b16 %v471
      %v1269 = vunpack.c.h.b16 %v471
      %v1270 = vunpack.c.l.b16 %v472
      %v1271 = vunpack.c.h.b16 %v472
      %v1272 = vunpack.c.l.b16 %v473
      %v1273 = vunpack.c.h.b16 %v473
      %v1274 = vunpack.c.l.b16 %v474
      %v1275 = vunpack.c.h.b16 %v474
      %v1276 = vunpack.c.l.b16 %v475
      %v1277 = vunpack.c.h.b16 %v475
      %v1278 = vunpack.c.l.b16 %v476
      %v1279 = vunpack.c.h.b16 %v476
      %v1280 = vunpack.c.l.b16 %v477
      %v1281 = vunpack.c.h.b16 %v477
      %v1282 = vunpack.c.l.b16 %v478
      %v1283 = vunpack.c.h.b16 %v478
      %v1284 = vunpack.c.l.b16 %v479
      %v1285 = vunpack.c.h.b16 %v479
      %v1286 = vunpack.c.l.b16 %v480
      %v1287 = vunpack.c.h.b16 %v480
      %v1288 = vunpack.c.l.b16 %v481
      %v1289 = vunpack.c.h.b16 %v481
      %v1290 = vunpack.c.l.b16 %v482
      %v1291 = vunpack.c.h.b16 %v482
      %v1292 = vunpack.c.l.b16 %v483
      %v1293 = vunpack.c.h.b16 %v483
      %v1294 = vunpack.c.l.b16 %v484
      %v1295 = vunpack.c.h.b16 %v484
      %v1296 = vunpack.c.l.b16 %v485
      %v1297 = vunpack.c.h.b16 %v485
      %v1298 = vunpack.c.l.b16 %v486
      %v1299 = vunpack.c.h.b16 %v486
      %v1300 = vunpack.c.l.b16 %v487
      %v1301 = vunpack.c.h.b16 %v487
      %v1302 = vunpack.c.l.b16 %v488
      %v1303 = vunpack.c.h.b16 %v488
      %v1304 = vunpack.c.l.b16 %v489
      %v1305 = vunpack.c.h.b16 %v489
      %v1306 = vunpack.c.l.b16 %v490
      %v1307 = vunpack.c.h.b16 %v490
      %v1308 = vunpack.c.l.b16 %v491
      %v1309 = vunpack.c.h.b16 %v491
      %v1310 = vunpack.c.l.b16 %v492
      %v1311 = vunpack.c.h.b16 %v492
      %v1312 = vunpack.c.l.b16 %v493
      %v1313 = vunpack.c.h.b16 %v493
      %v1314 = vunpack.c.l.b16 %v494
      %v1315 = vunpack.c.h.b16 %v494
      %v1316 = vunpack.c.l.b16 %v495
      %v1317 = vunpack.c.h.b16 %v495
      %v1318 = vunpack.c.l.b16 %v496
      %v1319 = vunpack.c.h.b16 %v496
      %v1320 = vunpack.c.l.b16 %v497
      %v1321 = vunpack.c.h.b16 %v497
      %v1322 = vunpack.c.l.b16 %v498
      %v1323 = vunpack.c.h.b16 %v498
      %v1324 = vunpack.c.l.b16 %v499
      %v1325 = vunpack.c.h.b16 %v499
      %v1326 = vunpack.c.l.b16 %v500
      %v1327 = vunpack.c.h.b16 %v500
      %v1328 = vunpack.c.l.b16 %v501
      %v1329 = vunpack.c.h.b16 %v501
      %v1330 = vunpack.c.l.b16 %v502
      %v1331 = vunpack.c.h.b16 %v502
      %v1332 = vunpack.c.l.b16 %v503
      %v1333 = vunpack.c.h.b16 %v503
      %v1334 = vunpack.c.l.b16 %v504
      %v1335 = vunpack.c.h.b16 %v504
      %v1336 = vunpack.c.l.b16 %v505
      %v1337 = vunpack.c.h.b16 %v505
      %v1338 = vunpack.c.l.b16 %v506
      %v1339 = vunpack.c.h.b16 %v506
      %v1340 = vunpack.c.l.b16 %v507
      %v1341 = vunpack.c.h.b16 %v507
      %v1342 = vunpack.c.l.b16 %v508
      %v1343 = vunpack.c.h.b16 %v508
      %v1344 = vunpack.c.l.b16 %v509
      %v1345 = vunpack.c.h.b16 %v509
      %v1346 = vunpack.c.l.b16 %v510
      %v1347 = vunpack.c.h.b16 %v510
      %v1348 = vunpack.c.l.b16 %v511
      %v1349 = vunpack.c.h.b16 %v511
      %v1350 = vunpack.c.l.b16 %v512
      %v1351 = vunpack.c.h.b16 %v512
      %v1352 = vunpack.c.l.b16 %v513
      %v1353 = vunpack.c.h.b16 %v513
      %v1354 = vunpack.c.l.b16 %v514
      %v1355 = vunpack.c.h.b16 %v514
      %v1356 = vunpack.c.l.b16 %v515
      %v1357 = vunpack.c.h.b16 %v515
      %v1358 = vunpack.c.l.b16 %v516
      %v1359 = vunpack.c.h.b16 %v516
      %v1360 = vunpack.c.l.b16 %v517
      %v1361 = vunpack.c.h.b16 %v517
      %v1362 = vunpack.c.l.b16 %v518
      %v1363 = vunpack.c.h.b16 %v518
      %v1364 = vunpack.c.l.b16 %v519
      %v1365 = vunpack.c.h.b16 %v519
      %v1366 = vunpack.c.l.b16 %v520
      %v1367 = vunpack.c.h.b16 %v520
      %v1368 = vunpack.c.l.b16 %v521
      %v1369 = vunpack.c.h.b16 %v521
      %v1370 = vpack.c.b16 %v860, %v858
      %v1371 = vpack.c.b16 %v861, %v859
      %v1372 = vpack.c.b16 %v864, %v862
      %v1373 = vpack.c.b16 %v865, %v863
      %v1374 = vpack.c.b16 %v868, %v866
      %v1375 = vpack.c.b16 %v869, %v867
      %v1376 = vpack.c.b16 %v872, %v870
      %v1377 = vpack.c.b16 %v873, %v871
      %v1378 = vpack.c.b16 %v876, %v874
      %v1379 = vpack.c.b16 %v877, %v875
      %v1380 = vpack.c.b16 %v880, %v878
      %v1381 = vpack.c.b16 %v881, %v879
      %v1382 = vpack.c.b16 %v884, %v882
      %v1383 = vpack.c.b16 %v885, %v883
      %v1384 = vpack.c.b16 %v888, %v886
      %v1385 = vpack.c.b16 %v889, %v887
      %v1386 = vpack.c.b16 %v892, %v890
      %v1387 = vpack.c.b16 %v893, %v891
      %v1388 = vpack.c.b16 %v896, %v894
      %v1389 = vpack.c.b16 %v897, %v895
      %v1390 = vpack.c.b16 %v900, %v898
      %v1391 = vpack.c.b16 %v901, %v899
      %v1392 = vpack.c.b16 %v904, %v902
      %v1393 = vpack.c.b16 %v905, %v903
      %v1394 = vpack.c.b16 %v908, %v906
      %v1395 = vpack.c.b16 %v909, %v907
      %v1396 = vpack.c.b16 %v912, %v910
      %v1397 = vpack.c.b16 %v913, %v911
      %v1398 = vpack.c.b16 %v916, %v914
      %v1399 = vpack.c.b16 %v917, %v915
      %v1400 = vpack.c.b16 %v920, %v918
      %v1401 = vpack.c.b16 %v921, %v919
      %v1402 = vpack.c.b16 %v924, %v922
      %v1403 = vpack.c.b16 %v925, %v923
      %v1404 = vpack.c.b16 %v928, %v926
      %v1405 = vpack.c.b16 %v929, %v927
      %v1406 = vpack.c.b16 %v932, %v930
      %v1407 = vpack.c.b16 %v933, %v931
      %v1408 = vpack.c.b16 %v936, %v934
      %v1409 = vpack.c.b16 %v937, %v935
      %v1410 = vpack.c.b16 %v940, %v938
      %v1411 = vpack.c.b16 %v941, %v939
      %v1412 = vpack.c.b16 %v944, %v942
      %v1413 = vpack.c.b16 %v945, %v943
      %v1414 = vpack.c.b16 %v948, %v946
      %v1415 = vpack.c.b16 %v949, %v947
      %v1416 = vpack.c.b16 %v952, %v950
      %v1417 = vpack.c.b16 %v953, %v951
      %v1418 = vpack.c.b16 %v956, %v954
      %v1419 = vpack.c.b16 %v957, %v955
      %v1420 = vpack.c.b16 %v960, %v958
      %v1421 = vpack.c.b16 %v961, %v959
      %v1422 = vpack.c.b16 %v964, %v962
      %v1423 = vpack.c.b16 %v965, %v963
      %v1424 = vpack.c.b16 %v968, %v966
      %v1425 = vpack.c.b16 %v969, %v967
      %v1426 = vpack.c.b16 %v972, %v970
      %v1427 = vpack.c.b16 %v973, %v971
      %v1428 = vpack.c.b16 %v976, %v974
      %v1429 = vpack.c.b16 %v977, %v975
      %v1430 = vpack.c.b16 %v980, %v978
      %v1431 = vpack.c.b16 %v981, %v979
      %v1432 = vpack.c.b16 %v984, %v982
      %v1433 = vpack.c.b16 %v985, %v983
      %v1434 = vpack.c.b16 %v988, %v986
      %v1435 = vpack.c.b16 %v989, %v987
      %v1436 = vpack.c.b16 %v992, %v990
      %v1437 = vpack.c.b16 %v993, %v991
      %v1438 = vpack.c.b16 %v996, %v994
      %v1439 = vpack.c.b16 %v997, %v995
      %v1440 = vpack.c.b16 %v1000, %v998
      %v1441 = vpack.c.b16 %v1001, %v999
      %v1442 = vpack.c.b16 %v1004, %v1002
      %v1443 = vpack.c.b16 %v1005, %v1003
      %v1444 = vpack.c.b16 %v1008, %v1006
      %v1445 = vpack.c.b16 %v1009, %v1007
      %v1446 = vpack.c.b16 %v1012, %v1010
      %v1447 = vpack.c.b16 %v1013, %v1011
      %v1448 = vpack.c.b16 %v1016, %v1014
      %v1449 = vpack.c.b16 %v1017, %v1015
      %v1450 = vpack.c.b16 %v1020, %v1018
      %v1451 = vpack.c.b16 %v1021, %v1019
      %v1452 = vpack.c.b16 %v1024, %v1022
      %v1453 = vpack.c.b16 %v1025, %v1023
      %v1454 = vpack.c.b16 %v1028, %v1026
      %v1455 = vpack.c.b16 %v1029, %v1027
      %v1456 = vpack.c.b16 %v1032, %v1030
      %v1457 = vpack.c.b16 %v1033, %v1031
      %v1458 = vpack.c.b16 %v1036, %v1034
      %v1459 = vpack.c.b16 %v1037, %v1035
      %v1460 = vpack.c.b16 %v1040, %v1038
      %v1461 = vpack.c.b16 %v1041, %v1039
      %v1462 = vpack.c.b16 %v1044, %v1042
      %v1463 = vpack.c.b16 %v1045, %v1043
      %v1464 = vpack.c.b16 %v1048, %v1046
      %v1465 = vpack.c.b16 %v1049, %v1047
      %v1466 = vpack.c.b16 %v1052, %v1050
      %v1467 = vpack.c.b16 %v1053, %v1051
      %v1468 = vpack.c.b16 %v1056, %v1054
      %v1469 = vpack.c.b16 %v1057, %v1055
      %v1470 = vpack.c.b16 %v1060, %v1058
      %v1471 = vpack.c.b16 %v1061, %v1059
      %v1472 = vpack.c.b16 %v1064, %v1062
      %v1473 = vpack.c.b16 %v1065, %v1063
      %v1474 = vpack.c.b16 %v1068, %v1066
      %v1475 = vpack.c.b16 %v1069, %v1067
      %v1476 = vpack.c.b16 %v1072, %v1070
      %v1477 = vpack.c.b16 %v1073, %v1071
      %v1478 = vpack.c.b16 %v1076, %v1074
      %v1479 = vpack.c.b16 %v1077, %v1075
      %v1480 = vpack.c.b16 %v1080, %v1078
      %v1481 = vpack.c.b16 %v1081, %v1079
      %v1482 = vpack.c.b16 %v1084, %v1082
      %v1483 = vpack.c.b16 %v1085, %v1083
      %v1484 = vpack.c.b16 %v1088, %v1086
      %v1485 = vpack.c.b16 %v1089, %v1087
      %v1486 = vpack.c.b16 %v1092, %v1090
      %v1487 = vpack.c.b16 %v1093, %v1091
      %v1488 = vpack.c.b16 %v1096, %v1094
      %v1489 = vpack.c.b16 %v1097, %v1095
      %v1490 = vpack.c.b16 %v1100, %v1098
      %v1491 = vpack.c.b16 %v1101, %v1099
      %v1492 = vpack.c.b16 %v1104, %v1102
      %v1493 = vpack.c.b16 %v1105, %v1103
      %v1494 = vpack.c.b16 %v1108, %v1106
      %v1495 = vpack.c.b16 %v1109, %v1107
      %v1496 = vpack.c.b16 %v1112, %v1110
      %v1497 = vpack.c.b16 %v1113, %v1111
      %v1498 = vpack.c.b16 %v1116, %v1114
      %v1499 = vpack.c.b16 %v1117, %v1115
      %v1500 = vpack.c.b16 %v1120, %v1118
      %v1501 = vpack.c.b16 %v1121, %v1119
      %v1502 = vpack.c.b16 %v1124, %v1122
      %v1503 = vpack.c.b16 %v1125, %v1123
      %v1504 = vpack.c.b16 %v1128, %v1126
      %v1505 = vpack.c.b16 %v1129, %v1127
      %v1506 = vpack.c.b16 %v1132, %v1130
      %v1507 = vpack.c.b16 %v1133, %v1131
      %v1508 = vpack.c.b16 %v1136, %v1134
      %v1509 = vpack.c.b16 %v1137, %v1135
      %v1510 = vpack.c.b16 %v1140, %v1138
      %v1511 = vpack.c.b16 %v1141, %v1139
      %v1512 = vpack.c.b16 %v1144, %v1142
      %v1513 = vpack.c.b16 %v1145, %v1143
      %v1514 = vpack.c.b16 %v1148, %v1146
      %v1515 = vpack.c.b16 %v1149, %v1147
      %v1516 = vpack.c.b16 %v1152, %v1150
      %v1517 = vpack.c.b16 %v1153, %v1151
      %v1518 = vpack.c.b16 %v1156, %v1154
      %v1519 = vpack.c.b16 %v1157, %v1155
      %v1520 = vpack.c.b16 %v1160, %v1158
      %v1521 = vpack.c.b16 %v1161, %v1159
      %v1522 = vpack.c.b16 %v1164, %v1162
      %v1523 = vpack.c.b16 %v1165, %v1163
      %v1524 = vpack.c.b16 %v1168, %v1166
      %v1525 = vpack.c.b16 %v1169, %v1167
      %v1526 = vpack.c.b16 %v1172, %v1170
      %v1527 = vpack.c.b16 %v1173, %v1171
      %v1528 = vpack.c.b16 %v1176, %v1174
      %v1529 = vpack.c.b16 %v1177, %v1175
      %v1530 = vpack.c.b16 %v1180, %v1178
      %v1531 = vpack.c.b16 %v1181, %v1179
      %v1532 = vpack.c.b16 %v1184, %v1182
      %v1533 = vpack.c.b16 %v1185, %v1183
      %v1534 = vpack.c.b16 %v1188, %v1186
      %v1535 = vpack.c.b16 %v1189, %v1187
      %v1536 = vpack.c.b16 %v1192, %v1190
      %v1537 = vpack.c.b16 %v1193, %v1191
      %v1538 = vpack.c.b16 %v1196, %v1194
      %v1539 = vpack.c.b16 %v1197, %v1195
      %v1540 = vpack.c.b16 %v1200, %v1198
      %v1541 = vpack.c.b16 %v1201, %v1199
      %v1542 = vpack.c.b16 %v1204, %v1202
      %v1543 = vpack.c.b16 %v1205, %v1203
      %v1544 = vpack.c.b16 %v1208, %v1206
      %v1545 = vpack.c.b16 %v1209, %v1207
      %v1546 = vpack.c.b16 %v1212, %v1210
      %v1547 = vpack.c.b16 %v1213, %v1211
      %v1548 = vpack.c.b16 %v1216, %v1214
      %v1549 = vpack.c.b16 %v1217, %v1215
      %v1550 = vpack.c.b16 %v1220, %v1218
      %v1551 = vpack.c.b16 %v1221, %v1219
      %v1552 = vpack.c.b16 %v1224, %v1222
      %v1553 = vpack.c.b16 %v1225, %v1223
      %v1554 = vpack.c.b16 %v1228, %v1226
      %v1555 = vpack.c.b16 %v1229, %v1227
      %v1556 = vpack.c.b16 %v1232, %v1230
      %v1557 = vpack.c.b16 %v1233, %v1231
      %v1558 = vpack.c.b16 %v1236, %v1234
      %v1559 = vpack.c.b16 %v1237, %v1235
      %v1560 = vpack.c.b16 %v1240, %v1238
      %v1561 = vpack.c.b16 %v1241, %v1239
      %v1562 = vpack.c.b16 %v1244, %v1242
      %v1563 = vpack.c.b16 %v1245, %v1243
      %v1564 = vpack.c.b16 %v1248, %v1246
      %v1565 = vpack.c.b16 %v1249, %v1247
      %v1566 = vpack.c.b16 %v1252, %v1250
      %v1567 = vpack.c.b16 %v1253, %v1251
      %v1568 = vpack.c.b16 %v1256, %v1254
      %v1569 = vpack.c.b16 %v1257, %v1255
      %v1570 = vpack.c.b16 %v1260, %v1258
      %v1571 = vpack.c.b16 %v1261, %v1259
      %v1572 = vpack.c.b16 %v1264, %v1262
      %v1573 = vpack.c.b16 %v1265, %v1263
      %v1574 = vpack.c.b16 %v1268, %v1266
      %v1575 = vpack.c.b16 %v1269, %v1267
      %v1576 = vpack.c.b16 %v1272, %v1270
      %v1577 = vpack.c.b16 %v1273, %v1271
      %v1578 = vpack.c.b16 %v1276, %v1274
      %v1579 = vpack.c.b16 %v1277, %v1275
      %v1580 = vpack.c.b16 %v1280, %v1278
      %v1581 = vpack.c.b16 %v1281, %v1279
      %v1582 = vpack.c.b16 %v1284, %v1282
      %v1583 = vpack.c.b16 %v1285, %v1283
      %v1584 = vpack.c.b16 %v1288, %v1286
      %v1585 = vpack.c.b16 %v1289, %v1287
      %v1586 = vpack.c.b16 %v1292, %v1290
      %v1587 = vpack.c.b16 %v1293, %v1291
      %v1588 = vpack.c.b16 %v1296, %v1294
      %v1589 = vpack.c.b16 %v1297, %v1295
      %v1590 = vpack.c.b16 %v1300, %v1298
      %v1591 = vpack.c.b16 %v1301, %v1299
      %v1592 = vpack.c.b16 %v1304, %v1302
      %v1593 = vpack.c.b16 %v1305, %v1303
      %v1594 = vpack.c.b16 %v1308, %v1306
      %v1595 = vpack.c.b16 %v1309, %v1307
      %v1596 = vpack.c.b16 %v1312, %v1310
      %v1597 = vpack.c.b16 %v1313, %v1311
      %v1598 = vpack.c.b16 %v1316, %v1314
      %v1599 = vpack.c.b16 %v1317, %v1315
      %v1600 = vpack.c.b16 %v1320, %v1318
      %v1601 = vpack.c.b16 %v1321, %v1319
      %v1602 = vpack.c.b16 %v1324, %v1322
      %v1603 = vpack.c.b16 %v1325, %v1323
      %v1604 = vpack.c.b16 %v1328, %v1326
      %v1605 = vpack.c.b16 %v1329, %v1327
      %v1606 = vpack.c.b16 %v1332, %v1330
      %v1607 = vpack.c.b16 %v1333, %v1331
      %v1608 = vpack.c.b16 %v1336, %v1334
      %v1609 = vpack.c.b16 %v1337, %v1335
      %v1610 = vpack.c.b16 %v1340, %v1338
      %v1611 = vpack.c.b16 %v1341, %v1339
      %v1612 = vpack.c.b16 %v1344, %v1342
      %v1613 = vpack.c.b16 %v1345, %v1343
      %v1614 = vpack.c.b16 %v1348, %v1346
      %v1615 = vpack.c.b16 %v1349, %v1347
      %v1616 = vpack.c.b16 %v1352, %v1350
      %v1617 = vpack.c.b16 %v1353, %v1351
      %v1618 = vpack.c.b16 %v1356, %v1354
      %v1619 = vpack.c.b16 %v1357, %v1355
      %v1620 = vpack.c.b16 %v1360, %v1358
      %v1621 = vpack.c.b16 %v1361, %v1359
      %v1622 = vpack.c.b16 %v1364, %v1362
      %v1623 = vpack.c.b16 %v1365, %v1363
      %v1624 = vpack.c.b16 %v1368, %v1366
      %v1625 = vpack.c.b16 %v1369, %v1367
      %1882 = vmatpush.bf16.msra.mxu0 %v1384
      %1883 = vmatpush.bf16.msra.mxu0 %v1382
      %1884 = vmatpush.bf16.msra.mxu0 %v1380
      %1885 = vmatpush.bf16.msra.mxu0 %v1378
      %1886 = vmatpush.bf16.msra.mxu0 %v1376
      %1887 = vmatpush.bf16.msra.mxu0 %v1374
      %1888 = vmatpush.bf16.msra.mxu0 %v1372
      %1889 = vmatpush.bf16.msra.mxu0 %v1370
      %1890 = vmatmul.bf16.gmra.mxu0 %v570
      %v1891 = vpop.f32.mrf.mxu0
      %v1892 = vadd.f32 0.0, %v1891
      %v1893 = vpop.f32.mrf.mxu0
      %v1894 = vadd.f32 0.0, %v1893
      %1895 = vdwg.mxu0
      %1896 = vmatpush.bf16.msra.mxu0 %v1400
      %1897 = vmatpush.bf16.msra.mxu0 %v1398
      %1898 = vmatpush.bf16.msra.mxu0 %v1396
      %1899 = vmatpush.bf16.msra.mxu0 %v1394
      %1900 = vmatpush.bf16.msra.mxu0 %v1392
      %1901 = vmatpush.bf16.msra.mxu0 %v1390
      %1902 = vmatpush.bf16.msra.mxu0 %v1388
      %1903 = vmatpush.bf16.msra.mxu0 %v1386
      %1904 = vmatmul.bf16.gmra.mxu0 %v571
      %v1905 = vpop.f32.mrf.mxu0
      %v1906 = vadd.f32 %v1892, %v1905
      %v1907 = vpop.f32.mrf.mxu0
      %v1908 = vadd.f32 %v1894, %v1907
      %1909 = vdwg.mxu0
      %1910 = vmatpush.bf16.msra.mxu0 %v1416
      %1911 = vmatpush.bf16.msra.mxu0 %v1414
      %1912 = vmatpush.bf16.msra.mxu0 %v1412
      %1913 = vmatpush.bf16.msra.mxu0 %v1410
      %1914 = vmatpush.bf16.msra.mxu0 %v1408
      %1915 = vmatpush.bf16.msra.mxu0 %v1406
      %1916 = vmatpush.bf16.msra.mxu0 %v1404
      %1917 = vmatpush.bf16.msra.mxu0 %v1402
      %1918 = vmatmul.bf16.gmra.mxu0 %v572
      %v1919 = vpop.f32.mrf.mxu0
      %v1920 = vadd.f32 %v1906, %v1919
      %v1921 = vpop.f32.mrf.mxu0
      %v1922 = vadd.f32 %v1908, %v1921
      %1923 = vdwg.mxu0
      %1924 = vmatpush.bf16.msra.mxu0 %v1432
      %1925 = vmatpush.bf16.msra.mxu0 %v1430
      %1926 = vmatpush.bf16.msra.mxu0 %v1428
      %1927 = vmatpush.bf16.msra.mxu0 %v1426
      %1928 = vmatpush.bf16.msra.mxu0 %v1424
      %1929 = vmatpush.bf16.msra.mxu0 %v1422
      %1930 = vmatpush.bf16.msra.mxu0 %v1420
      %1931 = vmatpush.bf16.msra.mxu0 %v1418
      %1932 = vmatmul.bf16.gmra.mxu0 %v573
      %v1933 = vpop.f32.mrf.mxu0
      %v1934 = vadd.f32 %v1920, %v1933
      %v1935 = vpop.f32.mrf.mxu0
      %v1936 = vadd.f32 %v1922, %v1935
      %1937 = vdwg.mxu0
      %1938 = vmatpush.bf16.msra.mxu0 %v1448
      %1939 = vmatpush.bf16.msra.mxu0 %v1446
      %1940 = vmatpush.bf16.msra.mxu0 %v1444
      %1941 = vmatpush.bf16.msra.mxu0 %v1442
      %1942 = vmatpush.bf16.msra.mxu0 %v1440
      %1943 = vmatpush.bf16.msra.mxu0 %v1438
      %1944 = vmatpush.bf16.msra.mxu0 %v1436
      %1945 = vmatpush.bf16.msra.mxu0 %v1434
      %1946 = vmatmul.bf16.gmra.mxu0 %v574
      %v1947 = vpop.f32.mrf.mxu0
      %v1948 = vadd.f32 %v1934, %v1947
      %v1949 = vpop.f32.mrf.mxu0
      %v1950 = vadd.f32 %v1936, %v1949
      %1951 = vdwg.mxu0
      %1952 = vmatpush.bf16.msra.mxu0 %v1464
      %1953 = vmatpush.bf16.msra.mxu0 %v1462
      %1954 = vmatpush.bf16.msra.mxu0 %v1460
      %1955 = vmatpush.bf16.msra.mxu0 %v1458
      %1956 = vmatpush.bf16.msra.mxu0 %v1456
      %1957 = vmatpush.bf16.msra.mxu0 %v1454
      %1958 = vmatpush.bf16.msra.mxu0 %v1452
      %1959 = vmatpush.bf16.msra.mxu0 %v1450
      %1960 = vmatmul.bf16.gmra.mxu0 %v575
      %v1961 = vpop.f32.mrf.mxu0
      %v1962 = vadd.f32 %v1948, %v1961
      %v1963 = vpop.f32.mrf.mxu0
      %v1964 = vadd.f32 %v1950, %v1963
      %1965 = vdwg.mxu0
      %1966 = vmatpush.bf16.msra.mxu0 %v1480
      %1967 = vmatpush.bf16.msra.mxu0 %v1478
      %1968 = vmatpush.bf16.msra.mxu0 %v1476
      %1969 = vmatpush.bf16.msra.mxu0 %v1474
      %1970 = vmatpush.bf16.msra.mxu0 %v1472
      %1971 = vmatpush.bf16.msra.mxu0 %v1470
      %1972 = vmatpush.bf16.msra.mxu0 %v1468
      %1973 = vmatpush.bf16.msra.mxu0 %v1466
      %1974 = vmatmul.bf16.gmra.mxu0 %v576
      %v1975 = vpop.f32.mrf.mxu0
      %v1976 = vadd.f32 %v1962, %v1975
      %v1977 = vpop.f32.mrf.mxu0
      %v1978 = vadd.f32 %v1964, %v1977
      %1979 = vdwg.mxu0
      %1980 = vmatpush.bf16.msra.mxu0 %v1496
      %1981 = vmatpush.bf16.msra.mxu0 %v1494
      %1982 = vmatpush.bf16.msra.mxu0 %v1492
      %1983 = vmatpush.bf16.msra.mxu0 %v1490
      %1984 = vmatpush.bf16.msra.mxu0 %v1488
      %1985 = vmatpush.bf16.msra.mxu0 %v1486
      %1986 = vmatpush.bf16.msra.mxu0 %v1484
      %1987 = vmatpush.bf16.msra.mxu0 %v1482
      %1988 = vmatmul.bf16.gmra.mxu0 %v577
      %v1989 = vpop.f32.mrf.mxu0
      %v1990 = vadd.f32 %v1976, %v1989
      %v1991 = vpop.f32.mrf.mxu0
      %v1992 = vadd.f32 %v1978, %v1991
      %1993 = vdwg.mxu0
      %1994 = vmatpush.bf16.msra.mxu0 %v1512
      %1995 = vmatpush.bf16.msra.mxu0 %v1510
      %1996 = vmatpush.bf16.msra.mxu0 %v1508
      %1997 = vmatpush.bf16.msra.mxu0 %v1506
      %1998 = vmatpush.bf16.msra.mxu0 %v1504
      %1999 = vmatpush.bf16.msra.mxu0 %v1502
      %2000 = vmatpush.bf16.msra.mxu0 %v1500
      %2001 = vmatpush.bf16.msra.mxu0 %v1498
      %2002 = vmatmul.bf16.gmra.mxu0 %v578
      %v2003 = vpop.f32.mrf.mxu0
      %v2004 = vadd.f32 %v1990, %v2003
      %v2005 = vpop.f32.mrf.mxu0
      %v2006 = vadd.f32 %v1992, %v2005
      %2007 = vdwg.mxu0
      %2008 = vmatpush.bf16.msra.mxu0 %v1528
      %2009 = vmatpush.bf16.msra.mxu0 %v1526
      %2010 = vmatpush.bf16.msra.mxu0 %v1524
      %2011 = vmatpush.bf16.msra.mxu0 %v1522
      %2012 = vmatpush.bf16.msra.mxu0 %v1520
      %2013 = vmatpush.bf16.msra.mxu0 %v1518
      %2014 = vmatpush.bf16.msra.mxu0 %v1516
      %2015 = vmatpush.bf16.msra.mxu0 %v1514
      %2016 = vmatmul.bf16.gmra.mxu0 %v579
      %v2017 = vpop.f32.mrf.mxu0
      %v2018 = vadd.f32 %v2004, %v2017
      %v2019 = vpop.f32.mrf.mxu0
      %v2020 = vadd.f32 %v2006, %v2019
      %2021 = vdwg.mxu0
      %2022 = vmatpush.bf16.msra.mxu0 %v1544
      %2023 = vmatpush.bf16.msra.mxu0 %v1542
      %2024 = vmatpush.bf16.msra.mxu0 %v1540
      %2025 = vmatpush.bf16.msra.mxu0 %v1538
      %2026 = vmatpush.bf16.msra.mxu0 %v1536
      %2027 = vmatpush.bf16.msra.mxu0 %v1534
      %2028 = vmatpush.bf16.msra.mxu0 %v1532
      %2029 = vmatpush.bf16.msra.mxu0 %v1530
      %2030 = vmatmul.bf16.gmra.mxu0 %v580
      %v2031 = vpop.f32.mrf.mxu0
      %v2032 = vadd.f32 %v2018, %v2031
      %v2033 = vpop.f32.mrf.mxu0
      %v2034 = vadd.f32 %v2020, %v2033
      %2035 = vdwg.mxu0
      %2036 = vmatpush.bf16.msra.mxu0 %v1560
      %2037 = vmatpush.bf16.msra.mxu0 %v1558
      %2038 = vmatpush.bf16.msra.mxu0 %v1556
      %2039 = vmatpush.bf16.msra.mxu0 %v1554
      %2040 = vmatpush.bf16.msra.mxu0 %v1552
      %2041 = vmatpush.bf16.msra.mxu0 %v1550
      %2042 = vmatpush.bf16.msra.mxu0 %v1548
      %2043 = vmatpush.bf16.msra.mxu0 %v1546
      %2044 = vmatmul.bf16.gmra.mxu0 %v581
      %v2045 = vpop.f32.mrf.mxu0
      %v2046 = vadd.f32 %v2032, %v2045
      %v2047 = vpop.f32.mrf.mxu0
      %v2048 = vadd.f32 %v2034, %v2047
      %2049 = vdwg.mxu0
      %2050 = vmatpush.bf16.msra.mxu0 %v1576
      %2051 = vmatpush.bf16.msra.mxu0 %v1574
      %2052 = vmatpush.bf16.msra.mxu0 %v1572
      %2053 = vmatpush.bf16.msra.mxu0 %v1570
      %2054 = vmatpush.bf16.msra.mxu0 %v1568
      %2055 = vmatpush.bf16.msra.mxu0 %v1566
      %2056 = vmatpush.bf16.msra.mxu0 %v1564
      %2057 = vmatpush.bf16.msra.mxu0 %v1562
      %2058 = vmatmul.bf16.gmra.mxu0 %v582
      %v2059 = vpop.f32.mrf.mxu0
      %v2060 = vadd.f32 %v2046, %v2059
      %v2061 = vpop.f32.mrf.mxu0
      %v2062 = vadd.f32 %v2048, %v2061
      %2063 = vdwg.mxu0
      %2064 = vmatpush.bf16.msra.mxu0 %v1592
      %2065 = vmatpush.bf16.msra.mxu0 %v1590
      %2066 = vmatpush.bf16.msra.mxu0 %v1588
      %2067 = vmatpush.bf16.msra.mxu0 %v1586
      %2068 = vmatpush.bf16.msra.mxu0 %v1584
      %2069 = vmatpush.bf16.msra.mxu0 %v1582
      %2070 = vmatpush.bf16.msra.mxu0 %v1580
      %2071 = vmatpush.bf16.msra.mxu0 %v1578
      %2072 = vmatmul.bf16.gmra.mxu0 %v583
      %v2073 = vpop.f32.mrf.mxu0
      %v2074 = vadd.f32 %v2060, %v2073
      %v2075 = vpop.f32.mrf.mxu0
      %v2076 = vadd.f32 %v2062, %v2075
      %2077 = vdwg.mxu0
      %2078 = vmatpush.bf16.msra.mxu0 %v1608
      %2079 = vmatpush.bf16.msra.mxu0 %v1606
      %2080 = vmatpush.bf16.msra.mxu0 %v1604
      %2081 = vmatpush.bf16.msra.mxu0 %v1602
      %2082 = vmatpush.bf16.msra.mxu0 %v1600
      %2083 = vmatpush.bf16.msra.mxu0 %v1598
      %2084 = vmatpush.bf16.msra.mxu0 %v1596
      %2085 = vmatpush.bf16.msra.mxu0 %v1594
      %2086 = vmatmul.bf16.gmra.mxu0 %v584
      %v2087 = vpop.f32.mrf.mxu0
      %v2088 = vadd.f32 %v2074, %v2087
      %v2089 = vpop.f32.mrf.mxu0
      %v2090 = vadd.f32 %v2076, %v2089
      %2091 = vdwg.mxu0
      %2092 = vmatpush.bf16.msra.mxu0 %v1624
      %2093 = vmatpush.bf16.msra.mxu0 %v1622
      %2094 = vmatpush.bf16.msra.mxu0 %v1620
      %2095 = vmatpush.bf16.msra.mxu0 %v1618
      %2096 = vmatpush.bf16.msra.mxu0 %v1616
      %2097 = vmatpush.bf16.msra.mxu0 %v1614
      %2098 = vmatpush.bf16.msra.mxu0 %v1612
      %2099 = vmatpush.bf16.msra.mxu0 %v1610
      %2100 = vmatmul.bf16.gmra.mxu0 %v585
      %v2101 = vpop.f32.mrf.mxu0
      %v2102 = vadd.f32 %v2088, %v2101
      %v2103 = vpop.f32.mrf.mxu0
      %v2104 = vadd.f32 %v2090, %v2103
      %2105 = vdwg.mxu0
      %2106 = vmatpush.bf16.msra.mxu0 %v1385
      %2107 = vmatpush.bf16.msra.mxu0 %v1383
      %2108 = vmatpush.bf16.msra.mxu0 %v1381
      %2109 = vmatpush.bf16.msra.mxu0 %v1379
      %2110 = vmatpush.bf16.msra.mxu0 %v1377
      %2111 = vmatpush.bf16.msra.mxu0 %v1375
      %2112 = vmatpush.bf16.msra.mxu0 %v1373
      %2113 = vmatpush.bf16.msra.mxu0 %v1371
      %2114 = vmatmul.bf16.gmra.mxu0 %v570
      %v2115 = vpop.f32.mrf.mxu0
      %v2116 = vadd.f32 0.0, %v2115
      %v2117 = vpop.f32.mrf.mxu0
      %v2118 = vadd.f32 0.0, %v2117
      %2119 = vdwg.mxu0
      %2120 = vmatpush.bf16.msra.mxu0 %v1401
      %2121 = vmatpush.bf16.msra.mxu0 %v1399
      %2122 = vmatpush.bf16.msra.mxu0 %v1397
      %2123 = vmatpush.bf16.msra.mxu0 %v1395
      %2124 = vmatpush.bf16.msra.mxu0 %v1393
      %2125 = vmatpush.bf16.msra.mxu0 %v1391
      %2126 = vmatpush.bf16.msra.mxu0 %v1389
      %2127 = vmatpush.bf16.msra.mxu0 %v1387
      %2128 = vmatmul.bf16.gmra.mxu0 %v571
      %v2129 = vpop.f32.mrf.mxu0
      %v2130 = vadd.f32 %v2116, %v2129
      %v2131 = vpop.f32.mrf.mxu0
      %v2132 = vadd.f32 %v2118, %v2131
      %2133 = vdwg.mxu0
      %2134 = vmatpush.bf16.msra.mxu0 %v1417
      %2135 = vmatpush.bf16.msra.mxu0 %v1415
      %2136 = vmatpush.bf16.msra.mxu0 %v1413
      %2137 = vmatpush.bf16.msra.mxu0 %v1411
      %2138 = vmatpush.bf16.msra.mxu0 %v1409
      %2139 = vmatpush.bf16.msra.mxu0 %v1407
      %2140 = vmatpush.bf16.msra.mxu0 %v1405
      %2141 = vmatpush.bf16.msra.mxu0 %v1403
      %2142 = vmatmul.bf16.gmra.mxu0 %v572
      %v2143 = vpop.f32.mrf.mxu0
      %v2144 = vadd.f32 %v2130, %v2143
      %v2145 = vpop.f32.mrf.mxu0
      %v2146 = vadd.f32 %v2132, %v2145
      %2147 = vdwg.mxu0
      %2148 = vmatpush.bf16.msra.mxu0 %v1433
      %2149 = vmatpush.bf16.msra.mxu0 %v1431
      %2150 = vmatpush.bf16.msra.mxu0 %v1429
      %2151 = vmatpush.bf16.msra.mxu0 %v1427
      %2152 = vmatpush.bf16.msra.mxu0 %v1425
      %2153 = vmatpush.bf16.msra.mxu0 %v1423
      %2154 = vmatpush.bf16.msra.mxu0 %v1421
      %2155 = vmatpush.bf16.msra.mxu0 %v1419
      %2156 = vmatmul.bf16.gmra.mxu0 %v573
      %v2157 = vpop.f32.mrf.mxu0
      %v2158 = vadd.f32 %v2144, %v2157
      %v2159 = vpop.f32.mrf.mxu0
      %v2160 = vadd.f32 %v2146, %v2159
      %2161 = vdwg.mxu0
      %2162 = vmatpush.bf16.msra.mxu0 %v1449
      %2163 = vmatpush.bf16.msra.mxu0 %v1447
      %2164 = vmatpush.bf16.msra.mxu0 %v1445
      %2165 = vmatpush.bf16.msra.mxu0 %v1443
      %2166 = vmatpush.bf16.msra.mxu0 %v1441
      %2167 = vmatpush.bf16.msra.mxu0 %v1439
      %2168 = vmatpush.bf16.msra.mxu0 %v1437
      %2169 = vmatpush.bf16.msra.mxu0 %v1435
      %2170 = vmatmul.bf16.gmra.mxu0 %v574
      %v2171 = vpop.f32.mrf.mxu0
      %v2172 = vadd.f32 %v2158, %v2171
      %v2173 = vpop.f32.mrf.mxu0
      %v2174 = vadd.f32 %v2160, %v2173
      %2175 = vdwg.mxu0
      %2176 = vmatpush.bf16.msra.mxu0 %v1465
      %2177 = vmatpush.bf16.msra.mxu0 %v1463
      %2178 = vmatpush.bf16.msra.mxu0 %v1461
      %2179 = vmatpush.bf16.msra.mxu0 %v1459
      %2180 = vmatpush.bf16.msra.mxu0 %v1457
      %2181 = vmatpush.bf16.msra.mxu0 %v1455
      %2182 = vmatpush.bf16.msra.mxu0 %v1453
      %2183 = vmatpush.bf16.msra.mxu0 %v1451
      %2184 = vmatmul.bf16.gmra.mxu0 %v575
      %v2185 = vpop.f32.mrf.mxu0
      %v2186 = vadd.f32 %v2172, %v2185
      %v2187 = vpop.f32.mrf.mxu0
      %v2188 = vadd.f32 %v2174, %v2187
      %2189 = vdwg.mxu0
      %2190 = vmatpush.bf16.msra.mxu0 %v1481
      %2191 = vmatpush.bf16.msra.mxu0 %v1479
      %2192 = vmatpush.bf16.msra.mxu0 %v1477
      %2193 = vmatpush.bf16.msra.mxu0 %v1475
      %2194 = vmatpush.bf16.msra.mxu0 %v1473
      %2195 = vmatpush.bf16.msra.mxu0 %v1471
      %2196 = vmatpush.bf16.msra.mxu0 %v1469
      %2197 = vmatpush.bf16.msra.mxu0 %v1467
      %2198 = vmatmul.bf16.gmra.mxu0 %v576
      %v2199 = vpop.f32.mrf.mxu0
      %v2200 = vadd.f32 %v2186, %v2199
      %v2201 = vpop.f32.mrf.mxu0
      %v2202 = vadd.f32 %v2188, %v2201
      %2203 = vdwg.mxu0
      %2204 = vmatpush.bf16.msra.mxu0 %v1497
      %2205 = vmatpush.bf16.msra.mxu0 %v1495
      %2206 = vmatpush.bf16.msra.mxu0 %v1493
      %2207 = vmatpush.bf16.msra.mxu0 %v1491
      %2208 = vmatpush.bf16.msra.mxu0 %v1489
      %2209 = vmatpush.bf16.msra.mxu0 %v1487
      %2210 = vmatpush.bf16.msra.mxu0 %v1485
      %2211 = vmatpush.bf16.msra.mxu0 %v1483
      %2212 = vmatmul.bf16.gmra.mxu0 %v577
      %v2213 = vpop.f32.mrf.mxu0
      %v2214 = vadd.f32 %v2200, %v2213
      %v2215 = vpop.f32.mrf.mxu0
      %v2216 = vadd.f32 %v2202, %v2215
      %2217 = vdwg.mxu0
      %2218 = vmatpush.bf16.msra.mxu0 %v1513
      %2219 = vmatpush.bf16.msra.mxu0 %v1511
      %2220 = vmatpush.bf16.msra.mxu0 %v1509
      %2221 = vmatpush.bf16.msra.mxu0 %v1507
      %2222 = vmatpush.bf16.msra.mxu0 %v1505
      %2223 = vmatpush.bf16.msra.mxu0 %v1503
      %2224 = vmatpush.bf16.msra.mxu0 %v1501
      %2225 = vmatpush.bf16.msra.mxu0 %v1499
      %2226 = vmatmul.bf16.gmra.mxu0 %v578
      %v2227 = vpop.f32.mrf.mxu0
      %v2228 = vadd.f32 %v2214, %v2227
      %v2229 = vpop.f32.mrf.mxu0
      %v2230 = vadd.f32 %v2216, %v2229
      %2231 = vdwg.mxu0
      %2232 = vmatpush.bf16.msra.mxu0 %v1529
      %2233 = vmatpush.bf16.msra.mxu0 %v1527
      %2234 = vmatpush.bf16.msra.mxu0 %v1525
      %2235 = vmatpush.bf16.msra.mxu0 %v1523
      %2236 = vmatpush.bf16.msra.mxu0 %v1521
      %2237 = vmatpush.bf16.msra.mxu0 %v1519
      %2238 = vmatpush.bf16.msra.mxu0 %v1517
      %2239 = vmatpush.bf16.msra.mxu0 %v1515
      %2240 = vmatmul.bf16.gmra.mxu0 %v579
      %v2241 = vpop.f32.mrf.mxu0
      %v2242 = vadd.f32 %v2228, %v2241
      %v2243 = vpop.f32.mrf.mxu0
      %v2244 = vadd.f32 %v2230, %v2243
      %2245 = vdwg.mxu0
      %2246 = vmatpush.bf16.msra.mxu0 %v1545
      %2247 = vmatpush.bf16.msra.mxu0 %v1543
      %2248 = vmatpush.bf16.msra.mxu0 %v1541
      %2249 = vmatpush.bf16.msra.mxu0 %v1539
      %2250 = vmatpush.bf16.msra.mxu0 %v1537
      %2251 = vmatpush.bf16.msra.mxu0 %v1535
      %2252 = vmatpush.bf16.msra.mxu0 %v1533
      %2253 = vmatpush.bf16.msra.mxu0 %v1531
      %2254 = vmatmul.bf16.gmra.mxu0 %v580
      %v2255 = vpop.f32.mrf.mxu0
      %v2256 = vadd.f32 %v2242, %v2255
      %v2257 = vpop.f32.mrf.mxu0
      %v2258 = vadd.f32 %v2244, %v2257
      %2259 = vdwg.mxu0
      %2260 = vmatpush.bf16.msra.mxu0 %v1561
      %2261 = vmatpush.bf16.msra.mxu0 %v1559
      %2262 = vmatpush.bf16.msra.mxu0 %v1557
      %2263 = vmatpush.bf16.msra.mxu0 %v1555
      %2264 = vmatpush.bf16.msra.mxu0 %v1553
      %2265 = vmatpush.bf16.msra.mxu0 %v1551
      %2266 = vmatpush.bf16.msra.mxu0 %v1549
      %2267 = vmatpush.bf16.msra.mxu0 %v1547
      %2268 = vmatmul.bf16.gmra.mxu0 %v581
      %v2269 = vpop.f32.mrf.mxu0
      %v2270 = vadd.f32 %v2256, %v2269
      %v2271 = vpop.f32.mrf.mxu0
      %v2272 = vadd.f32 %v2258, %v2271
      %2273 = vdwg.mxu0
      %2274 = vmatpush.bf16.msra.mxu0 %v1577
      %2275 = vmatpush.bf16.msra.mxu0 %v1575
      %2276 = vmatpush.bf16.msra.mxu0 %v1573
      %2277 = vmatpush.bf16.msra.mxu0 %v1571
      %2278 = vmatpush.bf16.msra.mxu0 %v1569
      %2279 = vmatpush.bf16.msra.mxu0 %v1567
      %2280 = vmatpush.bf16.msra.mxu0 %v1565
      %2281 = vmatpush.bf16.msra.mxu0 %v1563
      %2282 = vmatmul.bf16.gmra.mxu0 %v582
      %v2283 = vpop.f32.mrf.mxu0
      %v2284 = vadd.f32 %v2270, %v2283
      %v2285 = vpop.f32.mrf.mxu0
      %v2286 = vadd.f32 %v2272, %v2285
      %2287 = vdwg.mxu0
      %2288 = vmatpush.bf16.msra.mxu0 %v1593
      %2289 = vmatpush.bf16.msra.mxu0 %v1591
      %2290 = vmatpush.bf16.msra.mxu0 %v1589
      %2291 = vmatpush.bf16.msra.mxu0 %v1587
      %2292 = vmatpush.bf16.msra.mxu0 %v1585
      %2293 = vmatpush.bf16.msra.mxu0 %v1583
      %2294 = vmatpush.bf16.msra.mxu0 %v1581
      %2295 = vmatpush.bf16.msra.mxu0 %v1579
      %2296 = vmatmul.bf16.gmra.mxu0 %v583
      %v2297 = vpop.f32.mrf.mxu0
      %v2298 = vadd.f32 %v2284, %v2297
      %v2299 = vpop.f32.mrf.mxu0
      %v2300 = vadd.f32 %v2286, %v2299
      %2301 = vdwg.mxu0
      %2302 = vmatpush.bf16.msra.mxu0 %v1609
      %2303 = vmatpush.bf16.msra.mxu0 %v1607
      %2304 = vmatpush.bf16.msra.mxu0 %v1605
      %2305 = vmatpush.bf16.msra.mxu0 %v1603
      %2306 = vmatpush.bf16.msra.mxu0 %v1601
      %2307 = vmatpush.bf16.msra.mxu0 %v1599
      %2308 = vmatpush.bf16.msra.mxu0 %v1597
      %2309 = vmatpush.bf16.msra.mxu0 %v1595
      %2310 = vmatmul.bf16.gmra.mxu0 %v584
      %v2311 = vpop.f32.mrf.mxu0
      %v2312 = vadd.f32 %v2298, %v2311
      %v2313 = vpop.f32.mrf.mxu0
      %v2314 = vadd.f32 %v2300, %v2313
      %2315 = vdwg.mxu0
      %2316 = vmatpush.bf16.msra.mxu0 %v1625
      %2317 = vmatpush.bf16.msra.mxu0 %v1623
      %2318 = vmatpush.bf16.msra.mxu0 %v1621
      %2319 = vmatpush.bf16.msra.mxu0 %v1619
      %2320 = vmatpush.bf16.msra.mxu0 %v1617
      %2321 = vmatpush.bf16.msra.mxu0 %v1615
      %2322 = vmatpush.bf16.msra.mxu0 %v1613
      %2323 = vmatpush.bf16.msra.mxu0 %v1611
      %2324 = vmatmul.bf16.gmra.mxu0 %v585
      %v2325 = vpop.f32.mrf.mxu0
      %v2326 = vadd.f32 %v2312, %v2325
      %v2327 = vpop.f32.mrf.mxu0
      %v2328 = vadd.f32 %v2314, %v2327
      %2329 = vdwg.mxu0
      %v2330 = vadd.f32 %v2102, %v2104
      %v2331 = vrot.slane %v2330, 4
      %v2332 = vadd.f32 %v2330, %v2331
      %v2333 = vrot.slane %v2332, 2
      %v2334 = vadd.f32 %v2332, %v2333
      %v2335 = vrot.slane %v2334, 1
      %v2336 = vadd.f32 %v2334, %v2335
      %v2337 = vadd.f32 %v2326, %v2328
      %v2338 = vrot.slane %v2337, 4
      %v2339 = vadd.f32 %v2337, %v2338
      %v2340 = vrot.slane %v2339, 2
      %v2341 = vadd.f32 %v2339, %v2340
      %v2342 = vrot.slane %v2341, 1
      %v2343 = vadd.f32 %v2341, %v2342
      %v2344 = vrcp.pop 16.0
      %v2345 = vmul.f32 16.0, %v2344
      %v2346 = vsub.f32 1.0, %v2345
      %v2347 = vmul.f32 %v2344, %v2346
      %v2348 = vadd.f32 %v2344, %v2347
      %vm2349 = vweird.f32 %v2344
      %v2350 = vsel %vm2349, %v2344, %v2348
      %v2351 = vmul.f32 %v2336, %v2350
      %v2352 = vmul.f32 %v2343, %v2350
      %v2353 = vsub.f32 %v2102, %v2351
      %v2354 = vsub.f32 %v2326, %v2352
      %v2355 = vsub.f32 %v2104, %v2351
      %v2356 = vsub.f32 %v2328, %v2352
      %v2357 = vmul.f32 %v2353, %v2353
      %v2358 = vmul.f32 %v2354, %v2354
      %v2359 = vmul.f32 %v2355, %v2355
      %v2360 = vmul.f32 %v2356, %v2356
      %v2361 = vadd.f32 %v2357, %v2359
      %v2362 = vrot.slane %v2361, 4
      %v2363 = vadd.f32 %v2361, %v2362
      %v2364 = vrot.slane %v2363, 2
      %v2365 = vadd.f32 %v2363, %v2364
      %v2366 = vrot.slane %v2365, 1
      %v2367 = vadd.f32 %v2365, %v2366
      %v2368 = vadd.f32 %v2358, %v2360
      %v2369 = vrot.slane %v2368, 4
      %v2370 = vadd.f32 %v2368, %v2369
      %v2371 = vrot.slane %v2370, 2
      %v2372 = vadd.f32 %v2370, %v2371
      %v2373 = vrot.slane %v2372, 1
      %v2374 = vadd.f32 %v2372, %v2373
      %v2375 = vmul.f32 %v2367, %v2350
      %v2376 = vmul.f32 %v2374, %v2350
      %v2377 = vadd.f32 %v2375, 1e-05
      %v2378 = vadd.f32 %v2376, 1e-05
      %v2379 = vrsqrt.pop %v2377
      %v2380 = vmul.f32 %v2379, %v2377
      %v2381 = vmul.f32 %v2380, %v2379
      %v2382 = vmul.f32 0.5, %v2381
      %v2383 = vsub.f32 1.5, %v2382
      %v2384 = vmul.f32 %v2379, %v2383
      %vm2385 = vweird.f32 %v2377
      %vm2386 = vweird.f32 %v2379
      %vm2387 = vmor %vm2385, %vm2386
      %v2388 = vsel %vm2387, %v2379, %v2384
      %v2389 = vrsqrt.pop %v2378
      %v2390 = vmul.f32 %v2389, %v2378
      %v2391 = vmul.f32 %v2390, %v2389
      %v2392 = vmul.f32 0.5, %v2391
      %v2393 = vsub.f32 1.5, %v2392
      %v2394 = vmul.f32 %v2389, %v2393
      %vm2395 = vweird.f32 %v2378
      %vm2396 = vweird.f32 %v2389
      %vm2397 = vmor %vm2395, %vm2396
      %v2398 = vsel %vm2397, %v2389, %v2394
      %v2399 = vmul.f32 %v2353, %v2388
      %v2400 = vmul.f32 %v2354, %v2398
      %v2401 = vmul.f32 %v2355, %v2388
      %v2402 = vmul.f32 %v2356, %v2398
      %v2403 = vld [vmem:[%s2] sm:$0x3]
      %v2405 = vperm.slane %v2403, 0
      %v2406 = vperm.slane %v2403, 1
      %v2409 = vmul.f32 %v2399, %v2405
      %v2410 = vmul.f32 %v2400, %v2406
      %v2411 = vmul.f32 %v2401, %v2405
      %v2412 = vmul.f32 %v2402, %v2406
      %v2413 = vld [vmem:[%s3] sm:$0x3]
      %v2415 = vperm.slane %v2413, 0
      %v2416 = vperm.slane %v2413, 1
      %v2419 = vadd.f32 %v2409, %v2415
      %v2420 = vadd.f32 %v2410, %v2416
      %v2421 = vadd.f32 %v2411, %v2415
      %v2422 = vadd.f32 %v2412, %v2416
      %vm2423 = vcmp.gt.f32.partialorder %v2419, 0.0
      %vm2424 = vcmp.gt.f32.partialorder %v2420, 0.0
      %vm2425 = vcmp.gt.f32.partialorder %v2421, 0.0
      %vm2426 = vcmp.gt.f32.partialorder %v2422, 0.0
      %v2427 = vmul.f32 %v2419, 0.2
      %v2428 = vmul.f32 %v2420, 0.2
      %v2429 = vmul.f32 %v2421, 0.2
      %v2430 = vmul.f32 %v2422, 0.2
      %v2431 = vsel %vm2423, %v2419, %v2427
      %v2432 = vsel %vm2424, %v2420, %v2428
      %v2433 = vsel %vm2425, %v2421, %v2429
      %v2434 = vsel %vm2426, %v2422, %v2430
      %v2435 = vld [vmem:[%s4] sm:$0xff]
      %v2436 = vld [vmem:[%s4 + $0x8] sm:$0xff]
      %v2437 = vld [vmem:[%s4 + $0x10] sm:$0xff]
      %v2438 = vld [vmem:[%s4 + $0x18] sm:$0xff]
      %v2439 = vmul.f32 %v2431, %v2435
      %v2440 = vmul.f32 %v2432, %v2436
      %v2441 = vmul.f32 %v2433, %v2437
      %v2442 = vmul.f32 %v2434, %v2438
      %v2443 = vadd.f32 %v2439, %v2440
      %2444 = vadd.xlane.f32.xlu0 %v2443
      %v2445 = vpop.xlane.xlu0 %2444
      %v2446 = vadd.f32 %v2441, %v2442
      %2447 = vadd.xlane.f32.xlu0 %v2446
      %v2448 = vpop.xlane.xlu0 %2447
      %v2449 = vadd.f32 %v2445, %v2448
      %v2450 = vrot.slane %v2449, 4
      %v2451 = vadd.f32 %v2449, %v2450
      %v2452 = vrot.slane %v2451, 2
      %v2453 = vadd.f32 %v2451, %v2452
      %v2454 = vrot.slane %v2453, 1
      %v2455 = vadd.f32 %v2453, %v2454
      %v2456 = vld [vmem:[%s5] sm:$0x1]
      %v2458 = vperm.slane %v2456, 0
      %v2460 = vadd.f32 %v2455, %v2458
      %2461 = vst [vmem:[%s249] sm:$0xff] %v2460
      %p2462 = scmp.lt.s32.totalorder %s17, 1
      %s2463 = scalar_select %p2462, %s17, 1
      %s2464 = smul.addr %s2463, 8
      %s2465 = scalar_lea.vmem %s6, %s2464
      // Predicated region
      $region45: #{discriminator_forward.5} parent=43 // pred_check
        %p2466 = pneg %p166
      $region46: #{discriminator_forward.5} parent=43 // pred_check_branch
        %2468 = sbr.rel (%p2466) target = $region48
      $region47: #{discriminator_forward.5} parent=43 // pred_region
        _
      $region48: #{discriminator_forward.5} parent=43 // pred_fallthru
        _
    $region44: #{discriminator_forward.5} parent=5 // pred_fallthru
      _
    %p2469 = scmp.le.s32.totalorder 2, %s12
    // Predicated region
    $region49: #{discriminator_forward.5} parent=5 // pred_check
      %p2470 = pneg %p2469
    $region50: #{discriminator_forward.5} parent=5 // pred_check_branch
      %2472 = sbr.rel (%p2470) target = $region52
    $region51: #{discriminator_forward.5} parent=5 // pred_region
      %s2473 = ssub.s32 %s12, 2
      // Predicated region
      $region53: #{discriminator_forward.5} parent=51 // pred_check
        %p2474 = pneg %p172
      $region54: #{discriminator_forward.5} parent=51 // pred_check_branch
        %2476 = sbr.rel (%p2474) target = $region56
      $region55: #{discriminator_forward.5} parent=51 // pred_region
        %p2477 = scmp.lt.s32.totalorder %s18, 1
        %s2478 = scalar_select %p2477, %s18, 1
        %s2479 = smul.addr %s2478, 8
        %s2480 = scalar_lea.vmem %s6, %s2479
      $region56: #{discriminator_forward.5} parent=51 // pred_fallthru
        _
    $region52: #{discriminator_forward.5} parent=5 // pred_fallthru
      _
  $region6: #{discriminator_forward.5} parent=0 // loop_footer
    %s16 = sadd.s32 1, %s12
  $region7: #{discriminator_forward.5} parent=0 // loop_footer_branch
    %11 = sbr.rel target = $region3
  $region8: #{discriminator_forward.5} parent=0 // loop_exit
    _

</llo_original>
